<compile_context>
chip_gen: v7x
topology: tpu7x:2x2x1
jax: 0.10.0
libtpu: 0.0.40
codegen_flags: <defaults>
</compile_context>

<pallas_src>
import math
from functools import partial

import jax
import jax.numpy as jnp
from jax.experimental import pallas as pl
from jax.experimental.pallas import tpu as pltpu

# ---------------- model config (small, synthetic GPT-2) ----------------
VOCAB = 128      # exactly one lane tile -> perfectly shaped one-hot gather
SEQ = 8          # sequence length
D = 32           # hidden size
H = 2            # attention heads
DH = D // H      # head dim
NLAYERS = 2
DFF = 4 * D      # MLP hidden
LN_EPS = 1e-5
BATCH = 2
OUT_PAD = 128    # lane-dense padded output width


# ---------------- in-kernel helpers ----------------
def _layernorm(h, gamma, beta):
    mu = jnp.mean(h, axis=-1, keepdims=True)
    var = jnp.mean((h - mu) ** 2, axis=-1, keepdims=True)
    return (h - mu) * jax.lax.rsqrt(var + LN_EPS) * gamma + beta


def _gelu_new(x):
    # GPT-2's gelu_new (tanh approximation)
    return 0.5 * x * (1.0 + jnp.tanh(0.7978845608028654 * (x + 0.044715 * x * x * x)))


# ---------------- the single fused kernel ----------------
def gpt2_embed_kernel(
        ids_ref,                                   # (B*S, 1) int32, VMEM
        wte_ref, wpe_ref, mask_ref, pool_ref,      # embeddings + constant mask / pooling
        g1_ref, b1_ref,
        wq_ref, wk_ref, wv_ref, bq_ref, bk_ref, bv_ref,   # (L,H,D,DH) / (L,H,1,DH)
        wo_ref, bo_ref,                                    # (L,H,DH,D) / (L,1,D)
        g2_ref, b2_ref, wfc_ref, bfc_ref, wpr_ref, bpr_ref,
        lnfg_ref, lnfb_ref,
        o_ref,                                     # (B, OUT_PAD) output, lane-dense
        *, batch, seq, d, n_heads, n_layers, vocab, out_pad):
    bs = batch * seq
    dh = d // n_heads
    scale = 1.0 / math.sqrt(dh)

    # ---- vectorized embedding gather: one-hot (B*S,VOCAB) @ wte (VOCAB,D) ----
    ids = ids_ref[...]                                             # (B*S, 1) int32
    vocab_iota = jax.lax.broadcasted_iota(jnp.int32, (bs, vocab), 1)
    onehot = (ids == vocab_iota).astype(jnp.float32)               # (B*S, VOCAB)
    x = (jnp.dot(onehot, wte_ref[...], preferred_element_type=jnp.float32)
         + wpe_ref[...])                                           # (B*S, D) in vregs

    mask = mask_ref[...]                                           # (B*S, B*S) additive

    # ---- all transformer blocks fused; weights stay resident in VMEM ----
    for l in range(n_layers):                                      # static layer loop
        # attention (pre-LN)
        h = _layernorm(x, g1_ref[l], b1_ref[l])
        proj = jnp.zeros((bs, d), jnp.float32)
        for hh in range(n_heads):                                  # static head loop
            # per-head projections: every result starts at lane 0 (no lane slicing)
            qh = (jnp.dot(h, wq_ref[l, hh], preferred_element_type=jnp.float32)
                  + bq_ref[l, hh]) * scale                         # fold 1/sqrt(dh) into q
            kh = (jnp.dot(h, wk_ref[l, hh], preferred_element_type=jnp.float32)
                  + bk_ref[l, hh])
            vh = (jnp.dot(h, wv_ref[l, hh], preferred_element_type=jnp.float32)
                  + bv_ref[l, hh])
            # one (B*S, B*S) score matmul covers every batch element; the
            # block-diagonal causal mask keeps batches independent.
            sc = jax.lax.dot_general(qh, kh, (((1,), (1,)), ((), ())),
                                     preferred_element_type=jnp.float32) + mask
            sc = sc - jnp.max(sc, axis=-1, keepdims=True)
            p = jnp.exp(sc)
            p = p * pl.reciprocal(jnp.sum(p, axis=-1, keepdims=True), approx=True)
            oh = jnp.dot(p, vh, preferred_element_type=jnp.float32)        # (B*S, DH)
            # fold the head concat into the output projection:
            #   attn @ Wo == sum_h oh @ Wo[h]
            proj = proj + jnp.dot(oh, wo_ref[l, hh],
                                  preferred_element_type=jnp.float32)
        x = x + proj + bo_ref[l]

        # MLP (pre-LN)
        h2 = _layernorm(x, g2_ref[l], b2_ref[l])
        f = jnp.dot(h2, wfc_ref[l], preferred_element_type=jnp.float32) + bfc_ref[l]
        f = _gelu_new(f)
        x = x + jnp.dot(f, wpr_ref[l], preferred_element_type=jnp.float32) + bpr_ref[l]

    # ---- final LayerNorm + mean over the sequence axis ----
    h = _layernorm(x, lnfg_ref[...], lnfb_ref[...])
    # mean over seq == pooling matmul with a constant (B, B*S) matrix of 1/S
    pooled = jnp.dot(pool_ref[...], h, preferred_element_type=jnp.float32)  # (B, D)
    # lane-dense store: write a full 128-lane tile (wrapper slices back to D)
    o_ref[...] = jnp.concatenate(
        [pooled, jnp.zeros((batch, out_pad - d), jnp.float32)], axis=-1)


# ---------------- wrapper ----------------
@jax.jit
def embedding_model_forward(token_ids, params):
    b, s = token_ids.shape

    blocks = params["blocks"]

    def split_heads(blk):
        wqkv, bqkv, wo = blk["wqkv"], blk["bqkv"], blk["wo"]
        wq = wqkv[:, 0 * D:1 * D].reshape(D, H, DH).transpose(1, 0, 2)   # (H, D, DH)
        wk = wqkv[:, 1 * D:2 * D].reshape(D, H, DH).transpose(1, 0, 2)
        wv = wqkv[:, 2 * D:3 * D].reshape(D, H, DH).transpose(1, 0, 2)
        bq = bqkv[0, 0 * D:1 * D].reshape(H, 1, DH)                      # (H, 1, DH)
        bk = bqkv[0, 1 * D:2 * D].reshape(H, 1, DH)
        bv = bqkv[0, 2 * D:3 * D].reshape(H, 1, DH)
        woh = wo.reshape(H, DH, D)                                       # (H, DH, D)
        return wq, wk, wv, bq, bk, bv, woh

    per_head = [split_heads(blk) for blk in blocks]
    stack = lambda idx: jnp.stack([ph[idx] for ph in per_head])
    wq_s, wk_s, wv_s, bq_s, bk_s, bv_s, wo_s = (stack(i) for i in range(7))
    stack_key = lambda k: jnp.stack([blk[k] for blk in blocks])

    # constant block-diagonal causal additive mask over the flattened (B*S) axis
    r = jnp.arange(b * s)
    same_seq = (r[:, None] // s) == (r[None, :] // s)
    causal = r[None, :] <= r[:, None]
    mask = jnp.where(same_seq & causal, 0.0, -1e30).astype(jnp.float32)

    # constant pooling matrix: pool[bi, r] = 1/S for rows belonging to batch bi
    pool = jnp.where((r[None, :] // s) == jnp.arange(b)[:, None],
                     1.0 / s, 0.0).astype(jnp.float32)

    ids_flat = token_ids.reshape(b * s, 1).astype(jnp.int32)
    wpe_flat = jnp.tile(params["wpe"][:s], (b, 1))                       # (B*S, D)

    array_inputs = [
        ids_flat, params["wte"], wpe_flat, mask, pool,
        stack_key("g1"), stack_key("b1"),
        wq_s, wk_s, wv_s, bq_s, bk_s, bv_s, wo_s, stack_key("bo"),
        stack_key("g2"), stack_key("b2"),
        stack_key("wfc"), stack_key("bfc"), stack_key("wpr"), stack_key("bpr"),
        params["lnf_g"], params["lnf_b"],
    ]

    emb_padded = pl.pallas_call(
        partial(gpt2_embed_kernel, batch=b, seq=s, d=D, n_heads=H,
                n_layers=NLAYERS, vocab=VOCAB, out_pad=OUT_PAD),
        out_shape=jax.ShapeDtypeStruct((b, OUT_PAD), jnp.float32),
        # no grid: single fused invocation, every operand resident in VMEM once
        # (no double-buffering).  If batch / model size is ever scaled up,
        # reintroduce a "parallel" row-tile axis (v7x two TCs) and an
        # "arbitrary" layer-streaming axis before weights outgrow VMEM.
        in_specs=[pl.BlockSpec(memory_space=pltpu.MemorySpace.VMEM)
                  for _ in array_inputs],
        out_specs=pl.BlockSpec(memory_space=pltpu.MemorySpace.VMEM),
    )(*array_inputs)

    return jnp.squeeze(emb_padded[:, :D])          # matches torch .squeeze()


# ---------------- deterministic parameter init ----------------
def init_params(key):
    def nrm(k, shape, std=0.02):
        return (std * jax.random.normal(k, shape)).astype(jnp.float32)

    keys = jax.random.split(key, 2 + 6 * NLAYERS)
    params = {
        "wte": nrm(keys[0], (VOCAB, D)),
        "wpe": nrm(keys[1], (SEQ, D)),
        "lnf_g": jnp.ones((1, D), jnp.float32),
        "lnf_b": jnp.zeros((1, D), jnp.float32),
        "blocks": [],
    }
    for l in range(NLAYERS):
        kk = keys[2 + 6 * l: 2 + 6 * (l + 1)]
        params["blocks"].append({
            "g1": jnp.ones((1, D), jnp.float32),
            "b1": jnp.zeros((1, D), jnp.float32),
            "wqkv": nrm(kk[0], (D, 3 * D)),
            "bqkv": jnp.zeros((1, 3 * D), jnp.float32),
            "wo": nrm(kk[1], (D, D)),
            "bo": jnp.zeros((1, D), jnp.float32),
            "g2": jnp.ones((1, D), jnp.float32),
            "b2": jnp.zeros((1, D), jnp.float32),
            "wfc": nrm(kk[2], (D, DFF)),
            "bfc": jnp.zeros((1, DFF), jnp.float32),
            "wpr": nrm(kk[3], (DFF, D)),
            "bpr": jnp.zeros((1, D), jnp.float32),
        })
    return params


if __name__ == "__main__":
    key = jax.random.PRNGKey(0)
    pkey, dkey = jax.random.split(key)
    params = init_params(pkey)

    # deterministic "tokenized text": batch=2, seq=8 integer token ids
    token_ids = jax.random.randint(dkey, (BATCH, SEQ), 0, VOCAB, dtype=jnp.int32)

    out = embedding_model_forward(token_ids, params)
    out = jax.block_until_ready(out)
    assert out.shape == (BATCH, D), out.shape
    assert jnp.all(jnp.isfinite(out))
    print("KERNEL_OK")
</pallas_src>

<mosaic_0001>
module attributes {stable_mosaic.version = 11 : i64} {
  func.func @gpt2_embed_kernel(%arg0: memref<16x1xi32, #tpu.memory_space<vmem>>, %arg1: memref<128x32xf32, #tpu.memory_space<vmem>>, %arg2: memref<16x32xf32, #tpu.memory_space<vmem>>, %arg3: memref<16x16xf32, #tpu.memory_space<vmem>>, %arg4: memref<2x16xf32, #tpu.memory_space<vmem>>, %arg5: memref<2x1x32xf32, #tpu.memory_space<vmem>>, %arg6: memref<2x1x32xf32, #tpu.memory_space<vmem>>, %arg7: memref<2x2x32x16xf32, #tpu.memory_space<vmem>>, %arg8: memref<2x2x32x16xf32, #tpu.memory_space<vmem>>, %arg9: memref<2x2x32x16xf32, #tpu.memory_space<vmem>>, %arg10: memref<2x2x1x16xf32, #tpu.memory_space<vmem>>, %arg11: memref<2x2x1x16xf32, #tpu.memory_space<vmem>>, %arg12: memref<2x2x1x16xf32, #tpu.memory_space<vmem>>, %arg13: memref<2x2x16x32xf32, #tpu.memory_space<vmem>>, %arg14: memref<2x1x32xf32, #tpu.memory_space<vmem>>, %arg15: memref<2x1x32xf32, #tpu.memory_space<vmem>>, %arg16: memref<2x1x32xf32, #tpu.memory_space<vmem>>, %arg17: memref<2x32x128xf32, #tpu.memory_space<vmem>>, %arg18: memref<2x1x128xf32, #tpu.memory_space<vmem>>, %arg19: memref<2x128x32xf32, #tpu.memory_space<vmem>>, %arg20: memref<2x1x32xf32, #tpu.memory_space<vmem>>, %arg21: memref<1x32xf32, #tpu.memory_space<vmem>>, %arg22: memref<1x32xf32, #tpu.memory_space<vmem>>, %arg23: memref<2x128xf32, #tpu.memory_space<vmem>>) attributes {dimension_semantics = [], scalar_prefetch = 0 : i64, scratch_operands = 0 : i64, tpu.core_type = #tpu.core_type<tc>} {
    %c0 = arith.constant 0 : index
    %c0_0 = arith.constant 0 : index
    %0 = vector.load %arg0[%c0, %c0_0] : memref<16x1xi32, #tpu.memory_space<vmem>>, vector<16x1xi32>
    %1 = tpu.iota {dimensions = array<i32: 1>} : vector<16x128xi32>
    %2 = vector.broadcast %0 : vector<16x1xi32> to vector<16x128xi32>
    %3 = arith.cmpi eq, %2, %1 : vector<16x128xi32>
    %4 = arith.extui %3 : vector<16x128xi1> to vector<16x128xi32>
    %5 = arith.sitofp %4 : vector<16x128xi32> to vector<16x128xf32>
    %c0_1 = arith.constant 0 : index
    %c0_2 = arith.constant 0 : index
    %6 = vector.load %arg1[%c0_1, %c0_2] : memref<128x32xf32, #tpu.memory_space<vmem>>, vector<128x32xf32>
    %cst = arith.constant dense<0.000000e+00> : vector<16x32xf32>
    %7 = tpu.matmul %5, %6, %cst {dimension_numbers = #tpu.dot_dimension_numbers<[1], [0], [0], [1], [0, 0, 1, 1], [], []>} : vector<16x128xf32>, vector<128x32xf32>, vector<16x32xf32> -> vector<16x32xf32>
    %c0_3 = arith.constant 0 : index
    %c0_4 = arith.constant 0 : index
    %8 = vector.load %arg2[%c0_3, %c0_4] : memref<16x32xf32, #tpu.memory_space<vmem>>, vector<16x32xf32>
    %9 = arith.addf %7, %8 : vector<16x32xf32>
    %c0_5 = arith.constant 0 : index
    %c0_6 = arith.constant 0 : index
    %10 = vector.load %arg3[%c0_5, %c0_6] : memref<16x16xf32, #tpu.memory_space<vmem>>, vector<16x16xf32>
    %c0_7 = arith.constant 0 : index
    %c0_8 = arith.constant 0 : index
    %c0_9 = arith.constant 0 : index
    %11 = vector.load %arg5[%c0_7, %c0_8, %c0_9] : memref<2x1x32xf32, #tpu.memory_space<vmem>>, vector<1x1x32xf32>
    %12 = vector.shape_cast %11 : vector<1x1x32xf32> to vector<1x32xf32>
    %c0_10 = arith.constant 0 : index
    %c0_11 = arith.constant 0 : index
    %c0_12 = arith.constant 0 : index
    %13 = vector.load %arg6[%c0_10, %c0_11, %c0_12] : memref<2x1x32xf32, #tpu.memory_space<vmem>>, vector<1x1x32xf32>
    %14 = vector.shape_cast %13 : vector<1x1x32xf32> to vector<1x32xf32>
    %cst_13 = arith.constant dense<0.000000e+00> : vector<16xf32>
    %15 = vector.multi_reduction <add>, %9, %cst_13 [1] : vector<16x32xf32> to vector<16xf32>
    %16 = vector.shape_cast %15 : vector<16xf32> to vector<16x1xf32>
    %cst_14 = arith.constant 3.200000e+01 : f32
    %17 = vector.broadcast %cst_14 : f32 to vector<16x1xf32>
    %18 = arith.divf %16, %17 : vector<16x1xf32>
    %19 = vector.broadcast %18 : vector<16x1xf32> to vector<16x32xf32>
    %20 = arith.subf %9, %19 : vector<16x32xf32>
    %21 = arith.mulf %20, %20 : vector<16x32xf32>
    %cst_15 = arith.constant dense<0.000000e+00> : vector<16xf32>
    %22 = vector.multi_reduction <add>, %21, %cst_15 [1] : vector<16x32xf32> to vector<16xf32>
    %23 = vector.shape_cast %22 : vector<16xf32> to vector<16x1xf32>
    %cst_16 = arith.constant 3.200000e+01 : f32
    %24 = vector.broadcast %cst_16 : f32 to vector<16x1xf32>
    %25 = arith.divf %23, %24 : vector<16x1xf32>
    %26 = vector.broadcast %18 : vector<16x1xf32> to vector<16x32xf32>
    %27 = arith.subf %9, %26 : vector<16x32xf32>
    %cst_17 = arith.constant 9.99999974E-6 : f32
    %28 = vector.broadcast %cst_17 : f32 to vector<16x1xf32>
    %29 = arith.addf %25, %28 : vector<16x1xf32>
    %30 = math.rsqrt %29 : vector<16x1xf32>
    %31 = vector.broadcast %30 : vector<16x1xf32> to vector<16x32xf32>
    %32 = arith.mulf %27, %31 : vector<16x32xf32>
    %33 = vector.broadcast %12 : vector<1x32xf32> to vector<16x32xf32>
    %34 = arith.mulf %32, %33 : vector<16x32xf32>
    %35 = vector.broadcast %14 : vector<1x32xf32> to vector<16x32xf32>
    %36 = arith.addf %34, %35 : vector<16x32xf32>
    %cst_18 = arith.constant 0.000000e+00 : f32
    %37 = vector.broadcast %cst_18 : f32 to vector<16x32xf32>
    %c0_19 = arith.constant 0 : index
    %c0_20 = arith.constant 0 : index
    %c0_21 = arith.constant 0 : index
    %c0_22 = arith.constant 0 : index
    %38 = vector.load %arg7[%c0_19, %c0_20, %c0_21, %c0_22] : memref<2x2x32x16xf32, #tpu.memory_space<vmem>>, vector<1x1x32x16xf32>
    %39 = vector.shape_cast %38 : vector<1x1x32x16xf32> to vector<32x16xf32>
    %cst_23 = arith.constant dense<0.000000e+00> : vector<16x16xf32>
    %40 = tpu.matmul %36, %39, %cst_23 {dimension_numbers = #tpu.dot_dimension_numbers<[1], [0], [0], [1], [0, 0, 1, 1], [], []>} : vector<16x32xf32>, vector<32x16xf32>, vector<16x16xf32> -> vector<16x16xf32>
    %c0_24 = arith.constant 0 : index
    %c0_25 = arith.constant 0 : index
    %c0_26 = arith.constant 0 : index
    %c0_27 = arith.constant 0 : index
    %41 = vector.load %arg10[%c0_24, %c0_25, %c0_26, %c0_27] : memref<2x2x1x16xf32, #tpu.memory_space<vmem>>, vector<1x1x1x16xf32>
    %42 = vector.shape_cast %41 : vector<1x1x1x16xf32> to vector<1x16xf32>
    %43 = vector.broadcast %42 : vector<1x16xf32> to vector<16x16xf32>
    %44 = arith.addf %40, %43 : vector<16x16xf32>
    %cst_28 = arith.constant 2.500000e-01 : f32
    %45 = vector.broadcast %cst_28 : f32 to vector<16x16xf32>
    %46 = arith.mulf %44, %45 : vector<16x16xf32>
    %c0_29 = arith.constant 0 : index
    %c0_30 = arith.constant 0 : index
    %c0_31 = arith.constant 0 : index
    %c0_32 = arith.constant 0 : index
    %47 = vector.load %arg8[%c0_29, %c0_30, %c0_31, %c0_32] : memref<2x2x32x16xf32, #tpu.memory_space<vmem>>, vector<1x1x32x16xf32>
    %48 = vector.shape_cast %47 : vector<1x1x32x16xf32> to vector<32x16xf32>
    %cst_33 = arith.constant dense<0.000000e+00> : vector<16x16xf32>
    %49 = tpu.matmul %36, %48, %cst_33 {dimension_numbers = #tpu.dot_dimension_numbers<[1], [0], [0], [1], [0, 0, 1, 1], [], []>} : vector<16x32xf32>, vector<32x16xf32>, vector<16x16xf32> -> vector<16x16xf32>
    %c0_34 = arith.constant 0 : index
    %c0_35 = arith.constant 0 : index
    %c0_36 = arith.constant 0 : index
    %c0_37 = arith.constant 0 : index
    %50 = vector.load %arg11[%c0_34, %c0_35, %c0_36, %c0_37] : memref<2x2x1x16xf32, #tpu.memory_space<vmem>>, vector<1x1x1x16xf32>
    %51 = vector.shape_cast %50 : vector<1x1x1x16xf32> to vector<1x16xf32>
    %52 = vector.broadcast %51 : vector<1x16xf32> to vector<16x16xf32>
    %53 = arith.addf %49, %52 : vector<16x16xf32>
    %c0_38 = arith.constant 0 : index
    %c0_39 = arith.constant 0 : index
    %c0_40 = arith.constant 0 : index
    %c0_41 = arith.constant 0 : index
    %54 = vector.load %arg9[%c0_38, %c0_39, %c0_40, %c0_41] : memref<2x2x32x16xf32, #tpu.memory_space<vmem>>, vector<1x1x32x16xf32>
    %55 = vector.shape_cast %54 : vector<1x1x32x16xf32> to vector<32x16xf32>
    %cst_42 = arith.constant dense<0.000000e+00> : vector<16x16xf32>
    %56 = tpu.matmul %36, %55, %cst_42 {dimension_numbers = #tpu.dot_dimension_numbers<[1], [0], [0], [1], [0, 0, 1, 1], [], []>} : vector<16x32xf32>, vector<32x16xf32>, vector<16x16xf32> -> vector<16x16xf32>
    %c0_43 = arith.constant 0 : index
    %c0_44 = arith.constant 0 : index
    %c0_45 = arith.constant 0 : index
    %c0_46 = arith.constant 0 : index
    %57 = vector.load %arg12[%c0_43, %c0_44, %c0_45, %c0_46] : memref<2x2x1x16xf32, #tpu.memory_space<vmem>>, vector<1x1x1x16xf32>
    %58 = vector.shape_cast %57 : vector<1x1x1x16xf32> to vector<1x16xf32>
    %59 = vector.broadcast %58 : vector<1x16xf32> to vector<16x16xf32>
    %60 = arith.addf %56, %59 : vector<16x16xf32>
    %cst_47 = arith.constant dense<0.000000e+00> : vector<16x16xf32>
    %61 = tpu.matmul %46, %53, %cst_47 {dimension_numbers = #tpu.dot_dimension_numbers<[1], [1], [0], [0], [0, 0, 1, 0], [], []>} : vector<16x16xf32>, vector<16x16xf32>, vector<16x16xf32> -> vector<16x16xf32>
    %62 = arith.addf %61, %10 : vector<16x16xf32>
    %cst_48 = arith.constant dense<0xFF800000> : vector<16xf32>
    %63 = vector.multi_reduction <maximumf>, %62, %cst_48 [1] : vector<16x16xf32> to vector<16xf32>
    %64 = vector.shape_cast %63 : vector<16xf32> to vector<16x1xf32>
    %65 = vector.broadcast %64 : vector<16x1xf32> to vector<16x16xf32>
    %66 = arith.subf %62, %65 : vector<16x16xf32>
    %67 = math.exp %66 : vector<16x16xf32>
    %cst_49 = arith.constant dense<0.000000e+00> : vector<16xf32>
    %68 = vector.multi_reduction <add>, %67, %cst_49 [1] : vector<16x16xf32> to vector<16xf32>
    %69 = vector.shape_cast %68 : vector<16xf32> to vector<16x1xf32>
    %70 = tpu.reciprocal %69 {approx = true} : vector<16x1xf32> -> vector<16x1xf32>
    %71 = vector.broadcast %70 : vector<16x1xf32> to vector<16x16xf32>
    %72 = arith.mulf %67, %71 : vector<16x16xf32>
    %cst_50 = arith.constant dense<0.000000e+00> : vector<16x16xf32>
    %73 = tpu.matmul %72, %60, %cst_50 {dimension_numbers = #tpu.dot_dimension_numbers<[1], [0], [0], [1], [0, 0, 1, 1], [], []>} : vector<16x16xf32>, vector<16x16xf32>, vector<16x16xf32> -> vector<16x16xf32>
    %c0_51 = arith.constant 0 : index
    %c0_52 = arith.constant 0 : index
    %c0_53 = arith.constant 0 : index
    %c0_54 = arith.constant 0 : index
    %74 = vector.load %arg13[%c0_51, %c0_52, %c0_53, %c0_54] : memref<2x2x16x32xf32, #tpu.memory_space<vmem>>, vector<1x1x16x32xf32>
    %75 = vector.shape_cast %74 : vector<1x1x16x32xf32> to vector<16x32xf32>
    %cst_55 = arith.constant dense<0.000000e+00> : vector<16x32xf32>
    %76 = tpu.matmul %73, %75, %cst_55 {dimension_numbers = #tpu.dot_dimension_numbers<[1], [0], [0], [1], [0, 0, 1, 1], [], []>} : vector<16x16xf32>, vector<16x32xf32>, vector<16x32xf32> -> vector<16x32xf32>
    %77 = arith.addf %37, %76 : vector<16x32xf32>
    %c0_56 = arith.constant 0 : index
    %c1 = arith.constant 1 : index
    %c0_57 = arith.constant 0 : index
    %c0_58 = arith.constant 0 : index
    %78 = vector.load %arg7[%c0_56, %c1, %c0_57, %c0_58] : memref<2x2x32x16xf32, #tpu.memory_space<vmem>>, vector<1x1x32x16xf32>
    %79 = vector.shape_cast %78 : vector<1x1x32x16xf32> to vector<32x16xf32>
    %cst_59 = arith.constant dense<0.000000e+00> : vector<16x16xf32>
    %80 = tpu.matmul %36, %79, %cst_59 {dimension_numbers = #tpu.dot_dimension_numbers<[1], [0], [0], [1], [0, 0, 1, 1], [], []>} : vector<16x32xf32>, vector<32x16xf32>, vector<16x16xf32> -> vector<16x16xf32>
    %c0_60 = arith.constant 0 : index
    %c1_61 = arith.constant 1 : index
    %c0_62 = arith.constant 0 : index
    %c0_63 = arith.constant 0 : index
    %81 = vector.load %arg10[%c0_60, %c1_61, %c0_62, %c0_63] : memref<2x2x1x16xf32, #tpu.memory_space<vmem>>, vector<1x1x1x16xf32>
    %82 = vector.shape_cast %81 : vector<1x1x1x16xf32> to vector<1x16xf32>
    %83 = vector.broadcast %82 : vector<1x16xf32> to vector<16x16xf32>
    %84 = arith.addf %80, %83 : vector<16x16xf32>
    %cst_64 = arith.constant 2.500000e-01 : f32
    %85 = vector.broadcast %cst_64 : f32 to vector<16x16xf32>
    %86 = arith.mulf %84, %85 : vector<16x16xf32>
    %c0_65 = arith.constant 0 : index
    %c1_66 = arith.constant 1 : index
    %c0_67 = arith.constant 0 : index
    %c0_68 = arith.constant 0 : index
    %87 = vector.load %arg8[%c0_65, %c1_66, %c0_67, %c0_68] : memref<2x2x32x16xf32, #tpu.memory_space<vmem>>, vector<1x1x32x16xf32>
    %88 = vector.shape_cast %87 : vector<1x1x32x16xf32> to vector<32x16xf32>
    %cst_69 = arith.constant dense<0.000000e+00> : vector<16x16xf32>
    %89 = tpu.matmul %36, %88, %cst_69 {dimension_numbers = #tpu.dot_dimension_numbers<[1], [0], [0], [1], [0, 0, 1, 1], [], []>} : vector<16x32xf32>, vector<32x16xf32>, vector<16x16xf32> -> vector<16x16xf32>
    %c0_70 = arith.constant 0 : index
    %c1_71 = arith.constant 1 : index
    %c0_72 = arith.constant 0 : index
    %c0_73 = arith.constant 0 : index
    %90 = vector.load %arg11[%c0_70, %c1_71, %c0_72, %c0_73] : memref<2x2x1x16xf32, #tpu.memory_space<vmem>>, vector<1x1x1x16xf32>
    %91 = vector.shape_cast %90 : vector<1x1x1x16xf32> to vector<1x16xf32>
    %92 = vector.broadcast %91 : vector<1x16xf32> to vector<16x16xf32>
    %93 = arith.addf %89, %92 : vector<16x16xf32>
    %c0_74 = arith.constant 0 : index
    %c1_75 = arith.constant 1 : index
    %c0_76 = arith.constant 0 : index
    %c0_77 = arith.constant 0 : index
    %94 = vector.load %arg9[%c0_74, %c1_75, %c0_76, %c0_77] : memref<2x2x32x16xf32, #tpu.memory_space<vmem>>, vector<1x1x32x16xf32>
    %95 = vector.shape_cast %94 : vector<1x1x32x16xf32> to vector<32x16xf32>
    %cst_78 = arith.constant dense<0.000000e+00> : vector<16x16xf32>
    %96 = tpu.matmul %36, %95, %cst_78 {dimension_numbers = #tpu.dot_dimension_numbers<[1], [0], [0], [1], [0, 0, 1, 1], [], []>} : vector<16x32xf32>, vector<32x16xf32>, vector<16x16xf32> -> vector<16x16xf32>
    %c0_79 = arith.constant 0 : index
    %c1_80 = arith.constant 1 : index
    %c0_81 = arith.constant 0 : index
    %c0_82 = arith.constant 0 : index
    %97 = vector.load %arg12[%c0_79, %c1_80, %c0_81, %c0_82] : memref<2x2x1x16xf32, #tpu.memory_space<vmem>>, vector<1x1x1x16xf32>
    %98 = vector.shape_cast %97 : vector<1x1x1x16xf32> to vector<1x16xf32>
    %99 = vector.broadcast %98 : vector<1x16xf32> to vector<16x16xf32>
    %100 = arith.addf %96, %99 : vector<16x16xf32>
    %cst_83 = arith.constant dense<0.000000e+00> : vector<16x16xf32>
    %101 = tpu.matmul %86, %93, %cst_83 {dimension_numbers = #tpu.dot_dimension_numbers<[1], [1], [0], [0], [0, 0, 1, 0], [], []>} : vector<16x16xf32>, vector<16x16xf32>, vector<16x16xf32> -> vector<16x16xf32>
    %102 = arith.addf %101, %10 : vector<16x16xf32>
    %cst_84 = arith.constant dense<0xFF800000> : vector<16xf32>
    %103 = vector.multi_reduction <maximumf>, %102, %cst_84 [1] : vector<16x16xf32> to vector<16xf32>
    %104 = vector.shape_cast %103 : vector<16xf32> to vector<16x1xf32>
    %105 = vector.broadcast %104 : vector<16x1xf32> to vector<16x16xf32>
    %106 = arith.subf %102, %105 : vector<16x16xf32>
    %107 = math.exp %106 : vector<16x16xf32>
    %cst_85 = arith.constant dense<0.000000e+00> : vector<16xf32>
    %108 = vector.multi_reduction <add>, %107, %cst_85 [1] : vector<16x16xf32> to vector<16xf32>
    %109 = vector.shape_cast %108 : vector<16xf32> to vector<16x1xf32>
    %110 = tpu.reciprocal %109 {approx = true} : vector<16x1xf32> -> vector<16x1xf32>
    %111 = vector.broadcast %110 : vector<16x1xf32> to vector<16x16xf32>
    %112 = arith.mulf %107, %111 : vector<16x16xf32>
    %cst_86 = arith.constant dense<0.000000e+00> : vector<16x16xf32>
    %113 = tpu.matmul %112, %100, %cst_86 {dimension_numbers = #tpu.dot_dimension_numbers<[1], [0], [0], [1], [0, 0, 1, 1], [], []>} : vector<16x16xf32>, vector<16x16xf32>, vector<16x16xf32> -> vector<16x16xf32>
    %c0_87 = arith.constant 0 : index
    %c1_88 = arith.constant 1 : index
    %c0_89 = arith.constant 0 : index
    %c0_90 = arith.constant 0 : index
    %114 = vector.load %arg13[%c0_87, %c1_88, %c0_89, %c0_90] : memref<2x2x16x32xf32, #tpu.memory_space<vmem>>, vector<1x1x16x32xf32>
    %115 = vector.shape_cast %114 : vector<1x1x16x32xf32> to vector<16x32xf32>
    %cst_91 = arith.constant dense<0.000000e+00> : vector<16x32xf32>
    %116 = tpu.matmul %113, %115, %cst_91 {dimension_numbers = #tpu.dot_dimension_numbers<[1], [0], [0], [1], [0, 0, 1, 1], [], []>} : vector<16x16xf32>, vector<16x32xf32>, vector<16x32xf32> -> vector<16x32xf32>
    %117 = arith.addf %77, %116 : vector<16x32xf32>
    %118 = arith.addf %9, %117 : vector<16x32xf32>
    %c0_92 = arith.constant 0 : index
    %c0_93 = arith.constant 0 : index
    %c0_94 = arith.constant 0 : index
    %119 = vector.load %arg14[%c0_92, %c0_93, %c0_94] : memref<2x1x32xf32, #tpu.memory_space<vmem>>, vector<1x1x32xf32>
    %120 = vector.shape_cast %119 : vector<1x1x32xf32> to vector<1x32xf32>
    %121 = vector.broadcast %120 : vector<1x32xf32> to vector<16x32xf32>
    %122 = arith.addf %118, %121 : vector<16x32xf32>
    %c0_95 = arith.constant 0 : index
    %c0_96 = arith.constant 0 : index
    %c0_97 = arith.constant 0 : index
    %123 = vector.load %arg15[%c0_95, %c0_96, %c0_97] : memref<2x1x32xf32, #tpu.memory_space<vmem>>, vector<1x1x32xf32>
    %124 = vector.shape_cast %123 : vector<1x1x32xf32> to vector<1x32xf32>
    %c0_98 = arith.constant 0 : index
    %c0_99 = arith.constant 0 : index
    %c0_100 = arith.constant 0 : index
    %125 = vector.load %arg16[%c0_98, %c0_99, %c0_100] : memref<2x1x32xf32, #tpu.memory_space<vmem>>, vector<1x1x32xf32>
    %126 = vector.shape_cast %125 : vector<1x1x32xf32> to vector<1x32xf32>
    %cst_101 = arith.constant dense<0.000000e+00> : vector<16xf32>
    %127 = vector.multi_reduction <add>, %122, %cst_101 [1] : vector<16x32xf32> to vector<16xf32>
    %128 = vector.shape_cast %127 : vector<16xf32> to vector<16x1xf32>
    %cst_102 = arith.constant 3.200000e+01 : f32
    %129 = vector.broadcast %cst_102 : f32 to vector<16x1xf32>
    %130 = arith.divf %128, %129 : vector<16x1xf32>
    %131 = vector.broadcast %130 : vector<16x1xf32> to vector<16x32xf32>
    %132 = arith.subf %122, %131 : vector<16x32xf32>
    %133 = arith.mulf %132, %132 : vector<16x32xf32>
    %cst_103 = arith.constant dense<0.000000e+00> : vector<16xf32>
    %134 = vector.multi_reduction <add>, %133, %cst_103 [1] : vector<16x32xf32> to vector<16xf32>
    %135 = vector.shape_cast %134 : vector<16xf32> to vector<16x1xf32>
    %cst_104 = arith.constant 3.200000e+01 : f32
    %136 = vector.broadcast %cst_104 : f32 to vector<16x1xf32>
    %137 = arith.divf %135, %136 : vector<16x1xf32>
    %138 = vector.broadcast %130 : vector<16x1xf32> to vector<16x32xf32>
    %139 = arith.subf %122, %138 : vector<16x32xf32>
    %cst_105 = arith.constant 9.99999974E-6 : f32
    %140 = vector.broadcast %cst_105 : f32 to vector<16x1xf32>
    %141 = arith.addf %137, %140 : vector<16x1xf32>
    %142 = math.rsqrt %141 : vector<16x1xf32>
    %143 = vector.broadcast %142 : vector<16x1xf32> to vector<16x32xf32>
    %144 = arith.mulf %139, %143 : vector<16x32xf32>
    %145 = vector.broadcast %124 : vector<1x32xf32> to vector<16x32xf32>
    %146 = arith.mulf %144, %145 : vector<16x32xf32>
    %147 = vector.broadcast %126 : vector<1x32xf32> to vector<16x32xf32>
    %148 = arith.addf %146, %147 : vector<16x32xf32>
    %c0_106 = arith.constant 0 : index
    %c0_107 = arith.constant 0 : index
    %c0_108 = arith.constant 0 : index
    %149 = vector.load %arg17[%c0_106, %c0_107, %c0_108] : memref<2x32x128xf32, #tpu.memory_space<vmem>>, vector<1x32x128xf32>
    %150 = vector.shape_cast %149 : vector<1x32x128xf32> to vector<32x128xf32>
    %cst_109 = arith.constant dense<0.000000e+00> : vector<16x128xf32>
    %151 = tpu.matmul %148, %150, %cst_109 {dimension_numbers = #tpu.dot_dimension_numbers<[1], [0], [0], [1], [0, 0, 1, 1], [], []>} : vector<16x32xf32>, vector<32x128xf32>, vector<16x128xf32> -> vector<16x128xf32>
    %c0_110 = arith.constant 0 : index
    %c0_111 = arith.constant 0 : index
    %c0_112 = arith.constant 0 : index
    %152 = vector.load %arg18[%c0_110, %c0_111, %c0_112] : memref<2x1x128xf32, #tpu.memory_space<vmem>>, vector<1x1x128xf32>
    %153 = vector.shape_cast %152 : vector<1x1x128xf32> to vector<1x128xf32>
    %154 = vector.broadcast %153 : vector<1x128xf32> to vector<16x128xf32>
    %155 = arith.addf %151, %154 : vector<16x128xf32>
    %cst_113 = arith.constant 5.000000e-01 : f32
    %156 = vector.broadcast %cst_113 : f32 to vector<16x128xf32>
    %157 = arith.mulf %156, %155 : vector<16x128xf32>
    %cst_114 = arith.constant 4.471500e-02 : f32
    %158 = vector.broadcast %cst_114 : f32 to vector<16x128xf32>
    %159 = arith.mulf %158, %155 : vector<16x128xf32>
    %160 = arith.mulf %159, %155 : vector<16x128xf32>
    %161 = arith.mulf %160, %155 : vector<16x128xf32>
    %162 = arith.addf %155, %161 : vector<16x128xf32>
    %cst_115 = arith.constant 0.797884583 : f32
    %163 = vector.broadcast %cst_115 : f32 to vector<16x128xf32>
    %164 = arith.mulf %163, %162 : vector<16x128xf32>
    %165 = math.tanh %164 : vector<16x128xf32>
    %cst_116 = arith.constant 1.000000e+00 : f32
    %166 = vector.broadcast %cst_116 : f32 to vector<16x128xf32>
    %167 = arith.addf %166, %165 : vector<16x128xf32>
    %168 = arith.mulf %157, %167 : vector<16x128xf32>
    %c0_117 = arith.constant 0 : index
    %c0_118 = arith.constant 0 : index
    %c0_119 = arith.constant 0 : index
    %169 = vector.load %arg19[%c0_117, %c0_118, %c0_119] : memref<2x128x32xf32, #tpu.memory_space<vmem>>, vector<1x128x32xf32>
    %170 = vector.shape_cast %169 : vector<1x128x32xf32> to vector<128x32xf32>
    %cst_120 = arith.constant dense<0.000000e+00> : vector<16x32xf32>
    %171 = tpu.matmul %168, %170, %cst_120 {dimension_numbers = #tpu.dot_dimension_numbers<[1], [0], [0], [1], [0, 0, 1, 1], [], []>} : vector<16x128xf32>, vector<128x32xf32>, vector<16x32xf32> -> vector<16x32xf32>
    %172 = arith.addf %122, %171 : vector<16x32xf32>
    %c0_121 = arith.constant 0 : index
    %c0_122 = arith.constant 0 : index
    %c0_123 = arith.constant 0 : index
    %173 = vector.load %arg20[%c0_121, %c0_122, %c0_123] : memref<2x1x32xf32, #tpu.memory_space<vmem>>, vector<1x1x32xf32>
    %174 = vector.shape_cast %173 : vector<1x1x32xf32> to vector<1x32xf32>
    %175 = vector.broadcast %174 : vector<1x32xf32> to vector<16x32xf32>
    %176 = arith.addf %172, %175 : vector<16x32xf32>
    %c1_124 = arith.constant 1 : index
    %c0_125 = arith.constant 0 : index
    %c0_126 = arith.constant 0 : index
    %177 = vector.load %arg5[%c1_124, %c0_125, %c0_126] : memref<2x1x32xf32, #tpu.memory_space<vmem>>, vector<1x1x32xf32>
    %178 = vector.shape_cast %177 : vector<1x1x32xf32> to vector<1x32xf32>
    %c1_127 = arith.constant 1 : index
    %c0_128 = arith.constant 0 : index
    %c0_129 = arith.constant 0 : index
    %179 = vector.load %arg6[%c1_127, %c0_128, %c0_129] : memref<2x1x32xf32, #tpu.memory_space<vmem>>, vector<1x1x32xf32>
    %180 = vector.shape_cast %179 : vector<1x1x32xf32> to vector<1x32xf32>
    %cst_130 = arith.constant dense<0.000000e+00> : vector<16xf32>
    %181 = vector.multi_reduction <add>, %176, %cst_130 [1] : vector<16x32xf32> to vector<16xf32>
    %182 = vector.shape_cast %181 : vector<16xf32> to vector<16x1xf32>
    %cst_131 = arith.constant 3.200000e+01 : f32
    %183 = vector.broadcast %cst_131 : f32 to vector<16x1xf32>
    %184 = arith.divf %182, %183 : vector<16x1xf32>
    %185 = vector.broadcast %184 : vector<16x1xf32> to vector<16x32xf32>
    %186 = arith.subf %176, %185 : vector<16x32xf32>
    %187 = arith.mulf %186, %186 : vector<16x32xf32>
    %cst_132 = arith.constant dense<0.000000e+00> : vector<16xf32>
    %188 = vector.multi_reduction <add>, %187, %cst_132 [1] : vector<16x32xf32> to vector<16xf32>
    %189 = vector.shape_cast %188 : vector<16xf32> to vector<16x1xf32>
    %cst_133 = arith.constant 3.200000e+01 : f32
    %190 = vector.broadcast %cst_133 : f32 to vector<16x1xf32>
    %191 = arith.divf %189, %190 : vector<16x1xf32>
    %192 = vector.broadcast %184 : vector<16x1xf32> to vector<16x32xf32>
    %193 = arith.subf %176, %192 : vector<16x32xf32>
    %cst_134 = arith.constant 9.99999974E-6 : f32
    %194 = vector.broadcast %cst_134 : f32 to vector<16x1xf32>
    %195 = arith.addf %191, %194 : vector<16x1xf32>
    %196 = math.rsqrt %195 : vector<16x1xf32>
    %197 = vector.broadcast %196 : vector<16x1xf32> to vector<16x32xf32>
    %198 = arith.mulf %193, %197 : vector<16x32xf32>
    %199 = vector.broadcast %178 : vector<1x32xf32> to vector<16x32xf32>
    %200 = arith.mulf %198, %199 : vector<16x32xf32>
    %201 = vector.broadcast %180 : vector<1x32xf32> to vector<16x32xf32>
    %202 = arith.addf %200, %201 : vector<16x32xf32>
    %cst_135 = arith.constant 0.000000e+00 : f32
    %203 = vector.broadcast %cst_135 : f32 to vector<16x32xf32>
    %c1_136 = arith.constant 1 : index
    %c0_137 = arith.constant 0 : index
    %c0_138 = arith.constant 0 : index
    %c0_139 = arith.constant 0 : index
    %204 = vector.load %arg7[%c1_136, %c0_137, %c0_138, %c0_139] : memref<2x2x32x16xf32, #tpu.memory_space<vmem>>, vector<1x1x32x16xf32>
    %205 = vector.shape_cast %204 : vector<1x1x32x16xf32> to vector<32x16xf32>
    %cst_140 = arith.constant dense<0.000000e+00> : vector<16x16xf32>
    %206 = tpu.matmul %202, %205, %cst_140 {dimension_numbers = #tpu.dot_dimension_numbers<[1], [0], [0], [1], [0, 0, 1, 1], [], []>} : vector<16x32xf32>, vector<32x16xf32>, vector<16x16xf32> -> vector<16x16xf32>
    %c1_141 = arith.constant 1 : index
    %c0_142 = arith.constant 0 : index
    %c0_143 = arith.constant 0 : index
    %c0_144 = arith.constant 0 : index
    %207 = vector.load %arg10[%c1_141, %c0_142, %c0_143, %c0_144] : memref<2x2x1x16xf32, #tpu.memory_space<vmem>>, vector<1x1x1x16xf32>
    %208 = vector.shape_cast %207 : vector<1x1x1x16xf32> to vector<1x16xf32>
    %209 = vector.broadcast %208 : vector<1x16xf32> to vector<16x16xf32>
    %210 = arith.addf %206, %209 : vector<16x16xf32>
    %cst_145 = arith.constant 2.500000e-01 : f32
    %211 = vector.broadcast %cst_145 : f32 to vector<16x16xf32>
    %212 = arith.mulf %210, %211 : vector<16x16xf32>
    %c1_146 = arith.constant 1 : index
    %c0_147 = arith.constant 0 : index
    %c0_148 = arith.constant 0 : index
    %c0_149 = arith.constant 0 : index
    %213 = vector.load %arg8[%c1_146, %c0_147, %c0_148, %c0_149] : memref<2x2x32x16xf32, #tpu.memory_space<vmem>>, vector<1x1x32x16xf32>
    %214 = vector.shape_cast %213 : vector<1x1x32x16xf32> to vector<32x16xf32>
    %cst_150 = arith.constant dense<0.000000e+00> : vector<16x16xf32>
    %215 = tpu.matmul %202, %214, %cst_150 {dimension_numbers = #tpu.dot_dimension_numbers<[1], [0], [0], [1], [0, 0, 1, 1], [], []>} : vector<16x32xf32>, vector<32x16xf32>, vector<16x16xf32> -> vector<16x16xf32>
    %c1_151 = arith.constant 1 : index
    %c0_152 = arith.constant 0 : index
    %c0_153 = arith.constant 0 : index
    %c0_154 = arith.constant 0 : index
    %216 = vector.load %arg11[%c1_151, %c0_152, %c0_153, %c0_154] : memref<2x2x1x16xf32, #tpu.memory_space<vmem>>, vector<1x1x1x16xf32>
    %217 = vector.shape_cast %216 : vector<1x1x1x16xf32> to vector<1x16xf32>
    %218 = vector.broadcast %217 : vector<1x16xf32> to vector<16x16xf32>
    %219 = arith.addf %215, %218 : vector<16x16xf32>
    %c1_155 = arith.constant 1 : index
    %c0_156 = arith.constant 0 : index
    %c0_157 = arith.constant 0 : index
    %c0_158 = arith.constant 0 : index
    %220 = vector.load %arg9[%c1_155, %c0_156, %c0_157, %c0_158] : memref<2x2x32x16xf32, #tpu.memory_space<vmem>>, vector<1x1x32x16xf32>
    %221 = vector.shape_cast %220 : vector<1x1x32x16xf32> to vector<32x16xf32>
    %cst_159 = arith.constant dense<0.000000e+00> : vector<16x16xf32>
    %222 = tpu.matmul %202, %221, %cst_159 {dimension_numbers = #tpu.dot_dimension_numbers<[1], [0], [0], [1], [0, 0, 1, 1], [], []>} : vector<16x32xf32>, vector<32x16xf32>, vector<16x16xf32> -> vector<16x16xf32>
    %c1_160 = arith.constant 1 : index
    %c0_161 = arith.constant 0 : index
    %c0_162 = arith.constant 0 : index
    %c0_163 = arith.constant 0 : index
    %223 = vector.load %arg12[%c1_160, %c0_161, %c0_162, %c0_163] : memref<2x2x1x16xf32, #tpu.memory_space<vmem>>, vector<1x1x1x16xf32>
    %224 = vector.shape_cast %223 : vector<1x1x1x16xf32> to vector<1x16xf32>
    %225 = vector.broadcast %224 : vector<1x16xf32> to vector<16x16xf32>
    %226 = arith.addf %222, %225 : vector<16x16xf32>
    %cst_164 = arith.constant dense<0.000000e+00> : vector<16x16xf32>
    %227 = tpu.matmul %212, %219, %cst_164 {dimension_numbers = #tpu.dot_dimension_numbers<[1], [1], [0], [0], [0, 0, 1, 0], [], []>} : vector<16x16xf32>, vector<16x16xf32>, vector<16x16xf32> -> vector<16x16xf32>
    %228 = arith.addf %227, %10 : vector<16x16xf32>
    %cst_165 = arith.constant dense<0xFF800000> : vector<16xf32>
    %229 = vector.multi_reduction <maximumf>, %228, %cst_165 [1] : vector<16x16xf32> to vector<16xf32>
    %230 = vector.shape_cast %229 : vector<16xf32> to vector<16x1xf32>
    %231 = vector.broadcast %230 : vector<16x1xf32> to vector<16x16xf32>
    %232 = arith.subf %228, %231 : vector<16x16xf32>
    %233 = math.exp %232 : vector<16x16xf32>
    %cst_166 = arith.constant dense<0.000000e+00> : vector<16xf32>
    %234 = vector.multi_reduction <add>, %233, %cst_166 [1] : vector<16x16xf32> to vector<16xf32>
    %235 = vector.shape_cast %234 : vector<16xf32> to vector<16x1xf32>
    %236 = tpu.reciprocal %235 {approx = true} : vector<16x1xf32> -> vector<16x1xf32>
    %237 = vector.broadcast %236 : vector<16x1xf32> to vector<16x16xf32>
    %238 = arith.mulf %233, %237 : vector<16x16xf32>
    %cst_167 = arith.constant dense<0.000000e+00> : vector<16x16xf32>
    %239 = tpu.matmul %238, %226, %cst_167 {dimension_numbers = #tpu.dot_dimension_numbers<[1], [0], [0], [1], [0, 0, 1, 1], [], []>} : vector<16x16xf32>, vector<16x16xf32>, vector<16x16xf32> -> vector<16x16xf32>
    %c1_168 = arith.constant 1 : index
    %c0_169 = arith.constant 0 : index
    %c0_170 = arith.constant 0 : index
    %c0_171 = arith.constant 0 : index
    %240 = vector.load %arg13[%c1_168, %c0_169, %c0_170, %c0_171] : memref<2x2x16x32xf32, #tpu.memory_space<vmem>>, vector<1x1x16x32xf32>
    %241 = vector.shape_cast %240 : vector<1x1x16x32xf32> to vector<16x32xf32>
    %cst_172 = arith.constant dense<0.000000e+00> : vector<16x32xf32>
    %242 = tpu.matmul %239, %241, %cst_172 {dimension_numbers = #tpu.dot_dimension_numbers<[1], [0], [0], [1], [0, 0, 1, 1], [], []>} : vector<16x16xf32>, vector<16x32xf32>, vector<16x32xf32> -> vector<16x32xf32>
    %243 = arith.addf %203, %242 : vector<16x32xf32>
    %c1_173 = arith.constant 1 : index
    %c1_174 = arith.constant 1 : index
    %c0_175 = arith.constant 0 : index
    %c0_176 = arith.constant 0 : index
    %244 = vector.load %arg7[%c1_173, %c1_174, %c0_175, %c0_176] : memref<2x2x32x16xf32, #tpu.memory_space<vmem>>, vector<1x1x32x16xf32>
    %245 = vector.shape_cast %244 : vector<1x1x32x16xf32> to vector<32x16xf32>
    %cst_177 = arith.constant dense<0.000000e+00> : vector<16x16xf32>
    %246 = tpu.matmul %202, %245, %cst_177 {dimension_numbers = #tpu.dot_dimension_numbers<[1], [0], [0], [1], [0, 0, 1, 1], [], []>} : vector<16x32xf32>, vector<32x16xf32>, vector<16x16xf32> -> vector<16x16xf32>
    %c1_178 = arith.constant 1 : index
    %c1_179 = arith.constant 1 : index
    %c0_180 = arith.constant 0 : index
    %c0_181 = arith.constant 0 : index
    %247 = vector.load %arg10[%c1_178, %c1_179, %c0_180, %c0_181] : memref<2x2x1x16xf32, #tpu.memory_space<vmem>>, vector<1x1x1x16xf32>
    %248 = vector.shape_cast %247 : vector<1x1x1x16xf32> to vector<1x16xf32>
    %249 = vector.broadcast %248 : vector<1x16xf32> to vector<16x16xf32>
    %250 = arith.addf %246, %249 : vector<16x16xf32>
    %cst_182 = arith.constant 2.500000e-01 : f32
    %251 = vector.broadcast %cst_182 : f32 to vector<16x16xf32>
    %252 = arith.mulf %250, %251 : vector<16x16xf32>
    %c1_183 = arith.constant 1 : index
    %c1_184 = arith.constant 1 : index
    %c0_185 = arith.constant 0 : index
    %c0_186 = arith.constant 0 : index
    %253 = vector.load %arg8[%c1_183, %c1_184, %c0_185, %c0_186] : memref<2x2x32x16xf32, #tpu.memory_space<vmem>>, vector<1x1x32x16xf32>
    %254 = vector.shape_cast %253 : vector<1x1x32x16xf32> to vector<32x16xf32>
    %cst_187 = arith.constant dense<0.000000e+00> : vector<16x16xf32>
    %255 = tpu.matmul %202, %254, %cst_187 {dimension_numbers = #tpu.dot_dimension_numbers<[1], [0], [0], [1], [0, 0, 1, 1], [], []>} : vector<16x32xf32>, vector<32x16xf32>, vector<16x16xf32> -> vector<16x16xf32>
    %c1_188 = arith.constant 1 : index
    %c1_189 = arith.constant 1 : index
    %c0_190 = arith.constant 0 : index
    %c0_191 = arith.constant 0 : index
    %256 = vector.load %arg11[%c1_188, %c1_189, %c0_190, %c0_191] : memref<2x2x1x16xf32, #tpu.memory_space<vmem>>, vector<1x1x1x16xf32>
    %257 = vector.shape_cast %256 : vector<1x1x1x16xf32> to vector<1x16xf32>
    %258 = vector.broadcast %257 : vector<1x16xf32> to vector<16x16xf32>
    %259 = arith.addf %255, %258 : vector<16x16xf32>
    %c1_192 = arith.constant 1 : index
    %c1_193 = arith.constant 1 : index
    %c0_194 = arith.constant 0 : index
    %c0_195 = arith.constant 0 : index
    %260 = vector.load %arg9[%c1_192, %c1_193, %c0_194, %c0_195] : memref<2x2x32x16xf32, #tpu.memory_space<vmem>>, vector<1x1x32x16xf32>
    %261 = vector.shape_cast %260 : vector<1x1x32x16xf32> to vector<32x16xf32>
    %cst_196 = arith.constant dense<0.000000e+00> : vector<16x16xf32>
    %262 = tpu.matmul %202, %261, %cst_196 {dimension_numbers = #tpu.dot_dimension_numbers<[1], [0], [0], [1], [0, 0, 1, 1], [], []>} : vector<16x32xf32>, vector<32x16xf32>, vector<16x16xf32> -> vector<16x16xf32>
    %c1_197 = arith.constant 1 : index
    %c1_198 = arith.constant 1 : index
    %c0_199 = arith.constant 0 : index
    %c0_200 = arith.constant 0 : index
    %263 = vector.load %arg12[%c1_197, %c1_198, %c0_199, %c0_200] : memref<2x2x1x16xf32, #tpu.memory_space<vmem>>, vector<1x1x1x16xf32>
    %264 = vector.shape_cast %263 : vector<1x1x1x16xf32> to vector<1x16xf32>
    %265 = vector.broadcast %264 : vector<1x16xf32> to vector<16x16xf32>
    %266 = arith.addf %262, %265 : vector<16x16xf32>
    %cst_201 = arith.constant dense<0.000000e+00> : vector<16x16xf32>
    %267 = tpu.matmul %252, %259, %cst_201 {dimension_numbers = #tpu.dot_dimension_numbers<[1], [1], [0], [0], [0, 0, 1, 0], [], []>} : vector<16x16xf32>, vector<16x16xf32>, vector<16x16xf32> -> vector<16x16xf32>
    %268 = arith.addf %267, %10 : vector<16x16xf32>
    %cst_202 = arith.constant dense<0xFF800000> : vector<16xf32>
    %269 = vector.multi_reduction <maximumf>, %268, %cst_202 [1] : vector<16x16xf32> to vector<16xf32>
    %270 = vector.shape_cast %269 : vector<16xf32> to vector<16x1xf32>
    %271 = vector.broadcast %270 : vector<16x1xf32> to vector<16x16xf32>
    %272 = arith.subf %268, %271 : vector<16x16xf32>
    %273 = math.exp %272 : vector<16x16xf32>
    %cst_203 = arith.constant dense<0.000000e+00> : vector<16xf32>
    %274 = vector.multi_reduction <add>, %273, %cst_203 [1] : vector<16x16xf32> to vector<16xf32>
    %275 = vector.shape_cast %274 : vector<16xf32> to vector<16x1xf32>
    %276 = tpu.reciprocal %275 {approx = true} : vector<16x1xf32> -> vector<16x1xf32>
    %277 = vector.broadcast %276 : vector<16x1xf32> to vector<16x16xf32>
    %278 = arith.mulf %273, %277 : vector<16x16xf32>
    %cst_204 = arith.constant dense<0.000000e+00> : vector<16x16xf32>
    %279 = tpu.matmul %278, %266, %cst_204 {dimension_numbers = #tpu.dot_dimension_numbers<[1], [0], [0], [1], [0, 0, 1, 1], [], []>} : vector<16x16xf32>, vector<16x16xf32>, vector<16x16xf32> -> vector<16x16xf32>
    %c1_205 = arith.constant 1 : index
    %c1_206 = arith.constant 1 : index
    %c0_207 = arith.constant 0 : index
    %c0_208 = arith.constant 0 : index
    %280 = vector.load %arg13[%c1_205, %c1_206, %c0_207, %c0_208] : memref<2x2x16x32xf32, #tpu.memory_space<vmem>>, vector<1x1x16x32xf32>
    %281 = vector.shape_cast %280 : vector<1x1x16x32xf32> to vector<16x32xf32>
    %cst_209 = arith.constant dense<0.000000e+00> : vector<16x32xf32>
    %282 = tpu.matmul %279, %281, %cst_209 {dimension_numbers = #tpu.dot_dimension_numbers<[1], [0], [0], [1], [0, 0, 1, 1], [], []>} : vector<16x16xf32>, vector<16x32xf32>, vector<16x32xf32> -> vector<16x32xf32>
    %283 = arith.addf %243, %282 : vector<16x32xf32>
    %284 = arith.addf %176, %283 : vector<16x32xf32>
    %c1_210 = arith.constant 1 : index
    %c0_211 = arith.constant 0 : index
    %c0_212 = arith.constant 0 : index
    %285 = vector.load %arg14[%c1_210, %c0_211, %c0_212] : memref<2x1x32xf32, #tpu.memory_space<vmem>>, vector<1x1x32xf32>
    %286 = vector.shape_cast %285 : vector<1x1x32xf32> to vector<1x32xf32>
    %287 = vector.broadcast %286 : vector<1x32xf32> to vector<16x32xf32>
    %288 = arith.addf %284, %287 : vector<16x32xf32>
    %c1_213 = arith.constant 1 : index
    %c0_214 = arith.constant 0 : index
    %c0_215 = arith.constant 0 : index
    %289 = vector.load %arg15[%c1_213, %c0_214, %c0_215] : memref<2x1x32xf32, #tpu.memory_space<vmem>>, vector<1x1x32xf32>
    %290 = vector.shape_cast %289 : vector<1x1x32xf32> to vector<1x32xf32>
    %c1_216 = arith.constant 1 : index
    %c0_217 = arith.constant 0 : index
    %c0_218 = arith.constant 0 : index
    %291 = vector.load %arg16[%c1_216, %c0_217, %c0_218] : memref<2x1x32xf32, #tpu.memory_space<vmem>>, vector<1x1x32xf32>
    %292 = vector.shape_cast %291 : vector<1x1x32xf32> to vector<1x32xf32>
    %cst_219 = arith.constant dense<0.000000e+00> : vector<16xf32>
    %293 = vector.multi_reduction <add>, %288, %cst_219 [1] : vector<16x32xf32> to vector<16xf32>
    %294 = vector.shape_cast %293 : vector<16xf32> to vector<16x1xf32>
    %cst_220 = arith.constant 3.200000e+01 : f32
    %295 = vector.broadcast %cst_220 : f32 to vector<16x1xf32>
    %296 = arith.divf %294, %295 : vector<16x1xf32>
    %297 = vector.broadcast %296 : vector<16x1xf32> to vector<16x32xf32>
    %298 = arith.subf %288, %297 : vector<16x32xf32>
    %299 = arith.mulf %298, %298 : vector<16x32xf32>
    %cst_221 = arith.constant dense<0.000000e+00> : vector<16xf32>
    %300 = vector.multi_reduction <add>, %299, %cst_221 [1] : vector<16x32xf32> to vector<16xf32>
    %301 = vector.shape_cast %300 : vector<16xf32> to vector<16x1xf32>
    %cst_222 = arith.constant 3.200000e+01 : f32
    %302 = vector.broadcast %cst_222 : f32 to vector<16x1xf32>
    %303 = arith.divf %301, %302 : vector<16x1xf32>
    %304 = vector.broadcast %296 : vector<16x1xf32> to vector<16x32xf32>
    %305 = arith.subf %288, %304 : vector<16x32xf32>
    %cst_223 = arith.constant 9.99999974E-6 : f32
    %306 = vector.broadcast %cst_223 : f32 to vector<16x1xf32>
    %307 = arith.addf %303, %306 : vector<16x1xf32>
    %308 = math.rsqrt %307 : vector<16x1xf32>
    %309 = vector.broadcast %308 : vector<16x1xf32> to vector<16x32xf32>
    %310 = arith.mulf %305, %309 : vector<16x32xf32>
    %311 = vector.broadcast %290 : vector<1x32xf32> to vector<16x32xf32>
    %312 = arith.mulf %310, %311 : vector<16x32xf32>
    %313 = vector.broadcast %292 : vector<1x32xf32> to vector<16x32xf32>
    %314 = arith.addf %312, %313 : vector<16x32xf32>
    %c1_224 = arith.constant 1 : index
    %c0_225 = arith.constant 0 : index
    %c0_226 = arith.constant 0 : index
    %315 = vector.load %arg17[%c1_224, %c0_225, %c0_226] : memref<2x32x128xf32, #tpu.memory_space<vmem>>, vector<1x32x128xf32>
    %316 = vector.shape_cast %315 : vector<1x32x128xf32> to vector<32x128xf32>
    %cst_227 = arith.constant dense<0.000000e+00> : vector<16x128xf32>
    %317 = tpu.matmul %314, %316, %cst_227 {dimension_numbers = #tpu.dot_dimension_numbers<[1], [0], [0], [1], [0, 0, 1, 1], [], []>} : vector<16x32xf32>, vector<32x128xf32>, vector<16x128xf32> -> vector<16x128xf32>
    %c1_228 = arith.constant 1 : index
    %c0_229 = arith.constant 0 : index
    %c0_230 = arith.constant 0 : index
    %318 = vector.load %arg18[%c1_228, %c0_229, %c0_230] : memref<2x1x128xf32, #tpu.memory_space<vmem>>, vector<1x1x128xf32>
    %319 = vector.shape_cast %318 : vector<1x1x128xf32> to vector<1x128xf32>
    %320 = vector.broadcast %319 : vector<1x128xf32> to vector<16x128xf32>
    %321 = arith.addf %317, %320 : vector<16x128xf32>
    %cst_231 = arith.constant 5.000000e-01 : f32
    %322 = vector.broadcast %cst_231 : f32 to vector<16x128xf32>
    %323 = arith.mulf %322, %321 : vector<16x128xf32>
    %cst_232 = arith.constant 4.471500e-02 : f32
    %324 = vector.broadcast %cst_232 : f32 to vector<16x128xf32>
    %325 = arith.mulf %324, %321 : vector<16x128xf32>
    %326 = arith.mulf %325, %321 : vector<16x128xf32>
    %327 = arith.mulf %326, %321 : vector<16x128xf32>
    %328 = arith.addf %321, %327 : vector<16x128xf32>
    %cst_233 = arith.constant 0.797884583 : f32
    %329 = vector.broadcast %cst_233 : f32 to vector<16x128xf32>
    %330 = arith.mulf %329, %328 : vector<16x128xf32>
    %331 = math.tanh %330 : vector<16x128xf32>
    %cst_234 = arith.constant 1.000000e+00 : f32
    %332 = vector.broadcast %cst_234 : f32 to vector<16x128xf32>
    %333 = arith.addf %332, %331 : vector<16x128xf32>
    %334 = arith.mulf %323, %333 : vector<16x128xf32>
    %c1_235 = arith.constant 1 : index
    %c0_236 = arith.constant 0 : index
    %c0_237 = arith.constant 0 : index
    %335 = vector.load %arg19[%c1_235, %c0_236, %c0_237] : memref<2x128x32xf32, #tpu.memory_space<vmem>>, vector<1x128x32xf32>
    %336 = vector.shape_cast %335 : vector<1x128x32xf32> to vector<128x32xf32>
    %cst_238 = arith.constant dense<0.000000e+00> : vector<16x32xf32>
    %337 = tpu.matmul %334, %336, %cst_238 {dimension_numbers = #tpu.dot_dimension_numbers<[1], [0], [0], [1], [0, 0, 1, 1], [], []>} : vector<16x128xf32>, vector<128x32xf32>, vector<16x32xf32> -> vector<16x32xf32>
    %338 = arith.addf %288, %337 : vector<16x32xf32>
    %c1_239 = arith.constant 1 : index
    %c0_240 = arith.constant 0 : index
    %c0_241 = arith.constant 0 : index
    %339 = vector.load %arg20[%c1_239, %c0_240, %c0_241] : memref<2x1x32xf32, #tpu.memory_space<vmem>>, vector<1x1x32xf32>
    %340 = vector.shape_cast %339 : vector<1x1x32xf32> to vector<1x32xf32>
    %341 = vector.broadcast %340 : vector<1x32xf32> to vector<16x32xf32>
    %342 = arith.addf %338, %341 : vector<16x32xf32>
    %c0_242 = arith.constant 0 : index
    %c0_243 = arith.constant 0 : index
    %343 = vector.load %arg21[%c0_242, %c0_243] : memref<1x32xf32, #tpu.memory_space<vmem>>, vector<1x32xf32>
    %c0_244 = arith.constant 0 : index
    %c0_245 = arith.constant 0 : index
    %344 = vector.load %arg22[%c0_244, %c0_245] : memref<1x32xf32, #tpu.memory_space<vmem>>, vector<1x32xf32>
    %cst_246 = arith.constant dense<0.000000e+00> : vector<16xf32>
    %345 = vector.multi_reduction <add>, %342, %cst_246 [1] : vector<16x32xf32> to vector<16xf32>
    %346 = vector.shape_cast %345 : vector<16xf32> to vector<16x1xf32>
    %cst_247 = arith.constant 3.200000e+01 : f32
    %347 = vector.broadcast %cst_247 : f32 to vector<16x1xf32>
    %348 = arith.divf %346, %347 : vector<16x1xf32>
    %349 = vector.broadcast %348 : vector<16x1xf32> to vector<16x32xf32>
    %350 = arith.subf %342, %349 : vector<16x32xf32>
    %351 = arith.mulf %350, %350 : vector<16x32xf32>
    %cst_248 = arith.constant dense<0.000000e+00> : vector<16xf32>
    %352 = vector.multi_reduction <add>, %351, %cst_248 [1] : vector<16x32xf32> to vector<16xf32>
    %353 = vector.shape_cast %352 : vector<16xf32> to vector<16x1xf32>
    %cst_249 = arith.constant 3.200000e+01 : f32
    %354 = vector.broadcast %cst_249 : f32 to vector<16x1xf32>
    %355 = arith.divf %353, %354 : vector<16x1xf32>
    %356 = vector.broadcast %348 : vector<16x1xf32> to vector<16x32xf32>
    %357 = arith.subf %342, %356 : vector<16x32xf32>
    %cst_250 = arith.constant 9.99999974E-6 : f32
    %358 = vector.broadcast %cst_250 : f32 to vector<16x1xf32>
    %359 = arith.addf %355, %358 : vector<16x1xf32>
    %360 = math.rsqrt %359 : vector<16x1xf32>
    %361 = vector.broadcast %360 : vector<16x1xf32> to vector<16x32xf32>
    %362 = arith.mulf %357, %361 : vector<16x32xf32>
    %363 = vector.broadcast %343 : vector<1x32xf32> to vector<16x32xf32>
    %364 = arith.mulf %362, %363 : vector<16x32xf32>
    %365 = vector.broadcast %344 : vector<1x32xf32> to vector<16x32xf32>
    %366 = arith.addf %364, %365 : vector<16x32xf32>
    %c0_251 = arith.constant 0 : index
    %c0_252 = arith.constant 0 : index
    %367 = vector.load %arg4[%c0_251, %c0_252] : memref<2x16xf32, #tpu.memory_space<vmem>>, vector<2x16xf32>
    %cst_253 = arith.constant dense<0.000000e+00> : vector<2x32xf32>
    %368 = tpu.matmul %367, %366, %cst_253 {dimension_numbers = #tpu.dot_dimension_numbers<[1], [0], [0], [1], [0, 0, 1, 1], [], []>} : vector<2x16xf32>, vector<16x32xf32>, vector<2x32xf32> -> vector<2x32xf32>
    %cst_254 = arith.constant 0.000000e+00 : f32
    %369 = vector.broadcast %cst_254 : f32 to vector<2x96xf32>
    %370 = tpu.concatenate %368, %369 in 1 : vector<2x32xf32>, vector<2x96xf32> -> vector<2x128xf32>
    %c0_255 = arith.constant 0 : index
    %c0_256 = arith.constant 0 : index
    %371 = vector.load %arg23[%c0_255, %c0_256] : memref<2x128xf32, #tpu.memory_space<vmem>>, vector<2x128xf32>
    tpu.vector_store %arg23[%c0_255, %c0_256], %370 {strides = array<i32>} : memref<2x128xf32, #tpu.memory_space<vmem>>, vector<2x128xf32>,
    return
  }
}

</mosaic_0001>

<llo_original>
// kernel: squeeze.6
$region0: #{squeeze.6}
  %s0 = inlined_call_operand.vmem [shape: f32[32], index: 0, kind: input, shape index: {}]
  %s1 = inlined_call_operand.vmem [shape: f32[1,2,1,16], index: 1, kind: output, shape index: {}]
  $region1: #{squeeze.6} parent=0
    #allocation0 [shape = 'u8[4096]{0}', space=vmem, size = 0x1000, scoped, tag = 'scoped mem for output reshape']
    #allocation1 [shape = 'u8[4096]{0}', space=vmem, size = 0x1000, scoped, tag = 'scoped mem for input reshape']
    %s3 = sshllo.u32 0, 1
    %v4 = vld [vmem:[%s0] sm:%s3]
    %5 = vst [vmem:[#allocation1] sm:%s3] %v4
    %v6 = vld [vmem:[#allocation1] sm:$0x1]
    %vm7 = vcmask 130048
    %8 = vst.msk [vmem:[#allocation0] sm:$0x1] %vm7, %v6
    %v9 = vld [vmem:[#allocation1] sm:$0x1]
    %10 = vrot.lane.b32.xlu0 %v9, 112
    %v11 = vpop.permute.xlu0 %10
    %vm12 = vcmask 130048
    %s13 = scalar_lea.vmem [#allocation0], 1
    %14 = vst.msk [vmem:[%s13] sm:$0x1] %vm12, %v11
    %s16 = sshllo.u32 0, 2
    %v18 = vld [vmem:[#allocation0] sm:%s16]
    %s19 = sshllo.u32 0, 2
    %20 = vst [vmem:[%s1] sm:%s19] %v18

// kernel: embedding_model_forward.1
$region0: #{embedding_model_forward.1}
  #allocation0 [shape = 'u32[]', space=smem, size = 0x4, offset = 0x4, fixed_abs, tag = 'smem constant byte address 0x4 - core index']
  #allocation1 [shape = 'u32[144,128]{1,0:T(1,128)}', space=vmem, size = 0x12000, scoped, tag = 'internal scratch']
  %s0 = inlined_call_operand.vmem [shape: s32[16,1], index: 0, kind: input, shape index: {}]
  %s1 = inlined_call_operand.vmem [shape: f32[128,32], index: 1, kind: input, shape index: {}]
  %s2 = inlined_call_operand.vmem [shape: f32[16,32], index: 2, kind: input, shape index: {}]
  %s3 = inlined_call_operand.vmem [shape: f32[16,16], index: 3, kind: input, shape index: {}]
  %s4 = inlined_call_operand.vmem [shape: f32[2,16], index: 4, kind: input, shape index: {}]
  %s5 = inlined_call_operand.vmem [shape: f32[2,1,32], index: 5, kind: input, shape index: {}]
  %s6 = inlined_call_operand.vmem [shape: f32[2,1,32], index: 6, kind: input, shape index: {}]
  %s7 = inlined_call_operand.vmem [shape: f32[2,2,32,16], index: 7, kind: input, shape index: {}]
  %s8 = inlined_call_operand.vmem [shape: f32[2,2,32,16], index: 8, kind: input, shape index: {}]
  %s9 = inlined_call_operand.vmem [shape: f32[2,2,32,16], index: 9, kind: input, shape index: {}]
  %s10 = inlined_call_operand.vmem [shape: f32[2,2,1,16], index: 10, kind: input, shape index: {}]
  %s11 = inlined_call_operand.vmem [shape: f32[2,2,1,16], index: 11, kind: input, shape index: {}]
  %s12 = inlined_call_operand.vmem [shape: f32[2,2,1,16], index: 12, kind: input, shape index: {}]
  %s13 = inlined_call_operand.vmem [shape: f32[2,2,16,32], index: 13, kind: input, shape index: {}]
  %s14 = inlined_call_operand.vmem [shape: f32[2,1,32], index: 14, kind: input, shape index: {}]
  %s15 = inlined_call_operand.vmem [shape: f32[2,1,32], index: 15, kind: input, shape index: {}]
  %s16 = inlined_call_operand.vmem [shape: f32[2,1,32], index: 16, kind: input, shape index: {}]
  %s17 = inlined_call_operand.vmem [shape: f32[2,32,128], index: 17, kind: input, shape index: {}]
  %s18 = inlined_call_operand.vmem [shape: f32[2,1,128], index: 18, kind: input, shape index: {}]
  %s19 = inlined_call_operand.vmem [shape: f32[2,128,32], index: 19, kind: input, shape index: {}]
  %s20 = inlined_call_operand.vmem [shape: f32[2,1,32], index: 20, kind: input, shape index: {}]
  %s21 = inlined_call_operand.vmem [shape: f32[1,32], index: 21, kind: input, shape index: {}]
  %s22 = inlined_call_operand.vmem [shape: f32[1,32], index: 22, kind: input, shape index: {}]
  %s23 = inlined_call_operand.hbm [shape: f32[2,128], index: 23, kind: output, shape index: {}]
  %s24 = sld [smem:[#allocation0]]
  $region102: #{embedding_model_forward.1} parent=0
    _
  %s26 = ssub.s32 1, %s24
  %s27 = scalar_select 0, %s26, %s24
  $region1: #{embedding_model_forward.1} parent=0
    #allocation2 [shape = 'u8[1024]{0}', space=vmem, size = 0x400, scoped, tag = 'output window, operand 0, single buffered']
    #allocation3 [shape = 's32[1]{0}', space=sflag, size = 0x4, scoped, tag = 'scoped memory for embedding_model_forward.1']
    %28 = vsyncpa [#allocation3], 0
    // Predicated region
    $region2: #{embedding_model_forward.1} parent=1 // pred_check
      _
    $region3: #{embedding_model_forward.1} parent=1 // pred_check_branch
      %30 = sbr.rel (0) target = $region5
    $region4: #{embedding_model_forward.1} parent=1 // pred_region
      _
    $region5: #{embedding_model_forward.1} parent=1 // pred_fallthru
      _
    // Predicated region
    $region6: #{embedding_model_forward.1} parent=1 // pred_check
      _
    $region7: #{embedding_model_forward.1} parent=1 // pred_check_branch
      %32 = sbr.rel (0) target = $region9
    $region8: #{embedding_model_forward.1} parent=1 // pred_region
      _
    $region9: #{embedding_model_forward.1} parent=1 // pred_fallthru
      _
    // Predicated region
    $region10: #{embedding_model_forward.1} parent=1 // pred_check
      _
    $region11: #{embedding_model_forward.1} parent=1 // pred_check_branch
      %34 = sbr.rel (0) target = $region13
    $region12: #{embedding_model_forward.1} parent=1 // pred_region
      _
    $region13: #{embedding_model_forward.1} parent=1 // pred_fallthru
      _
    // Predicated region
    $region14: #{embedding_model_forward.1} parent=1 // pred_check
      _
    $region15: #{embedding_model_forward.1} parent=1 // pred_check_branch
      %36 = sbr.rel (0) target = $region17
    $region16: #{embedding_model_forward.1} parent=1 // pred_region
      _
    $region17: #{embedding_model_forward.1} parent=1 // pred_fallthru
      _
    // Predicated region
    $region18: #{embedding_model_forward.1} parent=1 // pred_check
      _
    $region19: #{embedding_model_forward.1} parent=1 // pred_check_branch
      %38 = sbr.rel (0) target = $region21
    $region20: #{embedding_model_forward.1} parent=1 // pred_region
      _
    $region21: #{embedding_model_forward.1} parent=1 // pred_fallthru
      _
    // Predicated region
    $region22: #{embedding_model_forward.1} parent=1 // pred_check
      _
    $region23: #{embedding_model_forward.1} parent=1 // pred_check_branch
      %40 = sbr.rel (0) target = $region25
    $region24: #{embedding_model_forward.1} parent=1 // pred_region
      _
    $region25: #{embedding_model_forward.1} parent=1 // pred_fallthru
      _
    // Predicated region
    $region26: #{embedding_model_forward.1} parent=1 // pred_check
      _
    $region27: #{embedding_model_forward.1} parent=1 // pred_check_branch
      %42 = sbr.rel (0) target = $region29
    $region28: #{embedding_model_forward.1} parent=1 // pred_region
      _
    $region29: #{embedding_model_forward.1} parent=1 // pred_fallthru
      _
    // Predicated region
    $region30: #{embedding_model_forward.1} parent=1 // pred_check
      _
    $region31: #{embedding_model_forward.1} parent=1 // pred_check_branch
      %44 = sbr.rel (0) target = $region33
    $region32: #{embedding_model_forward.1} parent=1 // pred_region
      _
    $region33: #{embedding_model_forward.1} parent=1 // pred_fallthru
      _
    // Predicated region
    $region34: #{embedding_model_forward.1} parent=1 // pred_check
      _
    $region35: #{embedding_model_forward.1} parent=1 // pred_check_branch
      %46 = sbr.rel (0) target = $region37
    $region36: #{embedding_model_forward.1} parent=1 // pred_region
      _
    $region37: #{embedding_model_forward.1} parent=1 // pred_fallthru
      _
    // Predicated region
    $region38: #{embedding_model_forward.1} parent=1 // pred_check
      _
    $region39: #{embedding_model_forward.1} parent=1 // pred_check_branch
      %48 = sbr.rel (0) target = $region41
    $region40: #{embedding_model_forward.1} parent=1 // pred_region
      _
    $region41: #{embedding_model_forward.1} parent=1 // pred_fallthru
      _
    // Predicated region
    $region42: #{embedding_model_forward.1} parent=1 // pred_check
      _
    $region43: #{embedding_model_forward.1} parent=1 // pred_check_branch
      %50 = sbr.rel (0) target = $region45
    $region44: #{embedding_model_forward.1} parent=1 // pred_region
      _
    $region45: #{embedding_model_forward.1} parent=1 // pred_fallthru
      _
    // Predicated region
    $region46: #{embedding_model_forward.1} parent=1 // pred_check
      _
    $region47: #{embedding_model_forward.1} parent=1 // pred_check_branch
      %52 = sbr.rel (0) target = $region49
    $region48: #{embedding_model_forward.1} parent=1 // pred_region
      _
    $region49: #{embedding_model_forward.1} parent=1 // pred_fallthru
      _
    // Predicated region
    $region50: #{embedding_model_forward.1} parent=1 // pred_check
      _
    $region51: #{embedding_model_forward.1} parent=1 // pred_check_branch
      %54 = sbr.rel (0) target = $region53
    $region52: #{embedding_model_forward.1} parent=1 // pred_region
      _
    $region53: #{embedding_model_forward.1} parent=1 // pred_fallthru
      _
    // Predicated region
    $region54: #{embedding_model_forward.1} parent=1 // pred_check
      _
    $region55: #{embedding_model_forward.1} parent=1 // pred_check_branch
      %56 = sbr.rel (0) target = $region57
    $region56: #{embedding_model_forward.1} parent=1 // pred_region
      _
    $region57: #{embedding_model_forward.1} parent=1 // pred_fallthru
      _
    // Predicated region
    $region58: #{embedding_model_forward.1} parent=1 // pred_check
      _
    $region59: #{embedding_model_forward.1} parent=1 // pred_check_branch
      %58 = sbr.rel (0) target = $region61
    $region60: #{embedding_model_forward.1} parent=1 // pred_region
      _
    $region61: #{embedding_model_forward.1} parent=1 // pred_fallthru
      _
    // Predicated region
    $region62: #{embedding_model_forward.1} parent=1 // pred_check
      _
    $region63: #{embedding_model_forward.1} parent=1 // pred_check_branch
      %60 = sbr.rel (0) target = $region65
    $region64: #{embedding_model_forward.1} parent=1 // pred_region
      _
    $region65: #{embedding_model_forward.1} parent=1 // pred_fallthru
      _
    // Predicated region
    $region66: #{embedding_model_forward.1} parent=1 // pred_check
      _
    $region67: #{embedding_model_forward.1} parent=1 // pred_check_branch
      %62 = sbr.rel (0) target = $region69
    $region68: #{embedding_model_forward.1} parent=1 // pred_region
      _
    $region69: #{embedding_model_forward.1} parent=1 // pred_fallthru
      _
    // Predicated region
    $region70: #{embedding_model_forward.1} parent=1 // pred_check
      _
    $region71: #{embedding_model_forward.1} parent=1 // pred_check_branch
      %64 = sbr.rel (0) target = $region73
    $region72: #{embedding_model_forward.1} parent=1 // pred_region
      _
    $region73: #{embedding_model_forward.1} parent=1 // pred_fallthru
      _
    // Predicated region
    $region74: #{embedding_model_forward.1} parent=1 // pred_check
      _
    $region75: #{embedding_model_forward.1} parent=1 // pred_check_branch
      %66 = sbr.rel (0) target = $region77
    $region76: #{embedding_model_forward.1} parent=1 // pred_region
      _
    $region77: #{embedding_model_forward.1} parent=1 // pred_fallthru
      _
    // Predicated region
    $region78: #{embedding_model_forward.1} parent=1 // pred_check
      _
    $region79: #{embedding_model_forward.1} parent=1 // pred_check_branch
      %68 = sbr.rel (0) target = $region81
    $region80: #{embedding_model_forward.1} parent=1 // pred_region
      _
    $region81: #{embedding_model_forward.1} parent=1 // pred_fallthru
      _
    // Predicated region
    $region82: #{embedding_model_forward.1} parent=1 // pred_check
      _
    $region83: #{embedding_model_forward.1} parent=1 // pred_check_branch
      %70 = sbr.rel (0) target = $region85
    $region84: #{embedding_model_forward.1} parent=1 // pred_region
      _
    $region85: #{embedding_model_forward.1} parent=1 // pred_fallthru
      _
    // Predicated region
    $region86: #{embedding_model_forward.1} parent=1 // pred_check
      _
    $region87: #{embedding_model_forward.1} parent=1 // pred_check_branch
      %72 = sbr.rel (0) target = $region89
    $region88: #{embedding_model_forward.1} parent=1 // pred_region
      _
    $region89: #{embedding_model_forward.1} parent=1 // pred_fallthru
      _
    // Predicated region
    $region90: #{embedding_model_forward.1} parent=1 // pred_check
      _
    $region91: #{embedding_model_forward.1} parent=1 // pred_check_branch
      %74 = sbr.rel (0) target = $region93
    $region92: #{embedding_model_forward.1} parent=1 // pred_region
      _
    $region93: #{embedding_model_forward.1} parent=1 // pred_fallthru
      _
    %v75 = vld [vmem:[%s0] sm:$0xff]
    %v76 = vld [vmem:[%s0 + $0x8] sm:$0xff]
    %v77 = vlaneseq
    %v78 = vand.u32 %v77, 127
    %79 = vset.pattern.permute.xlu0 0
    %80 = vperm.xlu0 %79, %v75
    %v81 = vpop.permute.xlu0 %80
    %82 = vset.pattern.permute.xlu0 0
    %83 = vperm.xlu0 %82, %v76
    %v84 = vpop.permute.xlu0 %83
    %vm85 = vcmp.eq.s32.totalorder %v81, %v78
    %vm86 = vcmp.eq.s32.totalorder %v84, %v78
    %v87 = vsel %vm85, 1, 0
    %v88 = vsel %vm86, 1, 0
    %v89 = vcvt.s32.f32 %v87
    %v90 = vcvt.s32.f32 %v88
    %v91 = vld [vmem:[%s1] sm:$0xff]
    %v92 = vld [vmem:[%s1 + $0x8] sm:$0xff]
    %v93 = vld [vmem:[%s1 + $0x10] sm:$0xff]
    %v94 = vld [vmem:[%s1 + $0x18] sm:$0xff]
    %v95 = vld [vmem:[%s1 + $0x20] sm:$0xff]
    %v96 = vld [vmem:[%s1 + $0x28] sm:$0xff]
    %v97 = vld [vmem:[%s1 + $0x30] sm:$0xff]
    %v98 = vld [vmem:[%s1 + $0x38] sm:$0xff]
    %v99 = vld [vmem:[%s1 + $0x40] sm:$0xff]
    %v100 = vld [vmem:[%s1 + $0x48] sm:$0xff]
    %v101 = vld [vmem:[%s1 + $0x50] sm:$0xff]
    %v102 = vld [vmem:[%s1 + $0x58] sm:$0xff]
    %v103 = vld [vmem:[%s1 + $0x60] sm:$0xff]
    %v104 = vld [vmem:[%s1 + $0x68] sm:$0xff]
    %v105 = vld [vmem:[%s1 + $0x70] sm:$0xff]
    %v106 = vld [vmem:[%s1 + $0x78] sm:$0xff]
    %v107 = vld [vmem:[%s2] sm:$0xff]
    %v108 = vld [vmem:[%s2 + $0x8] sm:$0xff]
    %109 = vmatprep.subr.mxu0 0.0
    %110 = vmatpush1.msra.mxu0 %v91
    %111 = vmatprep.subr.mxu0 0.0
    %112 = vmatpush1.msra.mxu0 %v92
    %113 = vmatprep.subr.mxu0 0.0
    %114 = vmatpush1.msra.mxu0 %v93
    %115 = vmatprep.subr.mxu0 0.0
    %116 = vmatpush1.msra.mxu0 %v94
    %117 = vmatprep.subr.mxu0 0.0
    %118 = vmatpush1.msra.mxu0 %v95
    %119 = vmatprep.subr.mxu0 0.0
    %120 = vmatpush1.msra.mxu0 %v96
    %121 = vmatprep.subr.mxu0 0.0
    %122 = vmatpush1.msra.mxu0 %v97
    %123 = vmatprep.subr.mxu0 0.0
    %124 = vmatpush1.msra.mxu0 %v98
    %125 = vmatprep.subr.mxu0 0.0
    %126 = vmatpush1.msra.mxu0 %v99
    %127 = vmatprep.subr.mxu0 0.0
    %128 = vmatpush1.msra.mxu0 %v100
    %129 = vmatprep.subr.mxu0 0.0
    %130 = vmatpush1.msra.mxu0 %v101
    %131 = vmatprep.subr.mxu0 0.0
    %132 = vmatpush1.msra.mxu0 %v102
    %133 = vmatprep.subr.mxu0 0.0
    %134 = vmatpush1.msra.mxu0 %v103
    %135 = vmatprep.subr.mxu0 0.0
    %136 = vmatpush1.msra.mxu0 %v104
    %137 = vmatprep.subr.mxu0 0.0
    %138 = vmatpush1.msra.mxu0 %v105
    %139 = vmatprep.subr.mxu0 0.0
    %140 = vmatpush1.msra.mxu0 %v106
    %141 = vmatprep.subr.mxu0 0.0
    %142 = vmatpush1.msra.mxu0 0.0
    %143 = vmatprep.subr.mxu0 0.0
    %144 = vmatpush1.msra.mxu0 0.0
    %145 = vmatprep.subr.mxu0 0.0
    %146 = vmatpush1.msra.mxu0 0.0
    %147 = vmatprep.subr.mxu0 0.0
    %148 = vmatpush1.msra.mxu0 0.0
    %149 = vmatprep.subr.mxu0 0.0
    %150 = vmatpush1.msra.mxu0 0.0
    %151 = vmatprep.subr.mxu0 0.0
    %152 = vmatpush1.msra.mxu0 0.0
    %153 = vmatprep.subr.mxu0 0.0
    %154 = vmatpush1.msra.mxu0 0.0
    %155 = vmatprep.subr.mxu0 0.0
    %156 = vmatpush1.msra.mxu0 0.0
    %157 = vmatprep.subr.mxu0 0.0
    %158 = vmatpush1.msra.mxu0 0.0
    %159 = vmatprep.subr.mxu0 0.0
    %160 = vmatpush1.msra.mxu0 0.0
    %161 = vmatprep.subr.mxu0 0.0
    %162 = vmatpush1.msra.mxu0 0.0
    %163 = vmatprep.subr.mxu0 0.0
    %164 = vmatpush1.msra.mxu0 0.0
    %165 = vmatprep.subr.mxu0 0.0
    %166 = vmatpush1.msra.mxu0 0.0
    %167 = vmatprep.subr.mxu0 0.0
    %168 = vmatpush1.msra.mxu0 0.0
    %169 = vmatprep.subr.mxu0 0.0
    %170 = vmatpush1.msra.mxu0 0.0
    %171 = vmatprep.subr.mxu0 0.0
    %172 = vmatpush1.msra.mxu0 0.0
    %173 = vmatprep.mubr.f32.mxu0 0.0
    %174 = vmatmul.mubr.f32.gmra.mrb[0].mxu0 %v89
    %v175 = vpop.f32.mrb[0].mxu0
    %v176 = vadd.f32 %v107, %v175
    %v177 = vpop.f32.mrb[0].mxu0
    %178 = vmatprep.mubr.f32.mxu0 0.0
    %179 = vmatmul.mubr.f32.gmra.mrb[0].mxu0 %v90
    %v180 = vpop.f32.mrb[0].mxu0
    %v181 = vadd.f32 %v108, %v180
    %v182 = vpop.f32.mrb[0].mxu0
    %183 = vdwg.mxu0
    %v184 = vld [vmem:[%s3] sm:$0xff]
    %v185 = vld [vmem:[%s3 + $0x8] sm:$0xff]
    %v186 = vld [vmem:[%s5] sm:$0x1]
    %v187 = vld [vmem:[%s6] sm:$0x1]
    %vm188 = vcmask 261120
    %v189 = vsel %vm188, %v176, 0.0
    %190 = vadd.xlane.f32.xlu0 %v189
    %v191 = vpop.xlane.xlu0 %190
    %v192 = vsel %vm188, %v181, 0.0
    %193 = vadd.xlane.f32.xlu0 %v192
    %v194 = vpop.xlane.xlu0 %193
    %v195 = vrcp.pop 32.0
    %v196 = vmul.f32 %v191, %v195
    %v197 = vmul.f32 %v194, %v195
    %v198 = vsub.f32 %v176, %v196
    %v199 = vsub.f32 %v181, %v197
    %v200 = vmul.f32 %v198, %v198
    %v201 = vmul.f32 %v199, %v199
    %v202 = vsel %vm188, %v200, 0.0
    %203 = vadd.xlane.f32.xlu0 %v202
    %v204 = vpop.xlane.xlu0 %203
    %v205 = vsel %vm188, %v201, 0.0
    %206 = vadd.xlane.f32.xlu0 %v205
    %v207 = vpop.xlane.xlu0 %206
    %v208 = vmul.f32 %v204, %v195
    %v209 = vmul.f32 %v207, %v195
    %v210 = vadd.f32 %v208, 1e-05
    %v211 = vadd.f32 %v209, 1e-05
    %v212 = vrsqrt.pop %v210
    %v213 = vrsqrt.pop %v211
    %v214 = vmul.f32 %v198, %v212
    %v215 = vmul.f32 %v199, %v213
    %v217 = vlaneseq
    %v218 = vshrl.u32 %v217, 7
    %v219 = vsub.s32 0, %v218
    %v220 = vrot.slane %v186, %v219
    %v222 = vmul.f32 %v214, %v220
    %v223 = vmul.f32 %v215, %v220
    %v225 = vlaneseq
    %v226 = vshrl.u32 %v225, 7
    %v227 = vsub.s32 0, %v226
    %v228 = vrot.slane %v187, %v227
    %v230 = vadd.f32 %v222, %v228
    %v231 = vadd.f32 %v223, %v228
    %v232 = vld [vmem:[%s7] sm:$0xff]
    %v233 = vld [vmem:[%s7 + $0x8] sm:$0xff]
    %v234 = vld [vmem:[%s7 + $0x10] sm:$0xff]
    %v235 = vld [vmem:[%s7 + $0x18] sm:$0xff]
    %v236 = vld [vmem:[%s10] sm:$0x1]
    %v238 = vlaneseq
    %v239 = vshrl.u32 %v238, 7
    %v240 = vsub.s32 0, %v239
    %v241 = vrot.slane %v236, %v240
    %v244 = vsel %vm188, %v230, 0
    %v247 = vsel %vm188, %v231, 0
    %249 = vmatprep.subr.mxu0 0.0
    %250 = vmatpush1.msra.mxu0 %v232
    %251 = vmatprep.subr.mxu0 0.0
    %252 = vmatpush1.msra.mxu0 %v233
    %253 = vmatprep.subr.mxu0 0.0
    %254 = vmatpush1.msra.mxu0 %v234
    %255 = vmatprep.subr.mxu0 0.0
    %256 = vmatpush1.msra.mxu0 %v235
    %257 = vmatprep.subr.mxu0 0.0
    %258 = vmatpush1.msra.mxu0 0.0
    %259 = vmatprep.subr.mxu0 0.0
    %260 = vmatpush1.msra.mxu0 0.0
    %261 = vmatprep.subr.mxu0 0.0
    %262 = vmatpush1.msra.mxu0 0.0
    %263 = vmatprep.subr.mxu0 0.0
    %264 = vmatpush1.msra.mxu0 0.0
    %265 = vmatprep.subr.mxu0 0.0
    %266 = vmatpush1.msra.mxu0 0.0
    %267 = vmatprep.subr.mxu0 0.0
    %268 = vmatpush1.msra.mxu0 0.0
    %269 = vmatprep.subr.mxu0 0.0
    %270 = vmatpush1.msra.mxu0 0.0
    %271 = vmatprep.subr.mxu0 0.0
    %272 = vmatpush1.msra.mxu0 0.0
    %273 = vmatprep.subr.mxu0 0.0
    %274 = vmatpush1.msra.mxu0 0.0
    %275 = vmatprep.subr.mxu0 0.0
    %276 = vmatpush1.msra.mxu0 0.0
    %277 = vmatprep.subr.mxu0 0.0
    %278 = vmatpush1.msra.mxu0 0.0
    %279 = vmatprep.subr.mxu0 0.0
    %280 = vmatpush1.msra.mxu0 0.0
    %281 = vmatprep.subr.mxu0 0.0
    %282 = vmatpush1.msra.mxu0 0.0
    %283 = vmatprep.subr.mxu0 0.0
    %284 = vmatpush1.msra.mxu0 0.0
    %285 = vmatprep.subr.mxu0 0.0
    %286 = vmatpush1.msra.mxu0 0.0
    %287 = vmatprep.subr.mxu0 0.0
    %288 = vmatpush1.msra.mxu0 0.0
    %289 = vmatprep.subr.mxu0 0.0
    %290 = vmatpush1.msra.mxu0 0.0
    %291 = vmatprep.subr.mxu0 0.0
    %292 = vmatpush1.msra.mxu0 0.0
    %293 = vmatprep.subr.mxu0 0.0
    %294 = vmatpush1.msra.mxu0 0.0
    %295 = vmatprep.subr.mxu0 0.0
    %296 = vmatpush1.msra.mxu0 0.0
    %297 = vmatprep.subr.mxu0 0.0
    %298 = vmatpush1.msra.mxu0 0.0
    %299 = vmatprep.subr.mxu0 0.0
    %300 = vmatpush1.msra.mxu0 0.0
    %301 = vmatprep.subr.mxu0 0.0
    %302 = vmatpush1.msra.mxu0 0.0
    %303 = vmatprep.subr.mxu0 0.0
    %304 = vmatpush1.msra.mxu0 0.0
    %305 = vmatprep.subr.mxu0 0.0
    %306 = vmatpush1.msra.mxu0 0.0
    %307 = vmatprep.subr.mxu0 0.0
    %308 = vmatpush1.msra.mxu0 0.0
    %309 = vmatprep.subr.mxu0 0.0
    %310 = vmatpush1.msra.mxu0 0.0
    %311 = vmatprep.subr.mxu0 0.0
    %312 = vmatpush1.msra.mxu0 0.0
    %313 = vmatprep.mubr.f32.mxu0 0.0
    %314 = vmatmul.mubr.f32.gmra.mrb[0].mxu0 %v244
    %v315 = vpop.f32.mrb[0].mxu0
    %v316 = vadd.f32 %v241, %v315
    %v317 = vpop.f32.mrb[0].mxu0
    %318 = vmatprep.mubr.f32.mxu0 0.0
    %319 = vmatmul.mubr.f32.gmra.mrb[0].mxu0 %v247
    %v320 = vpop.f32.mrb[0].mxu0
    %v321 = vadd.f32 %v241, %v320
    %v322 = vpop.f32.mrb[0].mxu0
    %323 = vdwg.mxu0
    %v324 = vmul.f32 %v316, 0.25
    %v325 = vmul.f32 %v321, 0.25
    %v326 = vld [vmem:[%s8] sm:$0xff]
    %v327 = vld [vmem:[%s8 + $0x8] sm:$0xff]
    %v328 = vld [vmem:[%s8 + $0x10] sm:$0xff]
    %v329 = vld [vmem:[%s8 + $0x18] sm:$0xff]
    %v330 = vld [vmem:[%s11] sm:$0x1]
    %v332 = vlaneseq
    %v333 = vshrl.u32 %v332, 7
    %v334 = vsub.s32 0, %v333
    %v335 = vrot.slane %v330, %v334
    %337 = vmatprep.subr.mxu0 0.0
    %338 = vmatpush1.msra.mxu0 %v326
    %339 = vmatprep.subr.mxu0 0.0
    %340 = vmatpush1.msra.mxu0 %v327
    %341 = vmatprep.subr.mxu0 0.0
    %342 = vmatpush1.msra.mxu0 %v328
    %343 = vmatprep.subr.mxu0 0.0
    %344 = vmatpush1.msra.mxu0 %v329
    %345 = vmatprep.subr.mxu0 0.0
    %346 = vmatpush1.msra.mxu0 0.0
    %347 = vmatprep.subr.mxu0 0.0
    %348 = vmatpush1.msra.mxu0 0.0
    %349 = vmatprep.subr.mxu0 0.0
    %350 = vmatpush1.msra.mxu0 0.0
    %351 = vmatprep.subr.mxu0 0.0
    %352 = vmatpush1.msra.mxu0 0.0
    %353 = vmatprep.subr.mxu0 0.0
    %354 = vmatpush1.msra.mxu0 0.0
    %355 = vmatprep.subr.mxu0 0.0
    %356 = vmatpush1.msra.mxu0 0.0
    %357 = vmatprep.subr.mxu0 0.0
    %358 = vmatpush1.msra.mxu0 0.0
    %359 = vmatprep.subr.mxu0 0.0
    %360 = vmatpush1.msra.mxu0 0.0
    %361 = vmatprep.subr.mxu0 0.0
    %362 = vmatpush1.msra.mxu0 0.0
    %363 = vmatprep.subr.mxu0 0.0
    %364 = vmatpush1.msra.mxu0 0.0
    %365 = vmatprep.subr.mxu0 0.0
    %366 = vmatpush1.msra.mxu0 0.0
    %367 = vmatprep.subr.mxu0 0.0
    %368 = vmatpush1.msra.mxu0 0.0
    %369 = vmatprep.subr.mxu0 0.0
    %370 = vmatpush1.msra.mxu0 0.0
    %371 = vmatprep.subr.mxu0 0.0
    %372 = vmatpush1.msra.mxu0 0.0
    %373 = vmatprep.subr.mxu0 0.0
    %374 = vmatpush1.msra.mxu0 0.0
    %375 = vmatprep.subr.mxu0 0.0
    %376 = vmatpush1.msra.mxu0 0.0
    %377 = vmatprep.subr.mxu0 0.0
    %378 = vmatpush1.msra.mxu0 0.0
    %379 = vmatprep.subr.mxu0 0.0
    %380 = vmatpush1.msra.mxu0 0.0
    %381 = vmatprep.subr.mxu0 0.0
    %382 = vmatpush1.msra.mxu0 0.0
    %383 = vmatprep.subr.mxu0 0.0
    %384 = vmatpush1.msra.mxu0 0.0
    %385 = vmatprep.subr.mxu0 0.0
    %386 = vmatpush1.msra.mxu0 0.0
    %387 = vmatprep.subr.mxu0 0.0
    %388 = vmatpush1.msra.mxu0 0.0
    %389 = vmatprep.subr.mxu0 0.0
    %390 = vmatpush1.msra.mxu0 0.0
    %391 = vmatprep.subr.mxu0 0.0
    %392 = vmatpush1.msra.mxu0 0.0
    %393 = vmatprep.subr.mxu0 0.0
    %394 = vmatpush1.msra.mxu0 0.0
    %395 = vmatprep.subr.mxu0 0.0
    %396 = vmatpush1.msra.mxu0 0.0
    %397 = vmatprep.subr.mxu0 0.0
    %398 = vmatpush1.msra.mxu0 0.0
    %399 = vmatprep.subr.mxu0 0.0
    %400 = vmatpush1.msra.mxu0 0.0
    %401 = vmatprep.mubr.f32.mxu0 0.0
    %402 = vmatmul.mubr.f32.gmra.mrb[0].mxu0 %v244
    %v403 = vpop.f32.mrb[0].mxu0
    %v404 = vadd.f32 %v335, %v403
    %v405 = vpop.f32.mrb[0].mxu0
    %406 = vmatprep.mubr.f32.mxu0 0.0
    %407 = vmatmul.mubr.f32.gmra.mrb[0].mxu0 %v247
    %v408 = vpop.f32.mrb[0].mxu0
    %v409 = vadd.f32 %v335, %v408
    %v410 = vpop.f32.mrb[0].mxu0
    %411 = vdwg.mxu0
    %v412 = vld [vmem:[%s9] sm:$0xff]
    %v413 = vld [vmem:[%s9 + $0x8] sm:$0xff]
    %v414 = vld [vmem:[%s9 + $0x10] sm:$0xff]
    %v415 = vld [vmem:[%s9 + $0x18] sm:$0xff]
    %v416 = vld [vmem:[%s12] sm:$0x1]
    %v418 = vlaneseq
    %v419 = vshrl.u32 %v418, 7
    %v420 = vsub.s32 0, %v419
    %v421 = vrot.slane %v416, %v420
    %423 = vmatprep.subr.mxu0 0.0
    %424 = vmatpush1.msra.mxu0 %v412
    %425 = vmatprep.subr.mxu0 0.0
    %426 = vmatpush1.msra.mxu0 %v413
    %427 = vmatprep.subr.mxu0 0.0
    %428 = vmatpush1.msra.mxu0 %v414
    %429 = vmatprep.subr.mxu0 0.0
    %430 = vmatpush1.msra.mxu0 %v415
    %431 = vmatprep.subr.mxu0 0.0
    %432 = vmatpush1.msra.mxu0 0.0
    %433 = vmatprep.subr.mxu0 0.0
    %434 = vmatpush1.msra.mxu0 0.0
    %435 = vmatprep.subr.mxu0 0.0
    %436 = vmatpush1.msra.mxu0 0.0
    %437 = vmatprep.subr.mxu0 0.0
    %438 = vmatpush1.msra.mxu0 0.0
    %439 = vmatprep.subr.mxu0 0.0
    %440 = vmatpush1.msra.mxu0 0.0
    %441 = vmatprep.subr.mxu0 0.0
    %442 = vmatpush1.msra.mxu0 0.0
    %443 = vmatprep.subr.mxu0 0.0
    %444 = vmatpush1.msra.mxu0 0.0
    %445 = vmatprep.subr.mxu0 0.0
    %446 = vmatpush1.msra.mxu0 0.0
    %447 = vmatprep.subr.mxu0 0.0
    %448 = vmatpush1.msra.mxu0 0.0
    %449 = vmatprep.subr.mxu0 0.0
    %450 = vmatpush1.msra.mxu0 0.0
    %451 = vmatprep.subr.mxu0 0.0
    %452 = vmatpush1.msra.mxu0 0.0
    %453 = vmatprep.subr.mxu0 0.0
    %454 = vmatpush1.msra.mxu0 0.0
    %455 = vmatprep.subr.mxu0 0.0
    %456 = vmatpush1.msra.mxu0 0.0
    %457 = vmatprep.subr.mxu0 0.0
    %458 = vmatpush1.msra.mxu0 0.0
    %459 = vmatprep.subr.mxu0 0.0
    %460 = vmatpush1.msra.mxu0 0.0
    %461 = vmatprep.subr.mxu0 0.0
    %462 = vmatpush1.msra.mxu0 0.0
    %463 = vmatprep.subr.mxu0 0.0
    %464 = vmatpush1.msra.mxu0 0.0
    %465 = vmatprep.subr.mxu0 0.0
    %466 = vmatpush1.msra.mxu0 0.0
    %467 = vmatprep.subr.mxu0 0.0
    %468 = vmatpush1.msra.mxu0 0.0
    %469 = vmatprep.subr.mxu0 0.0
    %470 = vmatpush1.msra.mxu0 0.0
    %471 = vmatprep.subr.mxu0 0.0
    %472 = vmatpush1.msra.mxu0 0.0
    %473 = vmatprep.subr.mxu0 0.0
    %474 = vmatpush1.msra.mxu0 0.0
    %475 = vmatprep.subr.mxu0 0.0
    %476 = vmatpush1.msra.mxu0 0.0
    %477 = vmatprep.subr.mxu0 0.0
    %478 = vmatpush1.msra.mxu0 0.0
    %479 = vmatprep.subr.mxu0 0.0
    %480 = vmatpush1.msra.mxu0 0.0
    %481 = vmatprep.subr.mxu0 0.0
    %482 = vmatpush1.msra.mxu0 0.0
    %483 = vmatprep.subr.mxu0 0.0
    %484 = vmatpush1.msra.mxu0 0.0
    %485 = vmatprep.subr.mxu0 0.0
    %486 = vmatpush1.msra.mxu0 0.0
    %487 = vmatprep.mubr.f32.mxu0 0.0
    %488 = vmatmul.mubr.f32.gmra.mrb[0].mxu0 %v244
    %v489 = vpop.f32.mrb[0].mxu0
    %v490 = vadd.f32 %v421, %v489
    %v491 = vpop.f32.mrb[0].mxu0
    %492 = vmatprep.mubr.f32.mxu0 0.0
    %493 = vmatmul.mubr.f32.gmra.mrb[0].mxu0 %v247
    %v494 = vpop.f32.mrb[0].mxu0
    %v495 = vadd.f32 %v421, %v494
    %v496 = vpop.f32.mrb[0].mxu0
    %497 = vdwg.mxu0
    %vm498 = vcmask 130048
    %v500 = vsel %vm498, %v324, 0
    %v503 = vsel %vm498, %v325, 0
    %v506 = vsel %vm498, %v404, 0
    %v509 = vsel %vm498, %v409, 0
    %511 = vmatprep.subr.mxu0 0.0
    %512 = vmatpush1.xpose.msra.mxu0 %v506
    %513 = vmatprep.subr.mxu0 0.0
    %514 = vmatpush1.xpose.msra.mxu0 %v509
    %515 = vmatprep.subr.mxu0 0.0
    %516 = vmatpush1.xpose.msra.mxu0 0.0
    %517 = vmatprep.subr.mxu0 0.0
    %518 = vmatpush1.xpose.msra.mxu0 0.0
    %519 = vmatprep.subr.mxu0 0.0
    %520 = vmatpush1.xpose.msra.mxu0 0.0
    %521 = vmatprep.subr.mxu0 0.0
    %522 = vmatpush1.xpose.msra.mxu0 0.0
    %523 = vmatprep.subr.mxu0 0.0
    %524 = vmatpush1.xpose.msra.mxu0 0.0
    %525 = vmatprep.subr.mxu0 0.0
    %526 = vmatpush1.xpose.msra.mxu0 0.0
    %527 = vmatprep.subr.mxu0 0.0
    %528 = vmatpush1.xpose.msra.mxu0 0.0
    %529 = vmatprep.subr.mxu0 0.0
    %530 = vmatpush1.xpose.msra.mxu0 0.0
    %531 = vmatprep.subr.mxu0 0.0
    %532 = vmatpush1.xpose.msra.mxu0 0.0
    %533 = vmatprep.subr.mxu0 0.0
    %534 = vmatpush1.xpose.msra.mxu0 0.0
    %535 = vmatprep.subr.mxu0 0.0
    %536 = vmatpush1.xpose.msra.mxu0 0.0
    %537 = vmatprep.subr.mxu0 0.0
    %538 = vmatpush1.xpose.msra.mxu0 0.0
    %539 = vmatprep.subr.mxu0 0.0
    %540 = vmatpush1.xpose.msra.mxu0 0.0
    %541 = vmatprep.subr.mxu0 0.0
    %542 = vmatpush1.xpose.msra.mxu0 0.0
    %543 = vmatprep.subr.mxu0 0.0
    %544 = vmatpush1.xpose.msra.mxu0 0.0
    %545 = vmatprep.subr.mxu0 0.0
    %546 = vmatpush1.xpose.msra.mxu0 0.0
    %547 = vmatprep.subr.mxu0 0.0
    %548 = vmatpush1.xpose.msra.mxu0 0.0
    %549 = vmatprep.subr.mxu0 0.0
    %550 = vmatpush1.xpose.msra.mxu0 0.0
    %551 = vmatprep.subr.mxu0 0.0
    %552 = vmatpush1.xpose.msra.mxu0 0.0
    %553 = vmatprep.subr.mxu0 0.0
    %554 = vmatpush1.xpose.msra.mxu0 0.0
    %555 = vmatprep.subr.mxu0 0.0
    %556 = vmatpush1.xpose.msra.mxu0 0.0
    %557 = vmatprep.subr.mxu0 0.0
    %558 = vmatpush1.xpose.msra.mxu0 0.0
    %559 = vmatprep.subr.mxu0 0.0
    %560 = vmatpush1.xpose.msra.mxu0 0.0
    %561 = vmatprep.subr.mxu0 0.0
    %562 = vmatpush1.xpose.msra.mxu0 0.0
    %563 = vmatprep.subr.mxu0 0.0
    %564 = vmatpush1.xpose.msra.mxu0 0.0
    %565 = vmatprep.subr.mxu0 0.0
    %566 = vmatpush1.xpose.msra.mxu0 0.0
    %567 = vmatprep.subr.mxu0 0.0
    %568 = vmatpush1.xpose.msra.mxu0 0.0
    %569 = vmatprep.subr.mxu0 0.0
    %570 = vmatpush1.xpose.msra.mxu0 0.0
    %571 = vmatprep.subr.mxu0 0.0
    %572 = vmatpush1.xpose.msra.mxu0 0.0
    %573 = vmatprep.subr.mxu0 0.0
    %574 = vmatpush1.xpose.msra.mxu0 0.0
    %575 = vmatprep.mubr.f32.mxu0 0.0
    %576 = vmatmul.mubr.f32.gmra.mrb[0].mxu0 %v500
    %v577 = vpop.f32.mrb[0].mxu0
    %v578 = vadd.f32 %v184, %v577
    %v579 = vpop.f32.mrb[0].mxu0
    %580 = vmatprep.mubr.f32.mxu0 0.0
    %581 = vmatmul.mubr.f32.gmra.mrb[0].mxu0 %v503
    %v582 = vpop.f32.mrb[0].mxu0
    %v583 = vadd.f32 %v185, %v582
    %v584 = vpop.f32.mrb[0].mxu0
    %585 = vdwg.mxu0
    %v586 = vsel %vm498, %v578, -inf
    %587 = vmax.xlane.f32.xlu0 %v586
    %v588 = vpop.xlane.xlu0 %587
    %v589 = vsel %vm498, %v583, -inf
    %590 = vmax.xlane.f32.xlu0 %v589
    %v591 = vpop.xlane.xlu0 %590
    %v592 = vsub.f32 %v578, %v588
    %v593 = vsub.f32 %v583, %v591
    %v594 = vmul.f32 %v592, 1.442695
    %v595 = vpow.pop %v594
    %v596 = vmul.f32 %v593, 1.442695
    %v597 = vpow.pop %v596
    %v598 = vsel %vm498, %v595, 0.0
    %599 = vadd.xlane.f32.xlu0 %v598
    %v600 = vpop.xlane.xlu0 %599
    %v601 = vsel %vm498, %v597, 0.0
    %602 = vadd.xlane.f32.xlu0 %v601
    %v603 = vpop.xlane.xlu0 %602
    %v604 = vrcp.pop %v600
    %v605 = vrcp.pop %v603
    %v606 = vmul.f32 %v595, %v604
    %v607 = vmul.f32 %v597, %v605
    %v609 = vsel %vm498, %v606, 0
    %v612 = vsel %vm498, %v607, 0
    %614 = vmatprep.subr.mxu0 0.0
    %615 = vmatpush1.msra.mxu0 %v490
    %616 = vmatprep.subr.mxu0 0.0
    %617 = vmatpush1.msra.mxu0 %v495
    %618 = vmatprep.subr.mxu0 0.0
    %619 = vmatpush1.msra.mxu0 0.0
    %620 = vmatprep.subr.mxu0 0.0
    %621 = vmatpush1.msra.mxu0 0.0
    %622 = vmatprep.subr.mxu0 0.0
    %623 = vmatpush1.msra.mxu0 0.0
    %624 = vmatprep.subr.mxu0 0.0
    %625 = vmatpush1.msra.mxu0 0.0
    %626 = vmatprep.subr.mxu0 0.0
    %627 = vmatpush1.msra.mxu0 0.0
    %628 = vmatprep.subr.mxu0 0.0
    %629 = vmatpush1.msra.mxu0 0.0
    %630 = vmatprep.subr.mxu0 0.0
    %631 = vmatpush1.msra.mxu0 0.0
    %632 = vmatprep.subr.mxu0 0.0
    %633 = vmatpush1.msra.mxu0 0.0
    %634 = vmatprep.subr.mxu0 0.0
    %635 = vmatpush1.msra.mxu0 0.0
    %636 = vmatprep.subr.mxu0 0.0
    %637 = vmatpush1.msra.mxu0 0.0
    %638 = vmatprep.subr.mxu0 0.0
    %639 = vmatpush1.msra.mxu0 0.0
    %640 = vmatprep.subr.mxu0 0.0
    %641 = vmatpush1.msra.mxu0 0.0
    %642 = vmatprep.subr.mxu0 0.0
    %643 = vmatpush1.msra.mxu0 0.0
    %644 = vmatprep.subr.mxu0 0.0
    %645 = vmatpush1.msra.mxu0 0.0
    %646 = vmatprep.subr.mxu0 0.0
    %647 = vmatpush1.msra.mxu0 0.0
    %648 = vmatprep.subr.mxu0 0.0
    %649 = vmatpush1.msra.mxu0 0.0
    %650 = vmatprep.subr.mxu0 0.0
    %651 = vmatpush1.msra.mxu0 0.0
    %652 = vmatprep.subr.mxu0 0.0
    %653 = vmatpush1.msra.mxu0 0.0
    %654 = vmatprep.subr.mxu0 0.0
    %655 = vmatpush1.msra.mxu0 0.0
    %656 = vmatprep.subr.mxu0 0.0
    %657 = vmatpush1.msra.mxu0 0.0
    %658 = vmatprep.subr.mxu0 0.0
    %659 = vmatpush1.msra.mxu0 0.0
    %660 = vmatprep.subr.mxu0 0.0
    %661 = vmatpush1.msra.mxu0 0.0
    %662 = vmatprep.subr.mxu0 0.0
    %663 = vmatpush1.msra.mxu0 0.0
    %664 = vmatprep.subr.mxu0 0.0
    %665 = vmatpush1.msra.mxu0 0.0
    %666 = vmatprep.subr.mxu0 0.0
    %667 = vmatpush1.msra.mxu0 0.0
    %668 = vmatprep.subr.mxu0 0.0
    %669 = vmatpush1.msra.mxu0 0.0
    %670 = vmatprep.subr.mxu0 0.0
    %671 = vmatpush1.msra.mxu0 0.0
    %672 = vmatprep.subr.mxu0 0.0
    %673 = vmatpush1.msra.mxu0 0.0
    %674 = vmatprep.subr.mxu0 0.0
    %675 = vmatpush1.msra.mxu0 0.0
    %676 = vmatprep.subr.mxu0 0.0
    %677 = vmatpush1.msra.mxu0 0.0
    %678 = vmatprep.mubr.f32.mxu0 0.0
    %679 = vmatmul.mubr.f32.gmra.mrb[0].mxu0 %v609
    %v680 = vpop.f32.mrb[0].mxu0
    %v681 = vadd.f32 0.0, %v680
    %v682 = vpop.f32.mrb[0].mxu0
    %683 = vmatprep.mubr.f32.mxu0 0.0
    %684 = vmatmul.mubr.f32.gmra.mrb[0].mxu0 %v612
    %v685 = vpop.f32.mrb[0].mxu0
    %v686 = vadd.f32 0.0, %v685
    %v687 = vpop.f32.mrb[0].mxu0
    %688 = vdwg.mxu0
    %v689 = vld [vmem:[%s13] sm:$0xff]
    %v690 = vld [vmem:[%s13 + $0x8] sm:$0xff]
    %s691 = scalar_lea.vmem %s7, 32
    %v692 = vld [vmem:[%s691] sm:$0xff]
    %v693 = vld [vmem:[%s691 + $0x8] sm:$0xff]
    %v694 = vld [vmem:[%s691 + $0x10] sm:$0xff]
    %v695 = vld [vmem:[%s691 + $0x18] sm:$0xff]
    %s696 = scalar_lea.vmem %s10, 1
    %v697 = vld [vmem:[%s696] sm:$0x1]
    %v699 = vlaneseq
    %v700 = vshrl.u32 %v699, 7
    %v701 = vsub.s32 0, %v700
    %v702 = vrot.slane %v697, %v701
    %704 = vmatprep.subr.mxu0 0.0
    %705 = vmatpush1.msra.mxu0 %v692
    %706 = vmatprep.subr.mxu0 0.0
    %707 = vmatpush1.msra.mxu0 %v693
    %708 = vmatprep.subr.mxu0 0.0
    %709 = vmatpush1.msra.mxu0 %v694
    %710 = vmatprep.subr.mxu0 0.0
    %711 = vmatpush1.msra.mxu0 %v695
    %712 = vmatprep.subr.mxu0 0.0
    %713 = vmatpush1.msra.mxu0 0.0
    %714 = vmatprep.subr.mxu0 0.0
    %715 = vmatpush1.msra.mxu0 0.0
    %716 = vmatprep.subr.mxu0 0.0
    %717 = vmatpush1.msra.mxu0 0.0
    %718 = vmatprep.subr.mxu0 0.0
    %719 = vmatpush1.msra.mxu0 0.0
    %720 = vmatprep.subr.mxu0 0.0
    %721 = vmatpush1.msra.mxu0 0.0
    %722 = vmatprep.subr.mxu0 0.0
    %723 = vmatpush1.msra.mxu0 0.0
    %724 = vmatprep.subr.mxu0 0.0
    %725 = vmatpush1.msra.mxu0 0.0
    %726 = vmatprep.subr.mxu0 0.0
    %727 = vmatpush1.msra.mxu0 0.0
    %728 = vmatprep.subr.mxu0 0.0
    %729 = vmatpush1.msra.mxu0 0.0
    %730 = vmatprep.subr.mxu0 0.0
    %731 = vmatpush1.msra.mxu0 0.0
    %732 = vmatprep.subr.mxu0 0.0
    %733 = vmatpush1.msra.mxu0 0.0
    %734 = vmatprep.subr.mxu0 0.0
    %735 = vmatpush1.msra.mxu0 0.0
    %736 = vmatprep.subr.mxu0 0.0
    %737 = vmatpush1.msra.mxu0 0.0
    %738 = vmatprep.subr.mxu0 0.0
    %739 = vmatpush1.msra.mxu0 0.0
    %740 = vmatprep.subr.mxu0 0.0
    %741 = vmatpush1.msra.mxu0 0.0
    %742 = vmatprep.subr.mxu0 0.0
    %743 = vmatpush1.msra.mxu0 0.0
    %744 = vmatprep.subr.mxu0 0.0
    %745 = vmatpush1.msra.mxu0 0.0
    %746 = vmatprep.subr.mxu0 0.0
    %747 = vmatpush1.msra.mxu0 0.0
    %748 = vmatprep.subr.mxu0 0.0
    %749 = vmatpush1.msra.mxu0 0.0
    %750 = vmatprep.subr.mxu0 0.0
    %751 = vmatpush1.msra.mxu0 0.0
    %752 = vmatprep.subr.mxu0 0.0
    %753 = vmatpush1.msra.mxu0 0.0
    %754 = vmatprep.subr.mxu0 0.0
    %755 = vmatpush1.msra.mxu0 0.0
    %756 = vmatprep.subr.mxu0 0.0
    %757 = vmatpush1.msra.mxu0 0.0
    %758 = vmatprep.subr.mxu0 0.0
    %759 = vmatpush1.msra.mxu0 0.0
    %760 = vmatprep.subr.mxu0 0.0
    %761 = vmatpush1.msra.mxu0 0.0
    %762 = vmatprep.subr.mxu0 0.0
    %763 = vmatpush1.msra.mxu0 0.0
    %764 = vmatprep.subr.mxu0 0.0
    %765 = vmatpush1.msra.mxu0 0.0
    %766 = vmatprep.subr.mxu0 0.0
    %767 = vmatpush1.msra.mxu0 0.0
    %768 = vmatprep.mubr.f32.mxu0 0.0
    %769 = vmatmul.mubr.f32.gmra.mrb[0].mxu0 %v244
    %v770 = vpop.f32.mrb[0].mxu0
    %v771 = vadd.f32 %v702, %v770
    %v772 = vpop.f32.mrb[0].mxu0
    %773 = vmatprep.mubr.f32.mxu0 0.0
    %774 = vmatmul.mubr.f32.gmra.mrb[0].mxu0 %v247
    %v775 = vpop.f32.mrb[0].mxu0
    %v776 = vadd.f32 %v702, %v775
    %v777 = vpop.f32.mrb[0].mxu0
    %778 = vdwg.mxu0
    %v779 = vmul.f32 %v771, 0.25
    %v780 = vmul.f32 %v776, 0.25
    %s781 = scalar_lea.vmem %s8, 32
    %v782 = vld [vmem:[%s781] sm:$0xff]
    %v783 = vld [vmem:[%s781 + $0x8] sm:$0xff]
    %v784 = vld [vmem:[%s781 + $0x10] sm:$0xff]
    %v785 = vld [vmem:[%s781 + $0x18] sm:$0xff]
    %s786 = scalar_lea.vmem %s11, 1
    %v787 = vld [vmem:[%s786] sm:$0x1]
    %v789 = vlaneseq
    %v790 = vshrl.u32 %v789, 7
    %v791 = vsub.s32 0, %v790
    %v792 = vrot.slane %v787, %v791
    %794 = vmatprep.subr.mxu0 0.0
    %795 = vmatpush1.msra.mxu0 %v782
    %796 = vmatprep.subr.mxu0 0.0
    %797 = vmatpush1.msra.mxu0 %v783
    %798 = vmatprep.subr.mxu0 0.0
    %799 = vmatpush1.msra.mxu0 %v784
    %800 = vmatprep.subr.mxu0 0.0
    %801 = vmatpush1.msra.mxu0 %v785
    %802 = vmatprep.subr.mxu0 0.0
    %803 = vmatpush1.msra.mxu0 0.0
    %804 = vmatprep.subr.mxu0 0.0
    %805 = vmatpush1.msra.mxu0 0.0
    %806 = vmatprep.subr.mxu0 0.0
    %807 = vmatpush1.msra.mxu0 0.0
    %808 = vmatprep.subr.mxu0 0.0
    %809 = vmatpush1.msra.mxu0 0.0
    %810 = vmatprep.subr.mxu0 0.0
    %811 = vmatpush1.msra.mxu0 0.0
    %812 = vmatprep.subr.mxu0 0.0
    %813 = vmatpush1.msra.mxu0 0.0
    %814 = vmatprep.subr.mxu0 0.0
    %815 = vmatpush1.msra.mxu0 0.0
    %816 = vmatprep.subr.mxu0 0.0
    %817 = vmatpush1.msra.mxu0 0.0
    %818 = vmatprep.subr.mxu0 0.0
    %819 = vmatpush1.msra.mxu0 0.0
    %820 = vmatprep.subr.mxu0 0.0
    %821 = vmatpush1.msra.mxu0 0.0
    %822 = vmatprep.subr.mxu0 0.0
    %823 = vmatpush1.msra.mxu0 0.0
    %824 = vmatprep.subr.mxu0 0.0
    %825 = vmatpush1.msra.mxu0 0.0
    %826 = vmatprep.subr.mxu0 0.0
    %827 = vmatpush1.msra.mxu0 0.0
    %828 = vmatprep.subr.mxu0 0.0
    %829 = vmatpush1.msra.mxu0 0.0
    %830 = vmatprep.subr.mxu0 0.0
    %831 = vmatpush1.msra.mxu0 0.0
    %832 = vmatprep.subr.mxu0 0.0
    %833 = vmatpush1.msra.mxu0 0.0
    %834 = vmatprep.subr.mxu0 0.0
    %835 = vmatpush1.msra.mxu0 0.0
    %836 = vmatprep.subr.mxu0 0.0
    %837 = vmatpush1.msra.mxu0 0.0
    %838 = vmatprep.subr.mxu0 0.0
    %839 = vmatpush1.msra.mxu0 0.0
    %840 = vmatprep.subr.mxu0 0.0
    %841 = vmatpush1.msra.mxu0 0.0
    %842 = vmatprep.subr.mxu0 0.0
    %843 = vmatpush1.msra.mxu0 0.0
    %844 = vmatprep.subr.mxu0 0.0
    %845 = vmatpush1.msra.mxu0 0.0
    %846 = vmatprep.subr.mxu0 0.0
    %847 = vmatpush1.msra.mxu0 0.0
    %848 = vmatprep.subr.mxu0 0.0
    %849 = vmatpush1.msra.mxu0 0.0
    %850 = vmatprep.subr.mxu0 0.0
    %851 = vmatpush1.msra.mxu0 0.0
    %852 = vmatprep.subr.mxu0 0.0
    %853 = vmatpush1.msra.mxu0 0.0
    %854 = vmatprep.subr.mxu0 0.0
    %855 = vmatpush1.msra.mxu0 0.0
    %856 = vmatprep.subr.mxu0 0.0
    %857 = vmatpush1.msra.mxu0 0.0
    %858 = vmatprep.mubr.f32.mxu0 0.0
    %859 = vmatmul.mubr.f32.gmra.mrb[0].mxu0 %v244
    %v860 = vpop.f32.mrb[0].mxu0
    %v861 = vadd.f32 %v792, %v860
    %v862 = vpop.f32.mrb[0].mxu0
    %863 = vmatprep.mubr.f32.mxu0 0.0
    %864 = vmatmul.mubr.f32.gmra.mrb[0].mxu0 %v247
    %v865 = vpop.f32.mrb[0].mxu0
    %v866 = vadd.f32 %v792, %v865
    %v867 = vpop.f32.mrb[0].mxu0
    %868 = vdwg.mxu0
    %s869 = scalar_lea.vmem %s9, 32
    %v870 = vld [vmem:[%s869] sm:$0xff]
    %v871 = vld [vmem:[%s869 + $0x8] sm:$0xff]
    %v872 = vld [vmem:[%s869 + $0x10] sm:$0xff]
    %v873 = vld [vmem:[%s869 + $0x18] sm:$0xff]
    %s874 = scalar_lea.vmem %s12, 1
    %v875 = vld [vmem:[%s874] sm:$0x1]
    %v877 = vlaneseq
    %v878 = vshrl.u32 %v877, 7
    %v879 = vsub.s32 0, %v878
    %v880 = vrot.slane %v875, %v879
    %882 = vmatprep.subr.mxu0 0.0
    %883 = vmatpush1.msra.mxu0 %v870
    %884 = vmatprep.subr.mxu0 0.0
    %885 = vmatpush1.msra.mxu0 %v871
    %886 = vmatprep.subr.mxu0 0.0
    %887 = vmatpush1.msra.mxu0 %v872
    %888 = vmatprep.subr.mxu0 0.0
    %889 = vmatpush1.msra.mxu0 %v873
    %890 = vmatprep.subr.mxu0 0.0
    %891 = vmatpush1.msra.mxu0 0.0
    %892 = vmatprep.subr.mxu0 0.0
    %893 = vmatpush1.msra.mxu0 0.0
    %894 = vmatprep.subr.mxu0 0.0
    %895 = vmatpush1.msra.mxu0 0.0
    %896 = vmatprep.subr.mxu0 0.0
    %897 = vmatpush1.msra.mxu0 0.0
    %898 = vmatprep.subr.mxu0 0.0
    %899 = vmatpush1.msra.mxu0 0.0
    %900 = vmatprep.subr.mxu0 0.0
    %901 = vmatpush1.msra.mxu0 0.0
    %902 = vmatprep.subr.mxu0 0.0
    %903 = vmatpush1.msra.mxu0 0.0
    %904 = vmatprep.subr.mxu0 0.0
    %905 = vmatpush1.msra.mxu0 0.0
    %906 = vmatprep.subr.mxu0 0.0
    %907 = vmatpush1.msra.mxu0 0.0
    %908 = vmatprep.subr.mxu0 0.0
    %909 = vmatpush1.msra.mxu0 0.0
    %910 = vmatprep.subr.mxu0 0.0
    %911 = vmatpush1.msra.mxu0 0.0
    %912 = vmatprep.subr.mxu0 0.0
    %913 = vmatpush1.msra.mxu0 0.0
    %914 = vmatprep.subr.mxu0 0.0
    %915 = vmatpush1.msra.mxu0 0.0
    %916 = vmatprep.subr.mxu0 0.0
    %917 = vmatpush1.msra.mxu0 0.0
    %918 = vmatprep.subr.mxu0 0.0
    %919 = vmatpush1.msra.mxu0 0.0
    %920 = vmatprep.subr.mxu0 0.0
    %921 = vmatpush1.msra.mxu0 0.0
    %922 = vmatprep.subr.mxu0 0.0
    %923 = vmatpush1.msra.mxu0 0.0
    %924 = vmatprep.subr.mxu0 0.0
    %925 = vmatpush1.msra.mxu0 0.0
    %926 = vmatprep.subr.mxu0 0.0
    %927 = vmatpush1.msra.mxu0 0.0
    %928 = vmatprep.subr.mxu0 0.0
    %929 = vmatpush1.msra.mxu0 0.0
    %930 = vmatprep.subr.mxu0 0.0
    %931 = vmatpush1.msra.mxu0 0.0
    %932 = vmatprep.subr.mxu0 0.0
    %933 = vmatpush1.msra.mxu0 0.0
    %934 = vmatprep.subr.mxu0 0.0
    %935 = vmatpush1.msra.mxu0 0.0
    %936 = vmatprep.subr.mxu0 0.0
    %937 = vmatpush1.msra.mxu0 0.0
    %938 = vmatprep.subr.mxu0 0.0
    %939 = vmatpush1.msra.mxu0 0.0
    %940 = vmatprep.subr.mxu0 0.0
    %941 = vmatpush1.msra.mxu0 0.0
    %942 = vmatprep.subr.mxu0 0.0
    %943 = vmatpush1.msra.mxu0 0.0
    %944 = vmatprep.subr.mxu0 0.0
    %945 = vmatpush1.msra.mxu0 0.0
    %946 = vmatprep.mubr.f32.mxu0 0.0
    %947 = vmatmul.mubr.f32.gmra.mrb[0].mxu0 %v244
    %v948 = vpop.f32.mrb[0].mxu0
    %v949 = vadd.f32 %v880, %v948
    %v950 = vpop.f32.mrb[0].mxu0
    %951 = vmatprep.mubr.f32.mxu0 0.0
    %952 = vmatmul.mubr.f32.gmra.mrb[0].mxu0 %v247
    %v953 = vpop.f32.mrb[0].mxu0
    %v954 = vadd.f32 %v880, %v953
    %v955 = vpop.f32.mrb[0].mxu0
    %956 = vdwg.mxu0
    %v958 = vsel %vm498, %v779, 0
    %v961 = vsel %vm498, %v780, 0
    %v964 = vsel %vm498, %v861, 0
    %v967 = vsel %vm498, %v866, 0
    %969 = vmatprep.subr.mxu0 0.0
    %970 = vmatpush1.xpose.msra.mxu0 %v964
    %971 = vmatprep.subr.mxu0 0.0
    %972 = vmatpush1.xpose.msra.mxu0 %v967
    %973 = vmatprep.subr.mxu0 0.0
    %974 = vmatpush1.xpose.msra.mxu0 0.0
    %975 = vmatprep.subr.mxu0 0.0
    %976 = vmatpush1.xpose.msra.mxu0 0.0
    %977 = vmatprep.subr.mxu0 0.0
    %978 = vmatpush1.xpose.msra.mxu0 0.0
    %979 = vmatprep.subr.mxu0 0.0
    %980 = vmatpush1.xpose.msra.mxu0 0.0
    %981 = vmatprep.subr.mxu0 0.0
    %982 = vmatpush1.xpose.msra.mxu0 0.0
    %983 = vmatprep.subr.mxu0 0.0
    %984 = vmatpush1.xpose.msra.mxu0 0.0
    %985 = vmatprep.subr.mxu0 0.0
    %986 = vmatpush1.xpose.msra.mxu0 0.0
    %987 = vmatprep.subr.mxu0 0.0
    %988 = vmatpush1.xpose.msra.mxu0 0.0
    %989 = vmatprep.subr.mxu0 0.0
    %990 = vmatpush1.xpose.msra.mxu0 0.0
    %991 = vmatprep.subr.mxu0 0.0
    %992 = vmatpush1.xpose.msra.mxu0 0.0
    %993 = vmatprep.subr.mxu0 0.0
    %994 = vmatpush1.xpose.msra.mxu0 0.0
    %995 = vmatprep.subr.mxu0 0.0
    %996 = vmatpush1.xpose.msra.mxu0 0.0
    %997 = vmatprep.subr.mxu0 0.0
    %998 = vmatpush1.xpose.msra.mxu0 0.0
    %999 = vmatprep.subr.mxu0 0.0
    %1000 = vmatpush1.xpose.msra.mxu0 0.0
    %1001 = vmatprep.subr.mxu0 0.0
    %1002 = vmatpush1.xpose.msra.mxu0 0.0
    %1003 = vmatprep.subr.mxu0 0.0
    %1004 = vmatpush1.xpose.msra.mxu0 0.0
    %1005 = vmatprep.subr.mxu0 0.0
    %1006 = vmatpush1.xpose.msra.mxu0 0.0
    %1007 = vmatprep.subr.mxu0 0.0
    %1008 = vmatpush1.xpose.msra.mxu0 0.0
    %1009 = vmatprep.subr.mxu0 0.0
    %1010 = vmatpush1.xpose.msra.mxu0 0.0
    %1011 = vmatprep.subr.mxu0 0.0
    %1012 = vmatpush1.xpose.msra.mxu0 0.0
    %1013 = vmatprep.subr.mxu0 0.0
    %1014 = vmatpush1.xpose.msra.mxu0 0.0
    %1015 = vmatprep.subr.mxu0 0.0
    %1016 = vmatpush1.xpose.msra.mxu0 0.0
    %1017 = vmatprep.subr.mxu0 0.0
    %1018 = vmatpush1.xpose.msra.mxu0 0.0
    %1019 = vmatprep.subr.mxu0 0.0
    %1020 = vmatpush1.xpose.msra.mxu0 0.0
    %1021 = vmatprep.subr.mxu0 0.0
    %1022 = vmatpush1.xpose.msra.mxu0 0.0
    %1023 = vmatprep.subr.mxu0 0.0
    %1024 = vmatpush1.xpose.msra.mxu0 0.0
    %1025 = vmatprep.subr.mxu0 0.0
    %1026 = vmatpush1.xpose.msra.mxu0 0.0
    %1027 = vmatprep.subr.mxu0 0.0
    %1028 = vmatpush1.xpose.msra.mxu0 0.0
    %1029 = vmatprep.subr.mxu0 0.0
    %1030 = vmatpush1.xpose.msra.mxu0 0.0
    %1031 = vmatprep.subr.mxu0 0.0
    %1032 = vmatpush1.xpose.msra.mxu0 0.0
    %1033 = vmatprep.mubr.f32.mxu0 0.0
    %1034 = vmatmul.mubr.f32.gmra.mrb[0].mxu0 %v958
    %v1035 = vpop.f32.mrb[0].mxu0
    %v1036 = vadd.f32 %v184, %v1035
    %v1037 = vpop.f32.mrb[0].mxu0
    %1038 = vmatprep.mubr.f32.mxu0 0.0
    %1039 = vmatmul.mubr.f32.gmra.mrb[0].mxu0 %v961
    %v1040 = vpop.f32.mrb[0].mxu0
    %v1041 = vadd.f32 %v185, %v1040
    %v1042 = vpop.f32.mrb[0].mxu0
    %1043 = vdwg.mxu0
    %v1044 = vsel %vm498, %v1036, -inf
    %1045 = vmax.xlane.f32.xlu0 %v1044
    %v1046 = vpop.xlane.xlu0 %1045
    %v1047 = vsel %vm498, %v1041, -inf
    %1048 = vmax.xlane.f32.xlu0 %v1047
    %v1049 = vpop.xlane.xlu0 %1048
    %v1050 = vsub.f32 %v1036, %v1046
    %v1051 = vsub.f32 %v1041, %v1049
    %v1052 = vmul.f32 %v1050, 1.442695
    %v1053 = vpow.pop %v1052
    %v1054 = vmul.f32 %v1051, 1.442695
    %v1055 = vpow.pop %v1054
    %v1056 = vsel %vm498, %v1053, 0.0
    %1057 = vadd.xlane.f32.xlu0 %v1056
    %v1058 = vpop.xlane.xlu0 %1057
    %v1059 = vsel %vm498, %v1055, 0.0
    %1060 = vadd.xlane.f32.xlu0 %v1059
    %v1061 = vpop.xlane.xlu0 %1060
    %v1062 = vrcp.pop %v1058
    %v1063 = vrcp.pop %v1061
    %v1064 = vmul.f32 %v1053, %v1062
    %v1065 = vmul.f32 %v1055, %v1063
    %v1067 = vsel %vm498, %v1064, 0
    %v1070 = vsel %vm498, %v1065, 0
    %1072 = vmatprep.subr.mxu0 0.0
    %1073 = vmatpush1.msra.mxu0 %v949
    %1074 = vmatprep.subr.mxu0 0.0
    %1075 = vmatpush1.msra.mxu0 %v954
    %1076 = vmatprep.subr.mxu0 0.0
    %1077 = vmatpush1.msra.mxu0 0.0
    %1078 = vmatprep.subr.mxu0 0.0
    %1079 = vmatpush1.msra.mxu0 0.0
    %1080 = vmatprep.subr.mxu0 0.0
    %1081 = vmatpush1.msra.mxu0 0.0
    %1082 = vmatprep.subr.mxu0 0.0
    %1083 = vmatpush1.msra.mxu0 0.0
    %1084 = vmatprep.subr.mxu0 0.0
    %1085 = vmatpush1.msra.mxu0 0.0
    %1086 = vmatprep.subr.mxu0 0.0
    %1087 = vmatpush1.msra.mxu0 0.0
    %1088 = vmatprep.subr.mxu0 0.0
    %1089 = vmatpush1.msra.mxu0 0.0
    %1090 = vmatprep.subr.mxu0 0.0
    %1091 = vmatpush1.msra.mxu0 0.0
    %1092 = vmatprep.subr.mxu0 0.0
    %1093 = vmatpush1.msra.mxu0 0.0
    %1094 = vmatprep.subr.mxu0 0.0
    %1095 = vmatpush1.msra.mxu0 0.0
    %1096 = vmatprep.subr.mxu0 0.0
    %1097 = vmatpush1.msra.mxu0 0.0
    %1098 = vmatprep.subr.mxu0 0.0
    %1099 = vmatpush1.msra.mxu0 0.0
    %1100 = vmatprep.subr.mxu0 0.0
    %1101 = vmatpush1.msra.mxu0 0.0
    %1102 = vmatprep.subr.mxu0 0.0
    %1103 = vmatpush1.msra.mxu0 0.0
    %1104 = vmatprep.subr.mxu0 0.0
    %1105 = vmatpush1.msra.mxu0 0.0
    %1106 = vmatprep.subr.mxu0 0.0
    %1107 = vmatpush1.msra.mxu0 0.0
    %1108 = vmatprep.subr.mxu0 0.0
    %1109 = vmatpush1.msra.mxu0 0.0
    %1110 = vmatprep.subr.mxu0 0.0
    %1111 = vmatpush1.msra.mxu0 0.0
    %1112 = vmatprep.subr.mxu0 0.0
    %1113 = vmatpush1.msra.mxu0 0.0
    %1114 = vmatprep.subr.mxu0 0.0
    %1115 = vmatpush1.msra.mxu0 0.0
    %1116 = vmatprep.subr.mxu0 0.0
    %1117 = vmatpush1.msra.mxu0 0.0
    %1118 = vmatprep.subr.mxu0 0.0
    %1119 = vmatpush1.msra.mxu0 0.0
    %1120 = vmatprep.subr.mxu0 0.0
    %1121 = vmatpush1.msra.mxu0 0.0
    %1122 = vmatprep.subr.mxu0 0.0
    %1123 = vmatpush1.msra.mxu0 0.0
    %1124 = vmatprep.subr.mxu0 0.0
    %1125 = vmatpush1.msra.mxu0 0.0
    %1126 = vmatprep.subr.mxu0 0.0
    %1127 = vmatpush1.msra.mxu0 0.0
    %1128 = vmatprep.subr.mxu0 0.0
    %1129 = vmatpush1.msra.mxu0 0.0
    %1130 = vmatprep.subr.mxu0 0.0
    %1131 = vmatpush1.msra.mxu0 0.0
    %1132 = vmatprep.subr.mxu0 0.0
    %1133 = vmatpush1.msra.mxu0 0.0
    %1134 = vmatprep.subr.mxu0 0.0
    %1135 = vmatpush1.msra.mxu0 0.0
    %1136 = vmatprep.mubr.f32.mxu0 0.0
    %1137 = vmatmul.mubr.f32.gmra.mrb[0].mxu0 %v1067
    %v1138 = vpop.f32.mrb[0].mxu0
    %v1139 = vadd.f32 0.0, %v1138
    %v1140 = vpop.f32.mrb[0].mxu0
    %1141 = vmatprep.mubr.f32.mxu0 0.0
    %1142 = vmatmul.mubr.f32.gmra.mrb[0].mxu0 %v1070
    %v1143 = vpop.f32.mrb[0].mxu0
    %v1144 = vadd.f32 0.0, %v1143
    %v1145 = vpop.f32.mrb[0].mxu0
    %1146 = vdwg.mxu0
    %s1147 = scalar_lea.vmem %s13, 16
    %v1148 = vld [vmem:[%s1147] sm:$0xff]
    %v1149 = vld [vmem:[%s1147 + $0x8] sm:$0xff]
    %v1151 = vsel %vm498, %v1139, 0
    %v1154 = vsel %vm498, %v1144, 0
    %1156 = vmatprep.subr.mxu0 0.0
    %1157 = vmatpush1.msra.mxu0 %v1148
    %1158 = vmatprep.subr.mxu0 0.0
    %1159 = vmatpush1.msra.mxu0 %v1149
    %1160 = vmatprep.subr.mxu0 0.0
    %1161 = vmatpush1.msra.mxu0 0.0
    %1162 = vmatprep.subr.mxu0 0.0
    %1163 = vmatpush1.msra.mxu0 0.0
    %1164 = vmatprep.subr.mxu0 0.0
    %1165 = vmatpush1.msra.mxu0 0.0
    %1166 = vmatprep.subr.mxu0 0.0
    %1167 = vmatpush1.msra.mxu0 0.0
    %1168 = vmatprep.subr.mxu0 0.0
    %1169 = vmatpush1.msra.mxu0 0.0
    %1170 = vmatprep.subr.mxu0 0.0
    %1171 = vmatpush1.msra.mxu0 0.0
    %1172 = vmatprep.subr.mxu0 0.0
    %1173 = vmatpush1.msra.mxu0 0.0
    %1174 = vmatprep.subr.mxu0 0.0
    %1175 = vmatpush1.msra.mxu0 0.0
    %1176 = vmatprep.subr.mxu0 0.0
    %1177 = vmatpush1.msra.mxu0 0.0
    %1178 = vmatprep.subr.mxu0 0.0
    %1179 = vmatpush1.msra.mxu0 0.0
    %1180 = vmatprep.subr.mxu0 0.0
    %1181 = vmatpush1.msra.mxu0 0.0
    %1182 = vmatprep.subr.mxu0 0.0
    %1183 = vmatpush1.msra.mxu0 0.0
    %1184 = vmatprep.subr.mxu0 0.0
    %1185 = vmatpush1.msra.mxu0 0.0
    %1186 = vmatprep.subr.mxu0 0.0
    %1187 = vmatpush1.msra.mxu0 0.0
    %1188 = vmatprep.subr.mxu0 0.0
    %1189 = vmatpush1.msra.mxu0 0.0
    %1190 = vmatprep.subr.mxu0 0.0
    %1191 = vmatpush1.msra.mxu0 0.0
    %1192 = vmatprep.subr.mxu0 0.0
    %1193 = vmatpush1.msra.mxu0 0.0
    %1194 = vmatprep.subr.mxu0 0.0
    %1195 = vmatpush1.msra.mxu0 0.0
    %1196 = vmatprep.subr.mxu0 0.0
    %1197 = vmatpush1.msra.mxu0 0.0
    %1198 = vmatprep.subr.mxu0 0.0
    %1199 = vmatpush1.msra.mxu0 0.0
    %1200 = vmatprep.subr.mxu0 0.0
    %1201 = vmatpush1.msra.mxu0 0.0
    %1202 = vmatprep.subr.mxu0 0.0
    %1203 = vmatpush1.msra.mxu0 0.0
    %1204 = vmatprep.subr.mxu0 0.0
    %1205 = vmatpush1.msra.mxu0 0.0
    %1206 = vmatprep.subr.mxu0 0.0
    %1207 = vmatpush1.msra.mxu0 0.0
    %1208 = vmatprep.subr.mxu0 0.0
    %1209 = vmatpush1.msra.mxu0 0.0
    %1210 = vmatprep.subr.mxu0 0.0
    %1211 = vmatpush1.msra.mxu0 0.0
    %1212 = vmatprep.subr.mxu0 0.0
    %1213 = vmatpush1.msra.mxu0 0.0
    %1214 = vmatprep.subr.mxu0 0.0
    %1215 = vmatpush1.msra.mxu0 0.0
    %1216 = vmatprep.subr.mxu0 0.0
    %1217 = vmatpush1.msra.mxu0 0.0
    %1218 = vmatprep.subr.mxu0 0.0
    %1219 = vmatpush1.msra.mxu0 0.0
    %1220 = vmatprep.mubr.f32.mxu0 0.0
    %1221 = vmatmul.mubr.f32.gmra.mrb[0].mxu0 %v1151
    %v1222 = vpop.f32.mrb[0].mxu0
    %v1223 = vadd.f32 0.0, %v1222
    %v1224 = vpop.f32.mrb[0].mxu0
    %1225 = vmatprep.mubr.f32.mxu0 0.0
    %1226 = vmatmul.mubr.f32.gmra.mrb[0].mxu0 %v1154
    %v1227 = vpop.f32.mrb[0].mxu0
    %v1228 = vadd.f32 0.0, %v1227
    %v1229 = vpop.f32.mrb[0].mxu0
    %1230 = vdwg.mxu0
    %v1232 = vsel %vm498, %v681, 0
    %v1235 = vsel %vm498, %v686, 0
    %1237 = vmatprep.subr.mxu0 0.0
    %1238 = vmatpush1.msra.mxu0 %v689
    %1239 = vmatprep.subr.mxu0 0.0
    %1240 = vmatpush1.msra.mxu0 %v690
    %1241 = vmatprep.subr.mxu0 0.0
    %1242 = vmatpush1.msra.mxu0 0.0
    %1243 = vmatprep.subr.mxu0 0.0
    %1244 = vmatpush1.msra.mxu0 0.0
    %1245 = vmatprep.subr.mxu0 0.0
    %1246 = vmatpush1.msra.mxu0 0.0
    %1247 = vmatprep.subr.mxu0 0.0
    %1248 = vmatpush1.msra.mxu0 0.0
    %1249 = vmatprep.subr.mxu0 0.0
    %1250 = vmatpush1.msra.mxu0 0.0
    %1251 = vmatprep.subr.mxu0 0.0
    %1252 = vmatpush1.msra.mxu0 0.0
    %1253 = vmatprep.subr.mxu0 0.0
    %1254 = vmatpush1.msra.mxu0 0.0
    %1255 = vmatprep.subr.mxu0 0.0
    %1256 = vmatpush1.msra.mxu0 0.0
    %1257 = vmatprep.subr.mxu0 0.0
    %1258 = vmatpush1.msra.mxu0 0.0
    %1259 = vmatprep.subr.mxu0 0.0
    %1260 = vmatpush1.msra.mxu0 0.0
    %1261 = vmatprep.subr.mxu0 0.0
    %1262 = vmatpush1.msra.mxu0 0.0
    %1263 = vmatprep.subr.mxu0 0.0
    %1264 = vmatpush1.msra.mxu0 0.0
    %1265 = vmatprep.subr.mxu0 0.0
    %1266 = vmatpush1.msra.mxu0 0.0
    %1267 = vmatprep.subr.mxu0 0.0
    %1268 = vmatpush1.msra.mxu0 0.0
    %1269 = vmatprep.subr.mxu0 0.0
    %1270 = vmatpush1.msra.mxu0 0.0
    %1271 = vmatprep.subr.mxu0 0.0
    %1272 = vmatpush1.msra.mxu0 0.0
    %1273 = vmatprep.subr.mxu0 0.0
    %1274 = vmatpush1.msra.mxu0 0.0
    %1275 = vmatprep.subr.mxu0 0.0
    %1276 = vmatpush1.msra.mxu0 0.0
    %1277 = vmatprep.subr.mxu0 0.0
    %1278 = vmatpush1.msra.mxu0 0.0
    %1279 = vmatprep.subr.mxu0 0.0
    %1280 = vmatpush1.msra.mxu0 0.0
    %1281 = vmatprep.subr.mxu0 0.0
    %1282 = vmatpush1.msra.mxu0 0.0
    %1283 = vmatprep.subr.mxu0 0.0
    %1284 = vmatpush1.msra.mxu0 0.0
    %1285 = vmatprep.subr.mxu0 0.0
    %1286 = vmatpush1.msra.mxu0 0.0
    %1287 = vmatprep.subr.mxu0 0.0
    %1288 = vmatpush1.msra.mxu0 0.0
    %1289 = vmatprep.subr.mxu0 0.0
    %1290 = vmatpush1.msra.mxu0 0.0
    %1291 = vmatprep.subr.mxu0 0.0
    %1292 = vmatpush1.msra.mxu0 0.0
    %1293 = vmatprep.subr.mxu0 0.0
    %1294 = vmatpush1.msra.mxu0 0.0
    %1295 = vmatprep.subr.mxu0 0.0
    %1296 = vmatpush1.msra.mxu0 0.0
    %1297 = vmatprep.subr.mxu0 0.0
    %1298 = vmatpush1.msra.mxu0 0.0
    %1299 = vmatprep.subr.mxu0 0.0
    %1300 = vmatpush1.msra.mxu0 0.0
    %1301 = vmatprep.mubr.f32.mxu0 0.0
    %1302 = vmatmul.mubr.f32.gmra.mrb[0].mxu0 %v1232
    %v1303 = vpop.f32.mrb[0].mxu0
    %v1304 = vadd.f32 %v1223, %v1303
    %v1305 = vpop.f32.mrb[0].mxu0
    %1306 = vmatprep.mubr.f32.mxu0 0.0
    %1307 = vmatmul.mubr.f32.gmra.mrb[0].mxu0 %v1235
    %v1308 = vpop.f32.mrb[0].mxu0
    %v1309 = vadd.f32 %v1228, %v1308
    %v1310 = vpop.f32.mrb[0].mxu0
    %1311 = vdwg.mxu0
    %v1312 = vadd.f32 %v176, %v1304
    %v1313 = vadd.f32 %v181, %v1309
    %v1314 = vld [vmem:[%s14] sm:$0x1]
    %v1316 = vlaneseq
    %v1317 = vshrl.u32 %v1316, 7
    %v1318 = vsub.s32 0, %v1317
    %v1319 = vrot.slane %v1314, %v1318
    %v1321 = vadd.f32 %v1312, %v1319
    %v1322 = vadd.f32 %v1313, %v1319
    %v1323 = vld [vmem:[%s15] sm:$0x1]
    %v1324 = vld [vmem:[%s16] sm:$0x1]
    %v1325 = vsel %vm188, %v1321, 0.0
    %1326 = vadd.xlane.f32.xlu0 %v1325
    %v1327 = vpop.xlane.xlu0 %1326
    %v1328 = vsel %vm188, %v1322, 0.0
    %1329 = vadd.xlane.f32.xlu0 %v1328
    %v1330 = vpop.xlane.xlu0 %1329
    %v1331 = vmul.f32 %v1327, %v195
    %v1332 = vmul.f32 %v1330, %v195
    %v1333 = vsub.f32 %v1321, %v1331
    %v1334 = vsub.f32 %v1322, %v1332
    %v1335 = vmul.f32 %v1333, %v1333
    %v1336 = vmul.f32 %v1334, %v1334
    %v1337 = vsel %vm188, %v1335, 0.0
    %1338 = vadd.xlane.f32.xlu0 %v1337
    %v1339 = vpop.xlane.xlu0 %1338
    %v1340 = vsel %vm188, %v1336, 0.0
    %1341 = vadd.xlane.f32.xlu0 %v1340
    %v1342 = vpop.xlane.xlu0 %1341
    %v1343 = vmul.f32 %v1339, %v195
    %v1344 = vmul.f32 %v1342, %v195
    %v1345 = vadd.f32 %v1343, 1e-05
    %v1346 = vadd.f32 %v1344, 1e-05
    %v1347 = vrsqrt.pop %v1345
    %v1348 = vrsqrt.pop %v1346
    %v1349 = vmul.f32 %v1333, %v1347
    %v1350 = vmul.f32 %v1334, %v1348
    %v1352 = vlaneseq
    %v1353 = vshrl.u32 %v1352, 7
    %v1354 = vsub.s32 0, %v1353
    %v1355 = vrot.slane %v1323, %v1354
    %v1357 = vmul.f32 %v1349, %v1355
    %v1358 = vmul.f32 %v1350, %v1355
    %v1360 = vlaneseq
    %v1361 = vshrl.u32 %v1360, 7
    %v1362 = vsub.s32 0, %v1361
    %v1363 = vrot.slane %v1324, %v1362
    %v1365 = vadd.f32 %v1357, %v1363
    %v1366 = vadd.f32 %v1358, %v1363
    %v1367 = vld [vmem:[%s17] sm:$0xff]
    %v1368 = vld [vmem:[%s17 + $0x8] sm:$0xff]
    %v1369 = vld [vmem:[%s17 + $0x10] sm:$0xff]
    %v1370 = vld [vmem:[%s17 + $0x18] sm:$0xff]
    %v1371 = vld [vmem:[%s18] sm:$0x1]
    %v1373 = vlaneseq
    %v1374 = vshrl.u32 %v1373, 7
    %v1375 = vsub.s32 0, %v1374
    %v1376 = vrot.slane %v1371, %v1375
    %v1379 = vsel %vm188, %v1365, 0
    %v1382 = vsel %vm188, %v1366, 0
    %1384 = vmatprep.subr.mxu0 0.0
    %1385 = vmatpush1.msra.mxu0 %v1367
    %1386 = vmatprep.subr.mxu0 0.0
    %1387 = vmatpush1.msra.mxu0 %v1368
    %1388 = vmatprep.subr.mxu0 0.0
    %1389 = vmatpush1.msra.mxu0 %v1369
    %1390 = vmatprep.subr.mxu0 0.0
    %1391 = vmatpush1.msra.mxu0 %v1370
    %1392 = vmatprep.subr.mxu0 0.0
    %1393 = vmatpush1.msra.mxu0 0.0
    %1394 = vmatprep.subr.mxu0 0.0
    %1395 = vmatpush1.msra.mxu0 0.0
    %1396 = vmatprep.subr.mxu0 0.0
    %1397 = vmatpush1.msra.mxu0 0.0
    %1398 = vmatprep.subr.mxu0 0.0
    %1399 = vmatpush1.msra.mxu0 0.0
    %1400 = vmatprep.subr.mxu0 0.0
    %1401 = vmatpush1.msra.mxu0 0.0
    %1402 = vmatprep.subr.mxu0 0.0
    %1403 = vmatpush1.msra.mxu0 0.0
    %1404 = vmatprep.subr.mxu0 0.0
    %1405 = vmatpush1.msra.mxu0 0.0
    %1406 = vmatprep.subr.mxu0 0.0
    %1407 = vmatpush1.msra.mxu0 0.0
    %1408 = vmatprep.subr.mxu0 0.0
    %1409 = vmatpush1.msra.mxu0 0.0
    %1410 = vmatprep.subr.mxu0 0.0
    %1411 = vmatpush1.msra.mxu0 0.0
    %1412 = vmatprep.subr.mxu0 0.0
    %1413 = vmatpush1.msra.mxu0 0.0
    %1414 = vmatprep.subr.mxu0 0.0
    %1415 = vmatpush1.msra.mxu0 0.0
    %1416 = vmatprep.subr.mxu0 0.0
    %1417 = vmatpush1.msra.mxu0 0.0
    %1418 = vmatprep.subr.mxu0 0.0
    %1419 = vmatpush1.msra.mxu0 0.0
    %1420 = vmatprep.subr.mxu0 0.0
    %1421 = vmatpush1.msra.mxu0 0.0
    %1422 = vmatprep.subr.mxu0 0.0
    %1423 = vmatpush1.msra.mxu0 0.0
    %1424 = vmatprep.subr.mxu0 0.0
    %1425 = vmatpush1.msra.mxu0 0.0
    %1426 = vmatprep.subr.mxu0 0.0
    %1427 = vmatpush1.msra.mxu0 0.0
    %1428 = vmatprep.subr.mxu0 0.0
    %1429 = vmatpush1.msra.mxu0 0.0
    %1430 = vmatprep.subr.mxu0 0.0
    %1431 = vmatpush1.msra.mxu0 0.0
    %1432 = vmatprep.subr.mxu0 0.0
    %1433 = vmatpush1.msra.mxu0 0.0
    %1434 = vmatprep.subr.mxu0 0.0
    %1435 = vmatpush1.msra.mxu0 0.0
    %1436 = vmatprep.subr.mxu0 0.0
    %1437 = vmatpush1.msra.mxu0 0.0
    %1438 = vmatprep.subr.mxu0 0.0
    %1439 = vmatpush1.msra.mxu0 0.0
    %1440 = vmatprep.subr.mxu0 0.0
    %1441 = vmatpush1.msra.mxu0 0.0
    %1442 = vmatprep.subr.mxu0 0.0
    %1443 = vmatpush1.msra.mxu0 0.0
    %1444 = vmatprep.subr.mxu0 0.0
    %1445 = vmatpush1.msra.mxu0 0.0
    %1446 = vmatprep.subr.mxu0 0.0
    %1447 = vmatpush1.msra.mxu0 0.0
    %1448 = vmatprep.mubr.f32.mxu0 0.0
    %1449 = vmatmul.mubr.f32.gmra.mrb[0].mxu0 %v1379
    %v1450 = vpop.f32.mrb[0].mxu0
    %v1451 = vadd.f32 %v1376, %v1450
    %v1452 = vpop.f32.mrb[0].mxu0
    %1453 = vmatprep.mubr.f32.mxu0 0.0
    %1454 = vmatmul.mubr.f32.gmra.mrb[0].mxu0 %v1382
    %v1455 = vpop.f32.mrb[0].mxu0
    %v1456 = vadd.f32 %v1376, %v1455
    %v1457 = vpop.f32.mrb[0].mxu0
    %1458 = vdwg.mxu0
    %v1459 = vmul.f32 %v1451, 0.5
    %v1460 = vmul.f32 %v1456, 0.5
    %v1461 = vmul.f32 %v1451, 0.044715
    %v1462 = vmul.f32 %v1456, 0.044715
    %v1463 = vmul.f32 %v1461, %v1451
    %v1464 = vmul.f32 %v1462, %v1456
    %v1465 = vmul.f32 %v1463, %v1451
    %v1466 = vmul.f32 %v1464, %v1456
    %v1467 = vadd.f32 %v1451, %v1465
    %v1468 = vadd.f32 %v1456, %v1466
    %v1469 = vmul.f32 %v1467, 0.7978846
    %v1470 = vmul.f32 %v1468, 0.7978846
    %v1471 = vtanh.pop %v1469
    %v1472 = vtanh.pop %v1470
    %v1473 = vadd.f32 %v1471, 1.0
    %v1474 = vadd.f32 %v1472, 1.0
    %v1475 = vmul.f32 %v1459, %v1473
    %v1476 = vmul.f32 %v1460, %v1474
    %v1477 = vld [vmem:[%s19] sm:$0xff]
    %v1478 = vld [vmem:[%s19 + $0x8] sm:$0xff]
    %v1479 = vld [vmem:[%s19 + $0x10] sm:$0xff]
    %v1480 = vld [vmem:[%s19 + $0x18] sm:$0xff]
    %v1481 = vld [vmem:[%s19 + $0x20] sm:$0xff]
    %v1482 = vld [vmem:[%s19 + $0x28] sm:$0xff]
    %v1483 = vld [vmem:[%s19 + $0x30] sm:$0xff]
    %v1484 = vld [vmem:[%s19 + $0x38] sm:$0xff]
    %v1485 = vld [vmem:[%s19 + $0x40] sm:$0xff]
    %v1486 = vld [vmem:[%s19 + $0x48] sm:$0xff]
    %v1487 = vld [vmem:[%s19 + $0x50] sm:$0xff]
    %v1488 = vld [vmem:[%s19 + $0x58] sm:$0xff]
    %v1489 = vld [vmem:[%s19 + $0x60] sm:$0xff]
    %v1490 = vld [vmem:[%s19 + $0x68] sm:$0xff]
    %v1491 = vld [vmem:[%s19 + $0x70] sm:$0xff]
    %v1492 = vld [vmem:[%s19 + $0x78] sm:$0xff]
    %1493 = vmatprep.subr.mxu0 0.0
    %1494 = vmatpush1.msra.mxu0 %v1477
    %1495 = vmatprep.subr.mxu0 0.0
    %1496 = vmatpush1.msra.mxu0 %v1478
    %1497 = vmatprep.subr.mxu0 0.0
    %1498 = vmatpush1.msra.mxu0 %v1479
    %1499 = vmatprep.subr.mxu0 0.0
    %1500 = vmatpush1.msra.mxu0 %v1480
    %1501 = vmatprep.subr.mxu0 0.0
    %1502 = vmatpush1.msra.mxu0 %v1481
    %1503 = vmatprep.subr.mxu0 0.0
    %1504 = vmatpush1.msra.mxu0 %v1482
    %1505 = vmatprep.subr.mxu0 0.0
    %1506 = vmatpush1.msra.mxu0 %v1483
    %1507 = vmatprep.subr.mxu0 0.0
    %1508 = vmatpush1.msra.mxu0 %v1484
    %1509 = vmatprep.subr.mxu0 0.0
    %1510 = vmatpush1.msra.mxu0 %v1485
    %1511 = vmatprep.subr.mxu0 0.0
    %1512 = vmatpush1.msra.mxu0 %v1486
    %1513 = vmatprep.subr.mxu0 0.0
    %1514 = vmatpush1.msra.mxu0 %v1487
    %1515 = vmatprep.subr.mxu0 0.0
    %1516 = vmatpush1.msra.mxu0 %v1488
    %1517 = vmatprep.subr.mxu0 0.0
    %1518 = vmatpush1.msra.mxu0 %v1489
    %1519 = vmatprep.subr.mxu0 0.0
    %1520 = vmatpush1.msra.mxu0 %v1490
    %1521 = vmatprep.subr.mxu0 0.0
    %1522 = vmatpush1.msra.mxu0 %v1491
    %1523 = vmatprep.subr.mxu0 0.0
    %1524 = vmatpush1.msra.mxu0 %v1492
    %1525 = vmatprep.subr.mxu0 0.0
    %1526 = vmatpush1.msra.mxu0 0.0
    %1527 = vmatprep.subr.mxu0 0.0
    %1528 = vmatpush1.msra.mxu0 0.0
    %1529 = vmatprep.subr.mxu0 0.0
    %1530 = vmatpush1.msra.mxu0 0.0
    %1531 = vmatprep.subr.mxu0 0.0
    %1532 = vmatpush1.msra.mxu0 0.0
    %1533 = vmatprep.subr.mxu0 0.0
    %1534 = vmatpush1.msra.mxu0 0.0
    %1535 = vmatprep.subr.mxu0 0.0
    %1536 = vmatpush1.msra.mxu0 0.0
    %1537 = vmatprep.subr.mxu0 0.0
    %1538 = vmatpush1.msra.mxu0 0.0
    %1539 = vmatprep.subr.mxu0 0.0
    %1540 = vmatpush1.msra.mxu0 0.0
    %1541 = vmatprep.subr.mxu0 0.0
    %1542 = vmatpush1.msra.mxu0 0.0
    %1543 = vmatprep.subr.mxu0 0.0
    %1544 = vmatpush1.msra.mxu0 0.0
    %1545 = vmatprep.subr.mxu0 0.0
    %1546 = vmatpush1.msra.mxu0 0.0
    %1547 = vmatprep.subr.mxu0 0.0
    %1548 = vmatpush1.msra.mxu0 0.0
    %1549 = vmatprep.subr.mxu0 0.0
    %1550 = vmatpush1.msra.mxu0 0.0
    %1551 = vmatprep.subr.mxu0 0.0
    %1552 = vmatpush1.msra.mxu0 0.0
    %1553 = vmatprep.subr.mxu0 0.0
    %1554 = vmatpush1.msra.mxu0 0.0
    %1555 = vmatprep.subr.mxu0 0.0
    %1556 = vmatpush1.msra.mxu0 0.0
    %1557 = vmatprep.mubr.f32.mxu0 0.0
    %1558 = vmatmul.mubr.f32.gmra.mrb[0].mxu0 %v1475
    %v1559 = vpop.f32.mrb[0].mxu0
    %v1560 = vadd.f32 0.0, %v1559
    %v1561 = vpop.f32.mrb[0].mxu0
    %1562 = vmatprep.mubr.f32.mxu0 0.0
    %1563 = vmatmul.mubr.f32.gmra.mrb[0].mxu0 %v1476
    %v1564 = vpop.f32.mrb[0].mxu0
    %v1565 = vadd.f32 0.0, %v1564
    %v1566 = vpop.f32.mrb[0].mxu0
    %1567 = vdwg.mxu0
    %v1568 = vadd.f32 %v1321, %v1560
    %v1569 = vadd.f32 %v1322, %v1565
    %v1570 = vld [vmem:[%s20] sm:$0x1]
    %v1572 = vlaneseq
    %v1573 = vshrl.u32 %v1572, 7
    %v1574 = vsub.s32 0, %v1573
    %v1575 = vrot.slane %v1570, %v1574
    %v1577 = vadd.f32 %v1568, %v1575
    %v1578 = vadd.f32 %v1569, %v1575
    %s1579 = scalar_lea.vmem %s5, 1
    %v1580 = vld [vmem:[%s1579] sm:$0x1]
    %s1581 = scalar_lea.vmem %s6, 1
    %v1582 = vld [vmem:[%s1581] sm:$0x1]
    %v1583 = vsel %vm188, %v1577, 0.0
    %1584 = vadd.xlane.f32.xlu0 %v1583
    %v1585 = vpop.xlane.xlu0 %1584
    %v1586 = vsel %vm188, %v1578, 0.0
    %1587 = vadd.xlane.f32.xlu0 %v1586
    %v1588 = vpop.xlane.xlu0 %1587
    %v1589 = vmul.f32 %v1585, %v195
    %v1590 = vmul.f32 %v1588, %v195
    %v1591 = vsub.f32 %v1577, %v1589
    %v1592 = vsub.f32 %v1578, %v1590
    %v1593 = vmul.f32 %v1591, %v1591
    %v1594 = vmul.f32 %v1592, %v1592
    %v1595 = vsel %vm188, %v1593, 0.0
    %1596 = vadd.xlane.f32.xlu0 %v1595
    %v1597 = vpop.xlane.xlu0 %1596
    %v1598 = vsel %vm188, %v1594, 0.0
    %1599 = vadd.xlane.f32.xlu0 %v1598
    %v1600 = vpop.xlane.xlu0 %1599
    %v1601 = vmul.f32 %v1597, %v195
    %v1602 = vmul.f32 %v1600, %v195
    %v1603 = vadd.f32 %v1601, 1e-05
    %v1604 = vadd.f32 %v1602, 1e-05
    %v1605 = vrsqrt.pop %v1603
    %v1606 = vrsqrt.pop %v1604
    %v1607 = vmul.f32 %v1591, %v1605
    %v1608 = vmul.f32 %v1592, %v1606
    %v1610 = vlaneseq
    %v1611 = vshrl.u32 %v1610, 7
    %v1612 = vsub.s32 0, %v1611
    %v1613 = vrot.slane %v1580, %v1612
    %v1615 = vmul.f32 %v1607, %v1613
    %v1616 = vmul.f32 %v1608, %v1613
    %v1618 = vlaneseq
    %v1619 = vshrl.u32 %v1618, 7
    %v1620 = vsub.s32 0, %v1619
    %v1621 = vrot.slane %v1582, %v1620
    %v1623 = vadd.f32 %v1615, %v1621
    %v1624 = vadd.f32 %v1616, %v1621
    %s1625 = scalar_lea.vmem %s7, 64
    %v1626 = vld [vmem:[%s1625] sm:$0xff]
    %v1627 = vld [vmem:[%s1625 + $0x8] sm:$0xff]
    %v1628 = vld [vmem:[%s1625 + $0x10] sm:$0xff]
    %v1629 = vld [vmem:[%s1625 + $0x18] sm:$0xff]
    %s1630 = scalar_lea.vmem %s10, 2
    %v1631 = vld [vmem:[%s1630] sm:$0x1]
    %v1633 = vlaneseq
    %v1634 = vshrl.u32 %v1633, 7
    %v1635 = vsub.s32 0, %v1634
    %v1636 = vrot.slane %v1631, %v1635
    %v1639 = vsel %vm188, %v1623, 0
    %v1642 = vsel %vm188, %v1624, 0
    %1644 = vmatprep.subr.mxu0 0.0
    %1645 = vmatpush1.msra.mxu0 %v1626
    %1646 = vmatprep.subr.mxu0 0.0
    %1647 = vmatpush1.msra.mxu0 %v1627
    %1648 = vmatprep.subr.mxu0 0.0
    %1649 = vmatpush1.msra.mxu0 %v1628
    %1650 = vmatprep.subr.mxu0 0.0
    %1651 = vmatpush1.msra.mxu0 %v1629
    %1652 = vmatprep.subr.mxu0 0.0
    %1653 = vmatpush1.msra.mxu0 0.0
    %1654 = vmatprep.subr.mxu0 0.0
    %1655 = vmatpush1.msra.mxu0 0.0
    %1656 = vmatprep.subr.mxu0 0.0
    %1657 = vmatpush1.msra.mxu0 0.0
    %1658 = vmatprep.subr.mxu0 0.0
    %1659 = vmatpush1.msra.mxu0 0.0
    %1660 = vmatprep.subr.mxu0 0.0
    %1661 = vmatpush1.msra.mxu0 0.0
    %1662 = vmatprep.subr.mxu0 0.0
    %1663 = vmatpush1.msra.mxu0 0.0
    %1664 = vmatprep.subr.mxu0 0.0
    %1665 = vmatpush1.msra.mxu0 0.0
    %1666 = vmatprep.subr.mxu0 0.0
    %1667 = vmatpush1.msra.mxu0 0.0
    %1668 = vmatprep.subr.mxu0 0.0
    %1669 = vmatpush1.msra.mxu0 0.0
    %1670 = vmatprep.subr.mxu0 0.0
    %1671 = vmatpush1.msra.mxu0 0.0
    %1672 = vmatprep.subr.mxu0 0.0
    %1673 = vmatpush1.msra.mxu0 0.0
    %1674 = vmatprep.subr.mxu0 0.0
    %1675 = vmatpush1.msra.mxu0 0.0
    %1676 = vmatprep.subr.mxu0 0.0
    %1677 = vmatpush1.msra.mxu0 0.0
    %1678 = vmatprep.subr.mxu0 0.0
    %1679 = vmatpush1.msra.mxu0 0.0
    %1680 = vmatprep.subr.mxu0 0.0
    %1681 = vmatpush1.msra.mxu0 0.0
    %1682 = vmatprep.subr.mxu0 0.0
    %1683 = vmatpush1.msra.mxu0 0.0
    %1684 = vmatprep.subr.mxu0 0.0
    %1685 = vmatpush1.msra.mxu0 0.0
    %1686 = vmatprep.subr.mxu0 0.0
    %1687 = vmatpush1.msra.mxu0 0.0
    %1688 = vmatprep.subr.mxu0 0.0
    %1689 = vmatpush1.msra.mxu0 0.0
    %1690 = vmatprep.subr.mxu0 0.0
    %1691 = vmatpush1.msra.mxu0 0.0
    %1692 = vmatprep.subr.mxu0 0.0
    %1693 = vmatpush1.msra.mxu0 0.0
    %1694 = vmatprep.subr.mxu0 0.0
    %1695 = vmatpush1.msra.mxu0 0.0
    %1696 = vmatprep.subr.mxu0 0.0
    %1697 = vmatpush1.msra.mxu0 0.0
    %1698 = vmatprep.subr.mxu0 0.0
    %1699 = vmatpush1.msra.mxu0 0.0
    %1700 = vmatprep.subr.mxu0 0.0
    %1701 = vmatpush1.msra.mxu0 0.0
    %1702 = vmatprep.subr.mxu0 0.0
    %1703 = vmatpush1.msra.mxu0 0.0
    %1704 = vmatprep.subr.mxu0 0.0
    %1705 = vmatpush1.msra.mxu0 0.0
    %1706 = vmatprep.subr.mxu0 0.0
    %1707 = vmatpush1.msra.mxu0 0.0
    %1708 = vmatprep.mubr.f32.mxu0 0.0
    %1709 = vmatmul.mubr.f32.gmra.mrb[0].mxu0 %v1639
    %v1710 = vpop.f32.mrb[0].mxu0
    %v1711 = vadd.f32 %v1636, %v1710
    %v1712 = vpop.f32.mrb[0].mxu0
    %1713 = vmatprep.mubr.f32.mxu0 0.0
    %1714 = vmatmul.mubr.f32.gmra.mrb[0].mxu0 %v1642
    %v1715 = vpop.f32.mrb[0].mxu0
    %v1716 = vadd.f32 %v1636, %v1715
    %v1717 = vpop.f32.mrb[0].mxu0
    %1718 = vdwg.mxu0
    %v1719 = vmul.f32 %v1711, 0.25
    %v1720 = vmul.f32 %v1716, 0.25
    %s1721 = scalar_lea.vmem %s8, 64
    %v1722 = vld [vmem:[%s1721] sm:$0xff]
    %v1723 = vld [vmem:[%s1721 + $0x8] sm:$0xff]
    %v1724 = vld [vmem:[%s1721 + $0x10] sm:$0xff]
    %v1725 = vld [vmem:[%s1721 + $0x18] sm:$0xff]
    %s1726 = scalar_lea.vmem %s11, 2
    %v1727 = vld [vmem:[%s1726] sm:$0x1]
    %v1729 = vlaneseq
    %v1730 = vshrl.u32 %v1729, 7
    %v1731 = vsub.s32 0, %v1730
    %v1732 = vrot.slane %v1727, %v1731
    %1734 = vmatprep.subr.mxu0 0.0
    %1735 = vmatpush1.msra.mxu0 %v1722
    %1736 = vmatprep.subr.mxu0 0.0
    %1737 = vmatpush1.msra.mxu0 %v1723
    %1738 = vmatprep.subr.mxu0 0.0
    %1739 = vmatpush1.msra.mxu0 %v1724
    %1740 = vmatprep.subr.mxu0 0.0
    %1741 = vmatpush1.msra.mxu0 %v1725
    %1742 = vmatprep.subr.mxu0 0.0
    %1743 = vmatpush1.msra.mxu0 0.0
    %1744 = vmatprep.subr.mxu0 0.0
    %1745 = vmatpush1.msra.mxu0 0.0
    %1746 = vmatprep.subr.mxu0 0.0
    %1747 = vmatpush1.msra.mxu0 0.0
    %1748 = vmatprep.subr.mxu0 0.0
    %1749 = vmatpush1.msra.mxu0 0.0
    %1750 = vmatprep.subr.mxu0 0.0
    %1751 = vmatpush1.msra.mxu0 0.0
    %1752 = vmatprep.subr.mxu0 0.0
    %1753 = vmatpush1.msra.mxu0 0.0
    %1754 = vmatprep.subr.mxu0 0.0
    %1755 = vmatpush1.msra.mxu0 0.0
    %1756 = vmatprep.subr.mxu0 0.0
    %1757 = vmatpush1.msra.mxu0 0.0
    %1758 = vmatprep.subr.mxu0 0.0
    %1759 = vmatpush1.msra.mxu0 0.0
    %1760 = vmatprep.subr.mxu0 0.0
    %1761 = vmatpush1.msra.mxu0 0.0
    %1762 = vmatprep.subr.mxu0 0.0
    %1763 = vmatpush1.msra.mxu0 0.0
    %1764 = vmatprep.subr.mxu0 0.0
    %1765 = vmatpush1.msra.mxu0 0.0
    %1766 = vmatprep.subr.mxu0 0.0
    %1767 = vmatpush1.msra.mxu0 0.0
    %1768 = vmatprep.subr.mxu0 0.0
    %1769 = vmatpush1.msra.mxu0 0.0
    %1770 = vmatprep.subr.mxu0 0.0
    %1771 = vmatpush1.msra.mxu0 0.0
    %1772 = vmatprep.subr.mxu0 0.0
    %1773 = vmatpush1.msra.mxu0 0.0
    %1774 = vmatprep.subr.mxu0 0.0
    %1775 = vmatpush1.msra.mxu0 0.0
    %1776 = vmatprep.subr.mxu0 0.0
    %1777 = vmatpush1.msra.mxu0 0.0
    %1778 = vmatprep.subr.mxu0 0.0
    %1779 = vmatpush1.msra.mxu0 0.0
    %1780 = vmatprep.subr.mxu0 0.0
    %1781 = vmatpush1.msra.mxu0 0.0
    %1782 = vmatprep.subr.mxu0 0.0
    %1783 = vmatpush1.msra.mxu0 0.0
    %1784 = vmatprep.subr.mxu0 0.0
    %1785 = vmatpush1.msra.mxu0 0.0
    %1786 = vmatprep.subr.mxu0 0.0
    %1787 = vmatpush1.msra.mxu0 0.0
    %1788 = vmatprep.subr.mxu0 0.0
    %1789 = vmatpush1.msra.mxu0 0.0
    %1790 = vmatprep.subr.mxu0 0.0
    %1791 = vmatpush1.msra.mxu0 0.0
    %1792 = vmatprep.subr.mxu0 0.0
    %1793 = vmatpush1.msra.mxu0 0.0
    %1794 = vmatprep.subr.mxu0 0.0
    %1795 = vmatpush1.msra.mxu0 0.0
    %1796 = vmatprep.subr.mxu0 0.0
    %1797 = vmatpush1.msra.mxu0 0.0
    %1798 = vmatprep.mubr.f32.mxu0 0.0
    %1799 = vmatmul.mubr.f32.gmra.mrb[0].mxu0 %v1639
    %v1800 = vpop.f32.mrb[0].mxu0
    %v1801 = vadd.f32 %v1732, %v1800
    %v1802 = vpop.f32.mrb[0].mxu0
    %1803 = vmatprep.mubr.f32.mxu0 0.0
    %1804 = vmatmul.mubr.f32.gmra.mrb[0].mxu0 %v1642
    %v1805 = vpop.f32.mrb[0].mxu0
    %v1806 = vadd.f32 %v1732, %v1805
    %v1807 = vpop.f32.mrb[0].mxu0
    %1808 = vdwg.mxu0
    %s1809 = scalar_lea.vmem %s9, 64
    %v1810 = vld [vmem:[%s1809] sm:$0xff]
    %v1811 = vld [vmem:[%s1809 + $0x8] sm:$0xff]
    %v1812 = vld [vmem:[%s1809 + $0x10] sm:$0xff]
    %v1813 = vld [vmem:[%s1809 + $0x18] sm:$0xff]
    %s1814 = scalar_lea.vmem %s12, 2
    %v1815 = vld [vmem:[%s1814] sm:$0x1]
    %v1817 = vlaneseq
    %v1818 = vshrl.u32 %v1817, 7
    %v1819 = vsub.s32 0, %v1818
    %v1820 = vrot.slane %v1815, %v1819
    %1822 = vmatprep.subr.mxu0 0.0
    %1823 = vmatpush1.msra.mxu0 %v1810
    %1824 = vmatprep.subr.mxu0 0.0
    %1825 = vmatpush1.msra.mxu0 %v1811
    %1826 = vmatprep.subr.mxu0 0.0
    %1827 = vmatpush1.msra.mxu0 %v1812
    %1828 = vmatprep.subr.mxu0 0.0
    %1829 = vmatpush1.msra.mxu0 %v1813
    %1830 = vmatprep.subr.mxu0 0.0
    %1831 = vmatpush1.msra.mxu0 0.0
    %1832 = vmatprep.subr.mxu0 0.0
    %1833 = vmatpush1.msra.mxu0 0.0
    %1834 = vmatprep.subr.mxu0 0.0
    %1835 = vmatpush1.msra.mxu0 0.0
    %1836 = vmatprep.subr.mxu0 0.0
    %1837 = vmatpush1.msra.mxu0 0.0
    %1838 = vmatprep.subr.mxu0 0.0
    %1839 = vmatpush1.msra.mxu0 0.0
    %1840 = vmatprep.subr.mxu0 0.0
    %1841 = vmatpush1.msra.mxu0 0.0
    %1842 = vmatprep.subr.mxu0 0.0
    %1843 = vmatpush1.msra.mxu0 0.0
    %1844 = vmatprep.subr.mxu0 0.0
    %1845 = vmatpush1.msra.mxu0 0.0
    %1846 = vmatprep.subr.mxu0 0.0
    %1847 = vmatpush1.msra.mxu0 0.0
    %1848 = vmatprep.subr.mxu0 0.0
    %1849 = vmatpush1.msra.mxu0 0.0
    %1850 = vmatprep.subr.mxu0 0.0
    %1851 = vmatpush1.msra.mxu0 0.0
    %1852 = vmatprep.subr.mxu0 0.0
    %1853 = vmatpush1.msra.mxu0 0.0
    %1854 = vmatprep.subr.mxu0 0.0
    %1855 = vmatpush1.msra.mxu0 0.0
    %1856 = vmatprep.subr.mxu0 0.0
    %1857 = vmatpush1.msra.mxu0 0.0
    %1858 = vmatprep.subr.mxu0 0.0
    %1859 = vmatpush1.msra.mxu0 0.0
    %1860 = vmatprep.subr.mxu0 0.0
    %1861 = vmatpush1.msra.mxu0 0.0
    %1862 = vmatprep.subr.mxu0 0.0
    %1863 = vmatpush1.msra.mxu0 0.0
    %1864 = vmatprep.subr.mxu0 0.0
    %1865 = vmatpush1.msra.mxu0 0.0
    %1866 = vmatprep.subr.mxu0 0.0
    %1867 = vmatpush1.msra.mxu0 0.0
    %1868 = vmatprep.subr.mxu0 0.0
    %1869 = vmatpush1.msra.mxu0 0.0
    %1870 = vmatprep.subr.mxu0 0.0
    %1871 = vmatpush1.msra.mxu0 0.0
    %1872 = vmatprep.subr.mxu0 0.0
    %1873 = vmatpush1.msra.mxu0 0.0
    %1874 = vmatprep.subr.mxu0 0.0
    %1875 = vmatpush1.msra.mxu0 0.0
    %1876 = vmatprep.subr.mxu0 0.0
    %1877 = vmatpush1.msra.mxu0 0.0
    %1878 = vmatprep.subr.mxu0 0.0
    %1879 = vmatpush1.msra.mxu0 0.0
    %1880 = vmatprep.subr.mxu0 0.0
    %1881 = vmatpush1.msra.mxu0 0.0
    %1882 = vmatprep.subr.mxu0 0.0
    %1883 = vmatpush1.msra.mxu0 0.0
    %1884 = vmatprep.subr.mxu0 0.0
    %1885 = vmatpush1.msra.mxu0 0.0
    %1886 = vmatprep.mubr.f32.mxu0 0.0
    %1887 = vmatmul.mubr.f32.gmra.mrb[0].mxu0 %v1639
    %v1888 = vpop.f32.mrb[0].mxu0
    %v1889 = vadd.f32 %v1820, %v1888
    %v1890 = vpop.f32.mrb[0].mxu0
    %1891 = vmatprep.mubr.f32.mxu0 0.0
    %1892 = vmatmul.mubr.f32.gmra.mrb[0].mxu0 %v1642
    %v1893 = vpop.f32.mrb[0].mxu0
    %v1894 = vadd.f32 %v1820, %v1893
    %v1895 = vpop.f32.mrb[0].mxu0
    %1896 = vdwg.mxu0
    %v1898 = vsel %vm498, %v1719, 0
    %v1901 = vsel %vm498, %v1720, 0
    %v1904 = vsel %vm498, %v1801, 0
    %v1907 = vsel %vm498, %v1806, 0
    %1909 = vmatprep.subr.mxu0 0.0
    %1910 = vmatpush1.xpose.msra.mxu0 %v1904
    %1911 = vmatprep.subr.mxu0 0.0
    %1912 = vmatpush1.xpose.msra.mxu0 %v1907
    %1913 = vmatprep.subr.mxu0 0.0
    %1914 = vmatpush1.xpose.msra.mxu0 0.0
    %1915 = vmatprep.subr.mxu0 0.0
    %1916 = vmatpush1.xpose.msra.mxu0 0.0
    %1917 = vmatprep.subr.mxu0 0.0
    %1918 = vmatpush1.xpose.msra.mxu0 0.0
    %1919 = vmatprep.subr.mxu0 0.0
    %1920 = vmatpush1.xpose.msra.mxu0 0.0
    %1921 = vmatprep.subr.mxu0 0.0
    %1922 = vmatpush1.xpose.msra.mxu0 0.0
    %1923 = vmatprep.subr.mxu0 0.0
    %1924 = vmatpush1.xpose.msra.mxu0 0.0
    %1925 = vmatprep.subr.mxu0 0.0
    %1926 = vmatpush1.xpose.msra.mxu0 0.0
    %1927 = vmatprep.subr.mxu0 0.0
    %1928 = vmatpush1.xpose.msra.mxu0 0.0
    %1929 = vmatprep.subr.mxu0 0.0
    %1930 = vmatpush1.xpose.msra.mxu0 0.0
    %1931 = vmatprep.subr.mxu0 0.0
    %1932 = vmatpush1.xpose.msra.mxu0 0.0
    %1933 = vmatprep.subr.mxu0 0.0
    %1934 = vmatpush1.xpose.msra.mxu0 0.0
    %1935 = vmatprep.subr.mxu0 0.0
    %1936 = vmatpush1.xpose.msra.mxu0 0.0
    %1937 = vmatprep.subr.mxu0 0.0
    %1938 = vmatpush1.xpose.msra.mxu0 0.0
    %1939 = vmatprep.subr.mxu0 0.0
    %1940 = vmatpush1.xpose.msra.mxu0 0.0
    %1941 = vmatprep.subr.mxu0 0.0
    %1942 = vmatpush1.xpose.msra.mxu0 0.0
    %1943 = vmatprep.subr.mxu0 0.0
    %1944 = vmatpush1.xpose.msra.mxu0 0.0
    %1945 = vmatprep.subr.mxu0 0.0
    %1946 = vmatpush1.xpose.msra.mxu0 0.0
    %1947 = vmatprep.subr.mxu0 0.0
    %1948 = vmatpush1.xpose.msra.mxu0 0.0
    %1949 = vmatprep.subr.mxu0 0.0
    %1950 = vmatpush1.xpose.msra.mxu0 0.0
    %1951 = vmatprep.subr.mxu0 0.0
    %1952 = vmatpush1.xpose.msra.mxu0 0.0
    %1953 = vmatprep.subr.mxu0 0.0
    %1954 = vmatpush1.xpose.msra.mxu0 0.0
    %1955 = vmatprep.subr.mxu0 0.0
    %1956 = vmatpush1.xpose.msra.mxu0 0.0
    %1957 = vmatprep.subr.mxu0 0.0
    %1958 = vmatpush1.xpose.msra.mxu0 0.0
    %1959 = vmatprep.subr.mxu0 0.0
    %1960 = vmatpush1.xpose.msra.mxu0 0.0
    %1961 = vmatprep.subr.mxu0 0.0
    %1962 = vmatpush1.xpose.msra.mxu0 0.0
    %1963 = vmatprep.subr.mxu0 0.0
    %1964 = vmatpush1.xpose.msra.mxu0 0.0
    %1965 = vmatprep.subr.mxu0 0.0
    %1966 = vmatpush1.xpose.msra.mxu0 0.0
    %1967 = vmatprep.subr.mxu0 0.0
    %1968 = vmatpush1.xpose.msra.mxu0 0.0
    %1969 = vmatprep.subr.mxu0 0.0
    %1970 = vmatpush1.xpose.msra.mxu0 0.0
    %1971 = vmatprep.subr.mxu0 0.0
    %1972 = vmatpush1.xpose.msra.mxu0 0.0
    %1973 = vmatprep.mubr.f32.mxu0 0.0
    %1974 = vmatmul.mubr.f32.gmra.mrb[0].mxu0 %v1898
    %v1975 = vpop.f32.mrb[0].mxu0
    %v1976 = vadd.f32 %v184, %v1975
    %v1977 = vpop.f32.mrb[0].mxu0
    %1978 = vmatprep.mubr.f32.mxu0 0.0
    %1979 = vmatmul.mubr.f32.gmra.mrb[0].mxu0 %v1901
    %v1980 = vpop.f32.mrb[0].mxu0
    %v1981 = vadd.f32 %v185, %v1980
    %v1982 = vpop.f32.mrb[0].mxu0
    %1983 = vdwg.mxu0
    %v1984 = vsel %vm498, %v1976, -inf
    %1985 = vmax.xlane.f32.xlu0 %v1984
    %v1986 = vpop.xlane.xlu0 %1985
    %v1987 = vsel %vm498, %v1981, -inf
    %1988 = vmax.xlane.f32.xlu0 %v1987
    %v1989 = vpop.xlane.xlu0 %1988
    %v1990 = vsub.f32 %v1976, %v1986
    %v1991 = vsub.f32 %v1981, %v1989
    %v1992 = vmul.f32 %v1990, 1.442695
    %v1993 = vpow.pop %v1992
    %v1994 = vmul.f32 %v1991, 1.442695
    %v1995 = vpow.pop %v1994
    %v1996 = vsel %vm498, %v1993, 0.0
    %1997 = vadd.xlane.f32.xlu0 %v1996
    %v1998 = vpop.xlane.xlu0 %1997
    %v1999 = vsel %vm498, %v1995, 0.0
    %2000 = vadd.xlane.f32.xlu0 %v1999
    %v2001 = vpop.xlane.xlu0 %2000
    %v2002 = vrcp.pop %v1998
    %v2003 = vrcp.pop %v2001
    %v2004 = vmul.f32 %v1993, %v2002
    %v2005 = vmul.f32 %v1995, %v2003
    %v2007 = vsel %vm498, %v2004, 0
    %v2010 = vsel %vm498, %v2005, 0
    %2012 = vmatprep.subr.mxu0 0.0
    %2013 = vmatpush1.msra.mxu0 %v1889
    %2014 = vmatprep.subr.mxu0 0.0
    %2015 = vmatpush1.msra.mxu0 %v1894
    %2016 = vmatprep.subr.mxu0 0.0
    %2017 = vmatpush1.msra.mxu0 0.0
    %2018 = vmatprep.subr.mxu0 0.0
    %2019 = vmatpush1.msra.mxu0 0.0
    %2020 = vmatprep.subr.mxu0 0.0
    %2021 = vmatpush1.msra.mxu0 0.0
    %2022 = vmatprep.subr.mxu0 0.0
    %2023 = vmatpush1.msra.mxu0 0.0
    %2024 = vmatprep.subr.mxu0 0.0
    %2025 = vmatpush1.msra.mxu0 0.0
    %2026 = vmatprep.subr.mxu0 0.0
    %2027 = vmatpush1.msra.mxu0 0.0
    %2028 = vmatprep.subr.mxu0 0.0
    %2029 = vmatpush1.msra.mxu0 0.0
    %2030 = vmatprep.subr.mxu0 0.0
    %2031 = vmatpush1.msra.mxu0 0.0
    %2032 = vmatprep.subr.mxu0 0.0
    %2033 = vmatpush1.msra.mxu0 0.0
    %2034 = vmatprep.subr.mxu0 0.0
    %2035 = vmatpush1.msra.mxu0 0.0
    %2036 = vmatprep.subr.mxu0 0.0
    %2037 = vmatpush1.msra.mxu0 0.0
    %2038 = vmatprep.subr.mxu0 0.0
    %2039 = vmatpush1.msra.mxu0 0.0
    %2040 = vmatprep.subr.mxu0 0.0
    %2041 = vmatpush1.msra.mxu0 0.0
    %2042 = vmatprep.subr.mxu0 0.0
    %2043 = vmatpush1.msra.mxu0 0.0
    %2044 = vmatprep.subr.mxu0 0.0
    %2045 = vmatpush1.msra.mxu0 0.0
    %2046 = vmatprep.subr.mxu0 0.0
    %2047 = vmatpush1.msra.mxu0 0.0
    %2048 = vmatprep.subr.mxu0 0.0
    %2049 = vmatpush1.msra.mxu0 0.0
    %2050 = vmatprep.subr.mxu0 0.0
    %2051 = vmatpush1.msra.mxu0 0.0
    %2052 = vmatprep.subr.mxu0 0.0
    %2053 = vmatpush1.msra.mxu0 0.0
    %2054 = vmatprep.subr.mxu0 0.0
    %2055 = vmatpush1.msra.mxu0 0.0
    %2056 = vmatprep.subr.mxu0 0.0
    %2057 = vmatpush1.msra.mxu0 0.0
    %2058 = vmatprep.subr.mxu0 0.0
    %2059 = vmatpush1.msra.mxu0 0.0
    %2060 = vmatprep.subr.mxu0 0.0
    %2061 = vmatpush1.msra.mxu0 0.0
    %2062 = vmatprep.subr.mxu0 0.0
    %2063 = vmatpush1.msra.mxu0 0.0
    %2064 = vmatprep.subr.mxu0 0.0
    %2065 = vmatpush1.msra.mxu0 0.0
    %2066 = vmatprep.subr.mxu0 0.0
    %2067 = vmatpush1.msra.mxu0 0.0
    %2068 = vmatprep.subr.mxu0 0.0
    %2069 = vmatpush1.msra.mxu0 0.0
    %2070 = vmatprep.subr.mxu0 0.0
    %2071 = vmatpush1.msra.mxu0 0.0
    %2072 = vmatprep.subr.mxu0 0.0
    %2073 = vmatpush1.msra.mxu0 0.0
    %2074 = vmatprep.subr.mxu0 0.0
    %2075 = vmatpush1.msra.mxu0 0.0
    %2076 = vmatprep.mubr.f32.mxu0 0.0
    %2077 = vmatmul.mubr.f32.gmra.mrb[0].mxu0 %v2007
    %v2078 = vpop.f32.mrb[0].mxu0
    %v2079 = vadd.f32 0.0, %v2078
    %v2080 = vpop.f32.mrb[0].mxu0
    %2081 = vmatprep.mubr.f32.mxu0 0.0
    %2082 = vmatmul.mubr.f32.gmra.mrb[0].mxu0 %v2010
    %v2083 = vpop.f32.mrb[0].mxu0
    %v2084 = vadd.f32 0.0, %v2083
    %v2085 = vpop.f32.mrb[0].mxu0
    %2086 = vdwg.mxu0
    %s2087 = scalar_lea.vmem %s13, 32
    %v2088 = vld [vmem:[%s2087] sm:$0xff]
    %v2089 = vld [vmem:[%s2087 + $0x8] sm:$0xff]
    %s2090 = scalar_lea.vmem %s7, 96
    %v2091 = vld [vmem:[%s2090] sm:$0xff]
    %v2092 = vld [vmem:[%s2090 + $0x8] sm:$0xff]
    %v2093 = vld [vmem:[%s2090 + $0x10] sm:$0xff]
    %v2094 = vld [vmem:[%s2090 + $0x18] sm:$0xff]
    %s2095 = scalar_lea.vmem %s10, 3
    %v2096 = vld [vmem:[%s2095] sm:$0x1]
    %v2098 = vlaneseq
    %v2099 = vshrl.u32 %v2098, 7
    %v2100 = vsub.s32 0, %v2099
    %v2101 = vrot.slane %v2096, %v2100
    %2103 = vmatprep.subr.mxu0 0.0
    %2104 = vmatpush1.msra.mxu0 %v2091
    %2105 = vmatprep.subr.mxu0 0.0
    %2106 = vmatpush1.msra.mxu0 %v2092
    %2107 = vmatprep.subr.mxu0 0.0
    %2108 = vmatpush1.msra.mxu0 %v2093
    %2109 = vmatprep.subr.mxu0 0.0
    %2110 = vmatpush1.msra.mxu0 %v2094
    %2111 = vmatprep.subr.mxu0 0.0
    %2112 = vmatpush1.msra.mxu0 0.0
    %2113 = vmatprep.subr.mxu0 0.0
    %2114 = vmatpush1.msra.mxu0 0.0
    %2115 = vmatprep.subr.mxu0 0.0
    %2116 = vmatpush1.msra.mxu0 0.0
    %2117 = vmatprep.subr.mxu0 0.0
    %2118 = vmatpush1.msra.mxu0 0.0
    %2119 = vmatprep.subr.mxu0 0.0
    %2120 = vmatpush1.msra.mxu0 0.0
    %2121 = vmatprep.subr.mxu0 0.0
    %2122 = vmatpush1.msra.mxu0 0.0
    %2123 = vmatprep.subr.mxu0 0.0
    %2124 = vmatpush1.msra.mxu0 0.0
    %2125 = vmatprep.subr.mxu0 0.0
    %2126 = vmatpush1.msra.mxu0 0.0
    %2127 = vmatprep.subr.mxu0 0.0
    %2128 = vmatpush1.msra.mxu0 0.0
    %2129 = vmatprep.subr.mxu0 0.0
    %2130 = vmatpush1.msra.mxu0 0.0
    %2131 = vmatprep.subr.mxu0 0.0
    %2132 = vmatpush1.msra.mxu0 0.0
    %2133 = vmatprep.subr.mxu0 0.0
    %2134 = vmatpush1.msra.mxu0 0.0
    %2135 = vmatprep.subr.mxu0 0.0
    %2136 = vmatpush1.msra.mxu0 0.0
    %2137 = vmatprep.subr.mxu0 0.0
    %2138 = vmatpush1.msra.mxu0 0.0
    %2139 = vmatprep.subr.mxu0 0.0
    %2140 = vmatpush1.msra.mxu0 0.0
    %2141 = vmatprep.subr.mxu0 0.0
    %2142 = vmatpush1.msra.mxu0 0.0
    %2143 = vmatprep.subr.mxu0 0.0
    %2144 = vmatpush1.msra.mxu0 0.0
    %2145 = vmatprep.subr.mxu0 0.0
    %2146 = vmatpush1.msra.mxu0 0.0
    %2147 = vmatprep.subr.mxu0 0.0
    %2148 = vmatpush1.msra.mxu0 0.0
    %2149 = vmatprep.subr.mxu0 0.0
    %2150 = vmatpush1.msra.mxu0 0.0
    %2151 = vmatprep.subr.mxu0 0.0
    %2152 = vmatpush1.msra.mxu0 0.0
    %2153 = vmatprep.subr.mxu0 0.0
    %2154 = vmatpush1.msra.mxu0 0.0
    %2155 = vmatprep.subr.mxu0 0.0
    %2156 = vmatpush1.msra.mxu0 0.0
    %2157 = vmatprep.subr.mxu0 0.0
    %2158 = vmatpush1.msra.mxu0 0.0
    %2159 = vmatprep.subr.mxu0 0.0
    %2160 = vmatpush1.msra.mxu0 0.0
    %2161 = vmatprep.subr.mxu0 0.0
    %2162 = vmatpush1.msra.mxu0 0.0
    %2163 = vmatprep.subr.mxu0 0.0
    %2164 = vmatpush1.msra.mxu0 0.0
    %2165 = vmatprep.subr.mxu0 0.0
    %2166 = vmatpush1.msra.mxu0 0.0
    %2167 = vmatprep.mubr.f32.mxu0 0.0
    %2168 = vmatmul.mubr.f32.gmra.mrb[0].mxu0 %v1639
    %v2169 = vpop.f32.mrb[0].mxu0
    %v2170 = vadd.f32 %v2101, %v2169
    %v2171 = vpop.f32.mrb[0].mxu0
    %2172 = vmatprep.mubr.f32.mxu0 0.0
    %2173 = vmatmul.mubr.f32.gmra.mrb[0].mxu0 %v1642
    %v2174 = vpop.f32.mrb[0].mxu0
    %v2175 = vadd.f32 %v2101, %v2174
    %v2176 = vpop.f32.mrb[0].mxu0
    %2177 = vdwg.mxu0
    %v2178 = vmul.f32 %v2170, 0.25
    %v2179 = vmul.f32 %v2175, 0.25
    %s2180 = scalar_lea.vmem %s8, 96
    %v2181 = vld [vmem:[%s2180] sm:$0xff]
    %v2182 = vld [vmem:[%s2180 + $0x8] sm:$0xff]
    %v2183 = vld [vmem:[%s2180 + $0x10] sm:$0xff]
    %v2184 = vld [vmem:[%s2180 + $0x18] sm:$0xff]
    %s2185 = scalar_lea.vmem %s11, 3
    %v2186 = vld [vmem:[%s2185] sm:$0x1]
    %v2188 = vlaneseq
    %v2189 = vshrl.u32 %v2188, 7
    %v2190 = vsub.s32 0, %v2189
    %v2191 = vrot.slane %v2186, %v2190
    %2193 = vmatprep.subr.mxu0 0.0
    %2194 = vmatpush1.msra.mxu0 %v2181
    %2195 = vmatprep.subr.mxu0 0.0
    %2196 = vmatpush1.msra.mxu0 %v2182
    %2197 = vmatprep.subr.mxu0 0.0
    %2198 = vmatpush1.msra.mxu0 %v2183
    %2199 = vmatprep.subr.mxu0 0.0
    %2200 = vmatpush1.msra.mxu0 %v2184
    %2201 = vmatprep.subr.mxu0 0.0
    %2202 = vmatpush1.msra.mxu0 0.0
    %2203 = vmatprep.subr.mxu0 0.0
    %2204 = vmatpush1.msra.mxu0 0.0
    %2205 = vmatprep.subr.mxu0 0.0
    %2206 = vmatpush1.msra.mxu0 0.0
    %2207 = vmatprep.subr.mxu0 0.0
    %2208 = vmatpush1.msra.mxu0 0.0
    %2209 = vmatprep.subr.mxu0 0.0
    %2210 = vmatpush1.msra.mxu0 0.0
    %2211 = vmatprep.subr.mxu0 0.0
    %2212 = vmatpush1.msra.mxu0 0.0
    %2213 = vmatprep.subr.mxu0 0.0
    %2214 = vmatpush1.msra.mxu0 0.0
    %2215 = vmatprep.subr.mxu0 0.0
    %2216 = vmatpush1.msra.mxu0 0.0
    %2217 = vmatprep.subr.mxu0 0.0
    %2218 = vmatpush1.msra.mxu0 0.0
    %2219 = vmatprep.subr.mxu0 0.0
    %2220 = vmatpush1.msra.mxu0 0.0
    %2221 = vmatprep.subr.mxu0 0.0
    %2222 = vmatpush1.msra.mxu0 0.0
    %2223 = vmatprep.subr.mxu0 0.0
    %2224 = vmatpush1.msra.mxu0 0.0
    %2225 = vmatprep.subr.mxu0 0.0
    %2226 = vmatpush1.msra.mxu0 0.0
    %2227 = vmatprep.subr.mxu0 0.0
    %2228 = vmatpush1.msra.mxu0 0.0
    %2229 = vmatprep.subr.mxu0 0.0
    %2230 = vmatpush1.msra.mxu0 0.0
    %2231 = vmatprep.subr.mxu0 0.0
    %2232 = vmatpush1.msra.mxu0 0.0
    %2233 = vmatprep.subr.mxu0 0.0
    %2234 = vmatpush1.msra.mxu0 0.0
    %2235 = vmatprep.subr.mxu0 0.0
    %2236 = vmatpush1.msra.mxu0 0.0
    %2237 = vmatprep.subr.mxu0 0.0
    %2238 = vmatpush1.msra.mxu0 0.0
    %2239 = vmatprep.subr.mxu0 0.0
    %2240 = vmatpush1.msra.mxu0 0.0
    %2241 = vmatprep.subr.mxu0 0.0
    %2242 = vmatpush1.msra.mxu0 0.0
    %2243 = vmatprep.subr.mxu0 0.0
    %2244 = vmatpush1.msra.mxu0 0.0
    %2245 = vmatprep.subr.mxu0 0.0
    %2246 = vmatpush1.msra.mxu0 0.0
    %2247 = vmatprep.subr.mxu0 0.0
    %2248 = vmatpush1.msra.mxu0 0.0
    %2249 = vmatprep.subr.mxu0 0.0
    %2250 = vmatpush1.msra.mxu0 0.0
    %2251 = vmatprep.subr.mxu0 0.0
    %2252 = vmatpush1.msra.mxu0 0.0
    %2253 = vmatprep.subr.mxu0 0.0
    %2254 = vmatpush1.msra.mxu0 0.0
    %2255 = vmatprep.subr.mxu0 0.0
    %2256 = vmatpush1.msra.mxu0 0.0
    %2257 = vmatprep.mubr.f32.mxu0 0.0
    %2258 = vmatmul.mubr.f32.gmra.mrb[0].mxu0 %v1639
    %v2259 = vpop.f32.mrb[0].mxu0
    %v2260 = vadd.f32 %v2191, %v2259
    %v2261 = vpop.f32.mrb[0].mxu0
    %2262 = vmatprep.mubr.f32.mxu0 0.0
    %2263 = vmatmul.mubr.f32.gmra.mrb[0].mxu0 %v1642
    %v2264 = vpop.f32.mrb[0].mxu0
    %v2265 = vadd.f32 %v2191, %v2264
    %v2266 = vpop.f32.mrb[0].mxu0
    %2267 = vdwg.mxu0
    %s2268 = scalar_lea.vmem %s9, 96
    %v2269 = vld [vmem:[%s2268] sm:$0xff]
    %v2270 = vld [vmem:[%s2268 + $0x8] sm:$0xff]
    %v2271 = vld [vmem:[%s2268 + $0x10] sm:$0xff]
    %v2272 = vld [vmem:[%s2268 + $0x18] sm:$0xff]
    %s2273 = scalar_lea.vmem %s12, 3
    %v2274 = vld [vmem:[%s2273] sm:$0x1]
    %v2276 = vlaneseq
    %v2277 = vshrl.u32 %v2276, 7
    %v2278 = vsub.s32 0, %v2277
    %v2279 = vrot.slane %v2274, %v2278
    %2281 = vmatprep.subr.mxu0 0.0
    %2282 = vmatpush1.msra.mxu0 %v2269
    %2283 = vmatprep.subr.mxu0 0.0
    %2284 = vmatpush1.msra.mxu0 %v2270
    %2285 = vmatprep.subr.mxu0 0.0
    %2286 = vmatpush1.msra.mxu0 %v2271
    %2287 = vmatprep.subr.mxu0 0.0
    %2288 = vmatpush1.msra.mxu0 %v2272
    %2289 = vmatprep.subr.mxu0 0.0
    %2290 = vmatpush1.msra.mxu0 0.0
    %2291 = vmatprep.subr.mxu0 0.0
    %2292 = vmatpush1.msra.mxu0 0.0
    %2293 = vmatprep.subr.mxu0 0.0
    %2294 = vmatpush1.msra.mxu0 0.0
    %2295 = vmatprep.subr.mxu0 0.0
    %2296 = vmatpush1.msra.mxu0 0.0
    %2297 = vmatprep.subr.mxu0 0.0
    %2298 = vmatpush1.msra.mxu0 0.0
    %2299 = vmatprep.subr.mxu0 0.0
    %2300 = vmatpush1.msra.mxu0 0.0
    %2301 = vmatprep.subr.mxu0 0.0
    %2302 = vmatpush1.msra.mxu0 0.0
    %2303 = vmatprep.subr.mxu0 0.0
    %2304 = vmatpush1.msra.mxu0 0.0
    %2305 = vmatprep.subr.mxu0 0.0
    %2306 = vmatpush1.msra.mxu0 0.0
    %2307 = vmatprep.subr.mxu0 0.0
    %2308 = vmatpush1.msra.mxu0 0.0
    %2309 = vmatprep.subr.mxu0 0.0
    %2310 = vmatpush1.msra.mxu0 0.0
    %2311 = vmatprep.subr.mxu0 0.0
    %2312 = vmatpush1.msra.mxu0 0.0
    %2313 = vmatprep.subr.mxu0 0.0
    %2314 = vmatpush1.msra.mxu0 0.0
    %2315 = vmatprep.subr.mxu0 0.0
    %2316 = vmatpush1.msra.mxu0 0.0
    %2317 = vmatprep.subr.mxu0 0.0
    %2318 = vmatpush1.msra.mxu0 0.0
    %2319 = vmatprep.subr.mxu0 0.0
    %2320 = vmatpush1.msra.mxu0 0.0
    %2321 = vmatprep.subr.mxu0 0.0
    %2322 = vmatpush1.msra.mxu0 0.0
    %2323 = vmatprep.subr.mxu0 0.0
    %2324 = vmatpush1.msra.mxu0 0.0
    %2325 = vmatprep.subr.mxu0 0.0
    %2326 = vmatpush1.msra.mxu0 0.0
    %2327 = vmatprep.subr.mxu0 0.0
    %2328 = vmatpush1.msra.mxu0 0.0
    %2329 = vmatprep.subr.mxu0 0.0
    %2330 = vmatpush1.msra.mxu0 0.0
    %2331 = vmatprep.subr.mxu0 0.0
    %2332 = vmatpush1.msra.mxu0 0.0
    %2333 = vmatprep.subr.mxu0 0.0
    %2334 = vmatpush1.msra.mxu0 0.0
    %2335 = vmatprep.subr.mxu0 0.0
    %2336 = vmatpush1.msra.mxu0 0.0
    %2337 = vmatprep.subr.mxu0 0.0
    %2338 = vmatpush1.msra.mxu0 0.0
    %2339 = vmatprep.subr.mxu0 0.0
    %2340 = vmatpush1.msra.mxu0 0.0
    %2341 = vmatprep.subr.mxu0 0.0
    %2342 = vmatpush1.msra.mxu0 0.0
    %2343 = vmatprep.subr.mxu0 0.0
    %2344 = vmatpush1.msra.mxu0 0.0
    %2345 = vmatprep.mubr.f32.mxu0 0.0
    %2346 = vmatmul.mubr.f32.gmra.mrb[0].mxu0 %v1639
    %v2347 = vpop.f32.mrb[0].mxu0
    %v2348 = vadd.f32 %v2279, %v2347
    %v2349 = vpop.f32.mrb[0].mxu0
    %2350 = vmatprep.mubr.f32.mxu0 0.0
    %2351 = vmatmul.mubr.f32.gmra.mrb[0].mxu0 %v1642
    %v2352 = vpop.f32.mrb[0].mxu0
    %v2353 = vadd.f32 %v2279, %v2352
    %v2354 = vpop.f32.mrb[0].mxu0
    %2355 = vdwg.mxu0
    %v2357 = vsel %vm498, %v2178, 0
    %v2360 = vsel %vm498, %v2179, 0
    %v2363 = vsel %vm498, %v2260, 0
    %v2366 = vsel %vm498, %v2265, 0
    %2368 = vmatprep.subr.mxu0 0.0
    %2369 = vmatpush1.xpose.msra.mxu0 %v2363
    %2370 = vmatprep.subr.mxu0 0.0
    %2371 = vmatpush1.xpose.msra.mxu0 %v2366
    %2372 = vmatprep.subr.mxu0 0.0
    %2373 = vmatpush1.xpose.msra.mxu0 0.0
    %2374 = vmatprep.subr.mxu0 0.0
    %2375 = vmatpush1.xpose.msra.mxu0 0.0
    %2376 = vmatprep.subr.mxu0 0.0
    %2377 = vmatpush1.xpose.msra.mxu0 0.0
    %2378 = vmatprep.subr.mxu0 0.0
    %2379 = vmatpush1.xpose.msra.mxu0 0.0
    %2380 = vmatprep.subr.mxu0 0.0
    %2381 = vmatpush1.xpose.msra.mxu0 0.0
    %2382 = vmatprep.subr.mxu0 0.0
    %2383 = vmatpush1.xpose.msra.mxu0 0.0
    %2384 = vmatprep.subr.mxu0 0.0
    %2385 = vmatpush1.xpose.msra.mxu0 0.0
    %2386 = vmatprep.subr.mxu0 0.0
    %2387 = vmatpush1.xpose.msra.mxu0 0.0
    %2388 = vmatprep.subr.mxu0 0.0
    %2389 = vmatpush1.xpose.msra.mxu0 0.0
    %2390 = vmatprep.subr.mxu0 0.0
    %2391 = vmatpush1.xpose.msra.mxu0 0.0
    %2392 = vmatprep.subr.mxu0 0.0
    %2393 = vmatpush1.xpose.msra.mxu0 0.0
    %2394 = vmatprep.subr.mxu0 0.0
    %2395 = vmatpush1.xpose.msra.mxu0 0.0
    %2396 = vmatprep.subr.mxu0 0.0
    %2397 = vmatpush1.xpose.msra.mxu0 0.0
    %2398 = vmatprep.subr.mxu0 0.0
    %2399 = vmatpush1.xpose.msra.mxu0 0.0
    %2400 = vmatprep.subr.mxu0 0.0
    %2401 = vmatpush1.xpose.msra.mxu0 0.0
    %2402 = vmatprep.subr.mxu0 0.0
    %2403 = vmatpush1.xpose.msra.mxu0 0.0
    %2404 = vmatprep.subr.mxu0 0.0
    %2405 = vmatpush1.xpose.msra.mxu0 0.0
    %2406 = vmatprep.subr.mxu0 0.0
    %2407 = vmatpush1.xpose.msra.mxu0 0.0
    %2408 = vmatprep.subr.mxu0 0.0
    %2409 = vmatpush1.xpose.msra.mxu0 0.0
    %2410 = vmatprep.subr.mxu0 0.0
    %2411 = vmatpush1.xpose.msra.mxu0 0.0
    %2412 = vmatprep.subr.mxu0 0.0
    %2413 = vmatpush1.xpose.msra.mxu0 0.0
    %2414 = vmatprep.subr.mxu0 0.0
    %2415 = vmatpush1.xpose.msra.mxu0 0.0
    %2416 = vmatprep.subr.mxu0 0.0
    %2417 = vmatpush1.xpose.msra.mxu0 0.0
    %2418 = vmatprep.subr.mxu0 0.0
    %2419 = vmatpush1.xpose.msra.mxu0 0.0
    %2420 = vmatprep.subr.mxu0 0.0
    %2421 = vmatpush1.xpose.msra.mxu0 0.0
    %2422 = vmatprep.subr.mxu0 0.0
    %2423 = vmatpush1.xpose.msra.mxu0 0.0
    %2424 = vmatprep.subr.mxu0 0.0
    %2425 = vmatpush1.xpose.msra.mxu0 0.0
    %2426 = vmatprep.subr.mxu0 0.0
    %2427 = vmatpush1.xpose.msra.mxu0 0.0
    %2428 = vmatprep.subr.mxu0 0.0
    %2429 = vmatpush1.xpose.msra.mxu0 0.0
    %2430 = vmatprep.subr.mxu0 0.0
    %2431 = vmatpush1.xpose.msra.mxu0 0.0
    %2432 = vmatprep.mubr.f32.mxu0 0.0
    %2433 = vmatmul.mubr.f32.gmra.mrb[0].mxu0 %v2357
    %v2434 = vpop.f32.mrb[0].mxu0
    %v2435 = vadd.f32 %v184, %v2434
    %v2436 = vpop.f32.mrb[0].mxu0
    %2437 = vmatprep.mubr.f32.mxu0 0.0
    %2438 = vmatmul.mubr.f32.gmra.mrb[0].mxu0 %v2360
    %v2439 = vpop.f32.mrb[0].mxu0
    %v2440 = vadd.f32 %v185, %v2439
    %v2441 = vpop.f32.mrb[0].mxu0
    %2442 = vdwg.mxu0
    %v2443 = vsel %vm498, %v2435, -inf
    %2444 = vmax.xlane.f32.xlu0 %v2443
    %v2445 = vpop.xlane.xlu0 %2444
    %v2446 = vsel %vm498, %v2440, -inf
    %2447 = vmax.xlane.f32.xlu0 %v2446
    %v2448 = vpop.xlane.xlu0 %2447
    %v2449 = vsub.f32 %v2435, %v2445
    %v2450 = vsub.f32 %v2440, %v2448
    %v2451 = vmul.f32 %v2449, 1.442695
    %v2452 = vpow.pop %v2451
    %v2453 = vmul.f32 %v2450, 1.442695
    %v2454 = vpow.pop %v2453
    %v2455 = vsel %vm498, %v2452, 0.0
    %2456 = vadd.xlane.f32.xlu0 %v2455
    %v2457 = vpop.xlane.xlu0 %2456
    %v2458 = vsel %vm498, %v2454, 0.0
    %2459 = vadd.xlane.f32.xlu0 %v2458
    %v2460 = vpop.xlane.xlu0 %2459
    %v2461 = vrcp.pop %v2457
    %v2462 = vrcp.pop %v2460
    %v2463 = vmul.f32 %v2452, %v2461
    %v2464 = vmul.f32 %v2454, %v2462
    %v2466 = vsel %vm498, %v2463, 0
    %v2469 = vsel %vm498, %v2464, 0
    %2471 = vmatprep.subr.mxu0 0.0
    %2472 = vmatpush1.msra.mxu0 %v2348
    %2473 = vmatprep.subr.mxu0 0.0
    %2474 = vmatpush1.msra.mxu0 %v2353
    %2475 = vmatprep.subr.mxu0 0.0
    %2476 = vmatpush1.msra.mxu0 0.0
    %2477 = vmatprep.subr.mxu0 0.0
    %2478 = vmatpush1.msra.mxu0 0.0
    %2479 = vmatprep.subr.mxu0 0.0
    %2480 = vmatpush1.msra.mxu0 0.0
    %2481 = vmatprep.subr.mxu0 0.0
    %2482 = vmatpush1.msra.mxu0 0.0
    %2483 = vmatprep.subr.mxu0 0.0
    %2484 = vmatpush1.msra.mxu0 0.0
    %2485 = vmatprep.subr.mxu0 0.0
    %2486 = vmatpush1.msra.mxu0 0.0
    %2487 = vmatprep.subr.mxu0 0.0
    %2488 = vmatpush1.msra.mxu0 0.0
    %2489 = vmatprep.subr.mxu0 0.0
    %2490 = vmatpush1.msra.mxu0 0.0
    %2491 = vmatprep.subr.mxu0 0.0
    %2492 = vmatpush1.msra.mxu0 0.0
    %2493 = vmatprep.subr.mxu0 0.0
    %2494 = vmatpush1.msra.mxu0 0.0
    %2495 = vmatprep.subr.mxu0 0.0
    %2496 = vmatpush1.msra.mxu0 0.0
    %2497 = vmatprep.subr.mxu0 0.0
    %2498 = vmatpush1.msra.mxu0 0.0
    %2499 = vmatprep.subr.mxu0 0.0
    %2500 = vmatpush1.msra.mxu0 0.0
    %2501 = vmatprep.subr.mxu0 0.0
    %2502 = vmatpush1.msra.mxu0 0.0
    %2503 = vmatprep.subr.mxu0 0.0
    %2504 = vmatpush1.msra.mxu0 0.0
    %2505 = vmatprep.subr.mxu0 0.0
    %2506 = vmatpush1.msra.mxu0 0.0
    %2507 = vmatprep.subr.mxu0 0.0
    %2508 = vmatpush1.msra.mxu0 0.0
    %2509 = vmatprep.subr.mxu0 0.0
    %2510 = vmatpush1.msra.mxu0 0.0
    %2511 = vmatprep.subr.mxu0 0.0
    %2512 = vmatpush1.msra.mxu0 0.0
    %2513 = vmatprep.subr.mxu0 0.0
    %2514 = vmatpush1.msra.mxu0 0.0
    %2515 = vmatprep.subr.mxu0 0.0
    %2516 = vmatpush1.msra.mxu0 0.0
    %2517 = vmatprep.subr.mxu0 0.0
    %2518 = vmatpush1.msra.mxu0 0.0
    %2519 = vmatprep.subr.mxu0 0.0
    %2520 = vmatpush1.msra.mxu0 0.0
    %2521 = vmatprep.subr.mxu0 0.0
    %2522 = vmatpush1.msra.mxu0 0.0
    %2523 = vmatprep.subr.mxu0 0.0
    %2524 = vmatpush1.msra.mxu0 0.0
    %2525 = vmatprep.subr.mxu0 0.0
    %2526 = vmatpush1.msra.mxu0 0.0
    %2527 = vmatprep.subr.mxu0 0.0
    %2528 = vmatpush1.msra.mxu0 0.0
    %2529 = vmatprep.subr.mxu0 0.0
    %2530 = vmatpush1.msra.mxu0 0.0
    %2531 = vmatprep.subr.mxu0 0.0
    %2532 = vmatpush1.msra.mxu0 0.0
    %2533 = vmatprep.subr.mxu0 0.0
    %2534 = vmatpush1.msra.mxu0 0.0
    %2535 = vmatprep.mubr.f32.mxu0 0.0
    %2536 = vmatmul.mubr.f32.gmra.mrb[0].mxu0 %v2466
    %v2537 = vpop.f32.mrb[0].mxu0
    %v2538 = vadd.f32 0.0, %v2537
    %v2539 = vpop.f32.mrb[0].mxu0
    %2540 = vmatprep.mubr.f32.mxu0 0.0
    %2541 = vmatmul.mubr.f32.gmra.mrb[0].mxu0 %v2469
    %v2542 = vpop.f32.mrb[0].mxu0
    %v2543 = vadd.f32 0.0, %v2542
    %v2544 = vpop.f32.mrb[0].mxu0
    %2545 = vdwg.mxu0
    %s2546 = scalar_lea.vmem %s13, 48
    %v2547 = vld [vmem:[%s2546] sm:$0xff]
    %v2548 = vld [vmem:[%s2546 + $0x8] sm:$0xff]
    %v2550 = vsel %vm498, %v2538, 0
    %v2553 = vsel %vm498, %v2543, 0
    %2555 = vmatprep.subr.mxu0 0.0
    %2556 = vmatpush1.msra.mxu0 %v2547
    %2557 = vmatprep.subr.mxu0 0.0
    %2558 = vmatpush1.msra.mxu0 %v2548
    %2559 = vmatprep.subr.mxu0 0.0
    %2560 = vmatpush1.msra.mxu0 0.0
    %2561 = vmatprep.subr.mxu0 0.0
    %2562 = vmatpush1.msra.mxu0 0.0
    %2563 = vmatprep.subr.mxu0 0.0
    %2564 = vmatpush1.msra.mxu0 0.0
    %2565 = vmatprep.subr.mxu0 0.0
    %2566 = vmatpush1.msra.mxu0 0.0
    %2567 = vmatprep.subr.mxu0 0.0
    %2568 = vmatpush1.msra.mxu0 0.0
    %2569 = vmatprep.subr.mxu0 0.0
    %2570 = vmatpush1.msra.mxu0 0.0
    %2571 = vmatprep.subr.mxu0 0.0
    %2572 = vmatpush1.msra.mxu0 0.0
    %2573 = vmatprep.subr.mxu0 0.0
    %2574 = vmatpush1.msra.mxu0 0.0
    %2575 = vmatprep.subr.mxu0 0.0
    %2576 = vmatpush1.msra.mxu0 0.0
    %2577 = vmatprep.subr.mxu0 0.0
    %2578 = vmatpush1.msra.mxu0 0.0
    %2579 = vmatprep.subr.mxu0 0.0
    %2580 = vmatpush1.msra.mxu0 0.0
    %2581 = vmatprep.subr.mxu0 0.0
    %2582 = vmatpush1.msra.mxu0 0.0
    %2583 = vmatprep.subr.mxu0 0.0
    %2584 = vmatpush1.msra.mxu0 0.0
    %2585 = vmatprep.subr.mxu0 0.0
    %2586 = vmatpush1.msra.mxu0 0.0
    %2587 = vmatprep.subr.mxu0 0.0
    %2588 = vmatpush1.msra.mxu0 0.0
    %2589 = vmatprep.subr.mxu0 0.0
    %2590 = vmatpush1.msra.mxu0 0.0
    %2591 = vmatprep.subr.mxu0 0.0
    %2592 = vmatpush1.msra.mxu0 0.0
    %2593 = vmatprep.subr.mxu0 0.0
    %2594 = vmatpush1.msra.mxu0 0.0
    %2595 = vmatprep.subr.mxu0 0.0
    %2596 = vmatpush1.msra.mxu0 0.0
    %2597 = vmatprep.subr.mxu0 0.0
    %2598 = vmatpush1.msra.mxu0 0.0
    %2599 = vmatprep.subr.mxu0 0.0
    %2600 = vmatpush1.msra.mxu0 0.0
    %2601 = vmatprep.subr.mxu0 0.0
    %2602 = vmatpush1.msra.mxu0 0.0
    %2603 = vmatprep.subr.mxu0 0.0
    %2604 = vmatpush1.msra.mxu0 0.0
    %2605 = vmatprep.subr.mxu0 0.0
    %2606 = vmatpush1.msra.mxu0 0.0
    %2607 = vmatprep.subr.mxu0 0.0
    %2608 = vmatpush1.msra.mxu0 0.0
    %2609 = vmatprep.subr.mxu0 0.0
    %2610 = vmatpush1.msra.mxu0 0.0
    %2611 = vmatprep.subr.mxu0 0.0
    %2612 = vmatpush1.msra.mxu0 0.0
    %2613 = vmatprep.subr.mxu0 0.0
    %2614 = vmatpush1.msra.mxu0 0.0
    %2615 = vmatprep.subr.mxu0 0.0
    %2616 = vmatpush1.msra.mxu0 0.0
    %2617 = vmatprep.subr.mxu0 0.0
    %2618 = vmatpush1.msra.mxu0 0.0
    %2619 = vmatprep.mubr.f32.mxu0 0.0
    %2620 = vmatmul.mubr.f32.gmra.mrb[0].mxu0 %v2550
    %v2621 = vpop.f32.mrb[0].mxu0
    %v2622 = vadd.f32 0.0, %v2621
    %v2623 = vpop.f32.mrb[0].mxu0
    %2624 = vmatprep.mubr.f32.mxu0 0.0
    %2625 = vmatmul.mubr.f32.gmra.mrb[0].mxu0 %v2553
    %v2626 = vpop.f32.mrb[0].mxu0
    %v2627 = vadd.f32 0.0, %v2626
    %v2628 = vpop.f32.mrb[0].mxu0
    %2629 = vdwg.mxu0
    %v2631 = vsel %vm498, %v2079, 0
    %v2634 = vsel %vm498, %v2084, 0
    %2636 = vmatprep.subr.mxu0 0.0
    %2637 = vmatpush1.msra.mxu0 %v2088
    %2638 = vmatprep.subr.mxu0 0.0
    %2639 = vmatpush1.msra.mxu0 %v2089
    %2640 = vmatprep.subr.mxu0 0.0
    %2641 = vmatpush1.msra.mxu0 0.0
    %2642 = vmatprep.subr.mxu0 0.0
    %2643 = vmatpush1.msra.mxu0 0.0
    %2644 = vmatprep.subr.mxu0 0.0
    %2645 = vmatpush1.msra.mxu0 0.0
    %2646 = vmatprep.subr.mxu0 0.0
    %2647 = vmatpush1.msra.mxu0 0.0
    %2648 = vmatprep.subr.mxu0 0.0
    %2649 = vmatpush1.msra.mxu0 0.0
    %2650 = vmatprep.subr.mxu0 0.0
    %2651 = vmatpush1.msra.mxu0 0.0
    %2652 = vmatprep.subr.mxu0 0.0
    %2653 = vmatpush1.msra.mxu0 0.0
    %2654 = vmatprep.subr.mxu0 0.0
    %2655 = vmatpush1.msra.mxu0 0.0
    %2656 = vmatprep.subr.mxu0 0.0
    %2657 = vmatpush1.msra.mxu0 0.0
    %2658 = vmatprep.subr.mxu0 0.0
    %2659 = vmatpush1.msra.mxu0 0.0
    %2660 = vmatprep.subr.mxu0 0.0
    %2661 = vmatpush1.msra.mxu0 0.0
    %2662 = vmatprep.subr.mxu0 0.0
    %2663 = vmatpush1.msra.mxu0 0.0
    %2664 = vmatprep.subr.mxu0 0.0
    %2665 = vmatpush1.msra.mxu0 0.0
    %2666 = vmatprep.subr.mxu0 0.0
    %2667 = vmatpush1.msra.mxu0 0.0
    %2668 = vmatprep.subr.mxu0 0.0
    %2669 = vmatpush1.msra.mxu0 0.0
    %2670 = vmatprep.subr.mxu0 0.0
    %2671 = vmatpush1.msra.mxu0 0.0
    %2672 = vmatprep.subr.mxu0 0.0
    %2673 = vmatpush1.msra.mxu0 0.0
    %2674 = vmatprep.subr.mxu0 0.0
    %2675 = vmatpush1.msra.mxu0 0.0
    %2676 = vmatprep.subr.mxu0 0.0
    %2677 = vmatpush1.msra.mxu0 0.0
    %2678 = vmatprep.subr.mxu0 0.0
    %2679 = vmatpush1.msra.mxu0 0.0
    %2680 = vmatprep.subr.mxu0 0.0
    %2681 = vmatpush1.msra.mxu0 0.0
    %2682 = vmatprep.subr.mxu0 0.0
    %2683 = vmatpush1.msra.mxu0 0.0
    %2684 = vmatprep.subr.mxu0 0.0
    %2685 = vmatpush1.msra.mxu0 0.0
    %2686 = vmatprep.subr.mxu0 0.0
    %2687 = vmatpush1.msra.mxu0 0.0
    %2688 = vmatprep.subr.mxu0 0.0
    %2689 = vmatpush1.msra.mxu0 0.0
    %2690 = vmatprep.subr.mxu0 0.0
    %2691 = vmatpush1.msra.mxu0 0.0
    %2692 = vmatprep.subr.mxu0 0.0
    %2693 = vmatpush1.msra.mxu0 0.0
    %2694 = vmatprep.subr.mxu0 0.0
    %2695 = vmatpush1.msra.mxu0 0.0
    %2696 = vmatprep.subr.mxu0 0.0
    %2697 = vmatpush1.msra.mxu0 0.0
    %2698 = vmatprep.subr.mxu0 0.0
    %2699 = vmatpush1.msra.mxu0 0.0
    %2700 = vmatprep.mubr.f32.mxu0 0.0
    %2701 = vmatmul.mubr.f32.gmra.mrb[0].mxu0 %v2631
    %v2702 = vpop.f32.mrb[0].mxu0
    %v2703 = vadd.f32 %v2622, %v2702
    %v2704 = vpop.f32.mrb[0].mxu0
    %2705 = vmatprep.mubr.f32.mxu0 0.0
    %2706 = vmatmul.mubr.f32.gmra.mrb[0].mxu0 %v2634
    %v2707 = vpop.f32.mrb[0].mxu0
    %v2708 = vadd.f32 %v2627, %v2707
    %v2709 = vpop.f32.mrb[0].mxu0
    %2710 = vdwg.mxu0
    %v2711 = vadd.f32 %v1577, %v2703
    %v2712 = vadd.f32 %v1578, %v2708
    %s2713 = scalar_lea.vmem %s14, 1
    %v2714 = vld [vmem:[%s2713] sm:$0x1]
    %v2716 = vlaneseq
    %v2717 = vshrl.u32 %v2716, 7
    %v2718 = vsub.s32 0, %v2717
    %v2719 = vrot.slane %v2714, %v2718
    %v2721 = vadd.f32 %v2711, %v2719
    %v2722 = vadd.f32 %v2712, %v2719
    %s2723 = scalar_lea.vmem %s15, 1
    %v2724 = vld [vmem:[%s2723] sm:$0x1]
    %s2725 = scalar_lea.vmem %s16, 1
    %v2726 = vld [vmem:[%s2725] sm:$0x1]
    %v2727 = vsel %vm188, %v2721, 0.0
    %2728 = vadd.xlane.f32.xlu0 %v2727
    %v2729 = vpop.xlane.xlu0 %2728
    %v2730 = vsel %vm188, %v2722, 0.0
    %2731 = vadd.xlane.f32.xlu0 %v2730
    %v2732 = vpop.xlane.xlu0 %2731
    %v2733 = vmul.f32 %v2729, %v195
    %v2734 = vmul.f32 %v2732, %v195
    %v2735 = vsub.f32 %v2721, %v2733
    %v2736 = vsub.f32 %v2722, %v2734
    %v2737 = vmul.f32 %v2735, %v2735
    %v2738 = vmul.f32 %v2736, %v2736
    %v2739 = vsel %vm188, %v2737, 0.0
    %2740 = vadd.xlane.f32.xlu0 %v2739
    %v2741 = vpop.xlane.xlu0 %2740
    %v2742 = vsel %vm188, %v2738, 0.0
    %2743 = vadd.xlane.f32.xlu0 %v2742
    %v2744 = vpop.xlane.xlu0 %2743
    %v2745 = vmul.f32 %v2741, %v195
    %v2746 = vmul.f32 %v2744, %v195
    %v2747 = vadd.f32 %v2745, 1e-05
    %v2748 = vadd.f32 %v2746, 1e-05
    %v2749 = vrsqrt.pop %v2747
    %v2750 = vrsqrt.pop %v2748
    %v2751 = vmul.f32 %v2735, %v2749
    %v2752 = vmul.f32 %v2736, %v2750
    %v2754 = vlaneseq
    %v2755 = vshrl.u32 %v2754, 7
    %v2756 = vsub.s32 0, %v2755
    %v2757 = vrot.slane %v2724, %v2756
    %v2759 = vmul.f32 %v2751, %v2757
    %v2760 = vmul.f32 %v2752, %v2757
    %v2762 = vlaneseq
    %v2763 = vshrl.u32 %v2762, 7
    %v2764 = vsub.s32 0, %v2763
    %v2765 = vrot.slane %v2726, %v2764
    %v2767 = vadd.f32 %v2759, %v2765
    %v2768 = vadd.f32 %v2760, %v2765
    %s2769 = scalar_lea.vmem %s17, 32
    %v2770 = vld [vmem:[%s2769] sm:$0xff]
    %v2771 = vld [vmem:[%s2769 + $0x8] sm:$0xff]
    %v2772 = vld [vmem:[%s2769 + $0x10] sm:$0xff]
    %v2773 = vld [vmem:[%s2769 + $0x18] sm:$0xff]
    %s2774 = scalar_lea.vmem %s18, 1
    %v2775 = vld [vmem:[%s2774] sm:$0x1]
    %v2777 = vlaneseq
    %v2778 = vshrl.u32 %v2777, 7
    %v2779 = vsub.s32 0, %v2778
    %v2780 = vrot.slane %v2775, %v2779
    %v2783 = vsel %vm188, %v2767, 0
    %v2786 = vsel %vm188, %v2768, 0
    %2788 = vmatprep.subr.mxu0 0.0
    %2789 = vmatpush1.msra.mxu0 %v2770
    %2790 = vmatprep.subr.mxu0 0.0
    %2791 = vmatpush1.msra.mxu0 %v2771
    %2792 = vmatprep.subr.mxu0 0.0
    %2793 = vmatpush1.msra.mxu0 %v2772
    %2794 = vmatprep.subr.mxu0 0.0
    %2795 = vmatpush1.msra.mxu0 %v2773
    %2796 = vmatprep.subr.mxu0 0.0
    %2797 = vmatpush1.msra.mxu0 0.0
    %2798 = vmatprep.subr.mxu0 0.0
    %2799 = vmatpush1.msra.mxu0 0.0
    %2800 = vmatprep.subr.mxu0 0.0
    %2801 = vmatpush1.msra.mxu0 0.0
    %2802 = vmatprep.subr.mxu0 0.0
    %2803 = vmatpush1.msra.mxu0 0.0
    %2804 = vmatprep.subr.mxu0 0.0
    %2805 = vmatpush1.msra.mxu0 0.0
    %2806 = vmatprep.subr.mxu0 0.0
    %2807 = vmatpush1.msra.mxu0 0.0
    %2808 = vmatprep.subr.mxu0 0.0
    %2809 = vmatpush1.msra.mxu0 0.0
    %2810 = vmatprep.subr.mxu0 0.0
    %2811 = vmatpush1.msra.mxu0 0.0
    %2812 = vmatprep.subr.mxu0 0.0
    %2813 = vmatpush1.msra.mxu0 0.0
    %2814 = vmatprep.subr.mxu0 0.0
    %2815 = vmatpush1.msra.mxu0 0.0
    %2816 = vmatprep.subr.mxu0 0.0
    %2817 = vmatpush1.msra.mxu0 0.0
    %2818 = vmatprep.subr.mxu0 0.0
    %2819 = vmatpush1.msra.mxu0 0.0
    %2820 = vmatprep.subr.mxu0 0.0
    %2821 = vmatpush1.msra.mxu0 0.0
    %2822 = vmatprep.subr.mxu0 0.0
    %2823 = vmatpush1.msra.mxu0 0.0
    %2824 = vmatprep.subr.mxu0 0.0
    %2825 = vmatpush1.msra.mxu0 0.0
    %2826 = vmatprep.subr.mxu0 0.0
    %2827 = vmatpush1.msra.mxu0 0.0
    %2828 = vmatprep.subr.mxu0 0.0
    %2829 = vmatpush1.msra.mxu0 0.0
    %2830 = vmatprep.subr.mxu0 0.0
    %2831 = vmatpush1.msra.mxu0 0.0
    %2832 = vmatprep.subr.mxu0 0.0
    %2833 = vmatpush1.msra.mxu0 0.0
    %2834 = vmatprep.subr.mxu0 0.0
    %2835 = vmatpush1.msra.mxu0 0.0
    %2836 = vmatprep.subr.mxu0 0.0
    %2837 = vmatpush1.msra.mxu0 0.0
    %2838 = vmatprep.subr.mxu0 0.0
    %2839 = vmatpush1.msra.mxu0 0.0
    %2840 = vmatprep.subr.mxu0 0.0
    %2841 = vmatpush1.msra.mxu0 0.0
    %2842 = vmatprep.subr.mxu0 0.0
    %2843 = vmatpush1.msra.mxu0 0.0
    %2844 = vmatprep.subr.mxu0 0.0
    %2845 = vmatpush1.msra.mxu0 0.0
    %2846 = vmatprep.subr.mxu0 0.0
    %2847 = vmatpush1.msra.mxu0 0.0
    %2848 = vmatprep.subr.mxu0 0.0
    %2849 = vmatpush1.msra.mxu0 0.0
    %2850 = vmatprep.subr.mxu0 0.0
    %2851 = vmatpush1.msra.mxu0 0.0
    %2852 = vmatprep.mubr.f32.mxu0 0.0
    %2853 = vmatmul.mubr.f32.gmra.mrb[0].mxu0 %v2783
    %v2854 = vpop.f32.mrb[0].mxu0
    %v2855 = vadd.f32 %v2780, %v2854
    %v2856 = vpop.f32.mrb[0].mxu0
    %2857 = vmatprep.mubr.f32.mxu0 0.0
    %2858 = vmatmul.mubr.f32.gmra.mrb[0].mxu0 %v2786
    %v2859 = vpop.f32.mrb[0].mxu0
    %v2860 = vadd.f32 %v2780, %v2859
    %v2861 = vpop.f32.mrb[0].mxu0
    %2862 = vdwg.mxu0
    %v2863 = vmul.f32 %v2855, 0.5
    %v2864 = vmul.f32 %v2860, 0.5
    %v2865 = vmul.f32 %v2855, 0.044715
    %v2866 = vmul.f32 %v2860, 0.044715
    %v2867 = vmul.f32 %v2865, %v2855
    %v2868 = vmul.f32 %v2866, %v2860
    %v2869 = vmul.f32 %v2867, %v2855
    %v2870 = vmul.f32 %v2868, %v2860
    %v2871 = vadd.f32 %v2855, %v2869
    %v2872 = vadd.f32 %v2860, %v2870
    %v2873 = vmul.f32 %v2871, 0.7978846
    %v2874 = vmul.f32 %v2872, 0.7978846
    %v2875 = vtanh.pop %v2873
    %v2876 = vtanh.pop %v2874
    %v2877 = vadd.f32 %v2875, 1.0
    %v2878 = vadd.f32 %v2876, 1.0
    %v2879 = vmul.f32 %v2863, %v2877
    %v2880 = vmul.f32 %v2864, %v2878
    %s2881 = scalar_lea.vmem %s19, 128
    %v2882 = vld [vmem:[%s2881] sm:$0xff]
    %v2883 = vld [vmem:[%s2881 + $0x8] sm:$0xff]
    %v2884 = vld [vmem:[%s2881 + $0x10] sm:$0xff]
    %v2885 = vld [vmem:[%s2881 + $0x18] sm:$0xff]
    %v2886 = vld [vmem:[%s2881 + $0x20] sm:$0xff]
    %v2887 = vld [vmem:[%s2881 + $0x28] sm:$0xff]
    %v2888 = vld [vmem:[%s2881 + $0x30] sm:$0xff]
    %v2889 = vld [vmem:[%s2881 + $0x38] sm:$0xff]
    %v2890 = vld [vmem:[%s2881 + $0x40] sm:$0xff]
    %v2891 = vld [vmem:[%s2881 + $0x48] sm:$0xff]
    %v2892 = vld [vmem:[%s2881 + $0x50] sm:$0xff]
    %v2893 = vld [vmem:[%s2881 + $0x58] sm:$0xff]
    %v2894 = vld [vmem:[%s2881 + $0x60] sm:$0xff]
    %v2895 = vld [vmem:[%s2881 + $0x68] sm:$0xff]
    %v2896 = vld [vmem:[%s2881 + $0x70] sm:$0xff]
    %v2897 = vld [vmem:[%s2881 + $0x78] sm:$0xff]
    %2898 = vmatprep.subr.mxu0 0.0
    %2899 = vmatpush1.msra.mxu0 %v2882
    %2900 = vmatprep.subr.mxu0 0.0
    %2901 = vmatpush1.msra.mxu0 %v2883
    %2902 = vmatprep.subr.mxu0 0.0
    %2903 = vmatpush1.msra.mxu0 %v2884
    %2904 = vmatprep.subr.mxu0 0.0
    %2905 = vmatpush1.msra.mxu0 %v2885
    %2906 = vmatprep.subr.mxu0 0.0
    %2907 = vmatpush1.msra.mxu0 %v2886
    %2908 = vmatprep.subr.mxu0 0.0
    %2909 = vmatpush1.msra.mxu0 %v2887
    %2910 = vmatprep.subr.mxu0 0.0
    %2911 = vmatpush1.msra.mxu0 %v2888
    %2912 = vmatprep.subr.mxu0 0.0
    %2913 = vmatpush1.msra.mxu0 %v2889
    %2914 = vmatprep.subr.mxu0 0.0
    %2915 = vmatpush1.msra.mxu0 %v2890
    %2916 = vmatprep.subr.mxu0 0.0
    %2917 = vmatpush1.msra.mxu0 %v2891
    %2918 = vmatprep.subr.mxu0 0.0
    %2919 = vmatpush1.msra.mxu0 %v2892
    %2920 = vmatprep.subr.mxu0 0.0
    %2921 = vmatpush1.msra.mxu0 %v2893
    %2922 = vmatprep.subr.mxu0 0.0
    %2923 = vmatpush1.msra.mxu0 %v2894
    %2924 = vmatprep.subr.mxu0 0.0
    %2925 = vmatpush1.msra.mxu0 %v2895
    %2926 = vmatprep.subr.mxu0 0.0
    %2927 = vmatpush1.msra.mxu0 %v2896
    %2928 = vmatprep.subr.mxu0 0.0
    %2929 = vmatpush1.msra.mxu0 %v2897
    %2930 = vmatprep.subr.mxu0 0.0
    %2931 = vmatpush1.msra.mxu0 0.0
    %2932 = vmatprep.subr.mxu0 0.0
    %2933 = vmatpush1.msra.mxu0 0.0
    %2934 = vmatprep.subr.mxu0 0.0
    %2935 = vmatpush1.msra.mxu0 0.0
    %2936 = vmatprep.subr.mxu0 0.0
    %2937 = vmatpush1.msra.mxu0 0.0
    %2938 = vmatprep.subr.mxu0 0.0
    %2939 = vmatpush1.msra.mxu0 0.0
    %2940 = vmatprep.subr.mxu0 0.0
    %2941 = vmatpush1.msra.mxu0 0.0
    %2942 = vmatprep.subr.mxu0 0.0
    %2943 = vmatpush1.msra.mxu0 0.0
    %2944 = vmatprep.subr.mxu0 0.0
    %2945 = vmatpush1.msra.mxu0 0.0
    %2946 = vmatprep.subr.mxu0 0.0
    %2947 = vmatpush1.msra.mxu0 0.0
    %2948 = vmatprep.subr.mxu0 0.0
    %2949 = vmatpush1.msra.mxu0 0.0
    %2950 = vmatprep.subr.mxu0 0.0
    %2951 = vmatpush1.msra.mxu0 0.0
    %2952 = vmatprep.subr.mxu0 0.0
    %2953 = vmatpush1.msra.mxu0 0.0
    %2954 = vmatprep.subr.mxu0 0.0
    %2955 = vmatpush1.msra.mxu0 0.0
    %2956 = vmatprep.subr.mxu0 0.0
    %2957 = vmatpush1.msra.mxu0 0.0
    %2958 = vmatprep.subr.mxu0 0.0
    %2959 = vmatpush1.msra.mxu0 0.0
    %2960 = vmatprep.subr.mxu0 0.0
    %2961 = vmatpush1.msra.mxu0 0.0
    %2962 = vmatprep.mubr.f32.mxu0 0.0
    %2963 = vmatmul.mubr.f32.gmra.mrb[0].mxu0 %v2879
    %v2964 = vpop.f32.mrb[0].mxu0
    %v2965 = vadd.f32 0.0, %v2964
    %v2966 = vpop.f32.mrb[0].mxu0
    %2967 = vmatprep.mubr.f32.mxu0 0.0
    %2968 = vmatmul.mubr.f32.gmra.mrb[0].mxu0 %v2880
    %v2969 = vpop.f32.mrb[0].mxu0
    %v2970 = vadd.f32 0.0, %v2969
    %v2971 = vpop.f32.mrb[0].mxu0
    %2972 = vdwg.mxu0
    %v2973 = vadd.f32 %v2721, %v2965
    %v2974 = vadd.f32 %v2722, %v2970
    %s2975 = scalar_lea.vmem %s20, 1
    %v2976 = vld [vmem:[%s2975] sm:$0x1]
    %v2978 = vlaneseq
    %v2979 = vshrl.u32 %v2978, 7
    %v2980 = vsub.s32 0, %v2979
    %v2981 = vrot.slane %v2976, %v2980
    %v2983 = vadd.f32 %v2973, %v2981
    %v2984 = vadd.f32 %v2974, %v2981
    %v2985 = vld [vmem:[%s21] sm:$0x1]
    %v2986 = vld [vmem:[%s22] sm:$0x1]
    %v2987 = vsel %vm188, %v2983, 0.0
    %2988 = vadd.xlane.f32.xlu0 %v2987
    %v2989 = vpop.xlane.xlu0 %2988
    %v2990 = vsel %vm188, %v2984, 0.0
    %2991 = vadd.xlane.f32.xlu0 %v2990
    %v2992 = vpop.xlane.xlu0 %2991
    %v2993 = vmul.f32 %v2989, %v195
    %v2994 = vmul.f32 %v2992, %v195
    %v2995 = vsub.f32 %v2983, %v2993
    %v2996 = vsub.f32 %v2984, %v2994
    %v2997 = vmul.f32 %v2995, %v2995
    %v2998 = vmul.f32 %v2996, %v2996
    %v2999 = vsel %vm188, %v2997, 0.0
    %3000 = vadd.xlane.f32.xlu0 %v2999
    %v3001 = vpop.xlane.xlu0 %3000
    %v3002 = vsel %vm188, %v2998, 0.0
    %3003 = vadd.xlane.f32.xlu0 %v3002
    %v3004 = vpop.xlane.xlu0 %3003
    %v3005 = vmul.f32 %v3001, %v195
    %v3006 = vmul.f32 %v3004, %v195
    %v3007 = vadd.f32 %v3005, 1e-05
    %v3008 = vadd.f32 %v3006, 1e-05
    %v3009 = vrsqrt.pop %v3007
    %v3010 = vrsqrt.pop %v3008
    %v3011 = vmul.f32 %v2995, %v3009
    %v3012 = vmul.f32 %v2996, %v3010
    %v3014 = vlaneseq
    %v3015 = vshrl.u32 %v3014, 7
    %v3016 = vsub.s32 0, %v3015
    %v3017 = vrot.slane %v2985, %v3016
    %v3019 = vmul.f32 %v3011, %v3017
    %v3020 = vmul.f32 %v3012, %v3017
    %v3022 = vlaneseq
    %v3023 = vshrl.u32 %v3022, 7
    %v3024 = vsub.s32 0, %v3023
    %v3025 = vrot.slane %v2986, %v3024
    %v3027 = vadd.f32 %v3019, %v3025
    %v3028 = vadd.f32 %v3020, %v3025
    %v3029 = vld [vmem:[%s4] sm:$0x3]
    %v3031 = vsel %vm498, %v3029, 0
    %3033 = vmatprep.subr.mxu0 0.0
    %3034 = vmatpush1.msra.mxu0 %v3027
    %3035 = vmatprep.subr.mxu0 0.0
    %3036 = vmatpush1.msra.mxu0 %v3028
    %3037 = vmatprep.subr.mxu0 0.0
    %3038 = vmatpush1.msra.mxu0 0.0
    %3039 = vmatprep.subr.mxu0 0.0
    %3040 = vmatpush1.msra.mxu0 0.0
    %3041 = vmatprep.subr.mxu0 0.0
    %3042 = vmatpush1.msra.mxu0 0.0
    %3043 = vmatprep.subr.mxu0 0.0
    %3044 = vmatpush1.msra.mxu0 0.0
    %3045 = vmatprep.subr.mxu0 0.0
    %3046 = vmatpush1.msra.mxu0 0.0
    %3047 = vmatprep.subr.mxu0 0.0
    %3048 = vmatpush1.msra.mxu0 0.0
    %3049 = vmatprep.subr.mxu0 0.0
    %3050 = vmatpush1.msra.mxu0 0.0
    %3051 = vmatprep.subr.mxu0 0.0
    %3052 = vmatpush1.msra.mxu0 0.0
    %3053 = vmatprep.subr.mxu0 0.0
    %3054 = vmatpush1.msra.mxu0 0.0
    %3055 = vmatprep.subr.mxu0 0.0
    %3056 = vmatpush1.msra.mxu0 0.0
    %3057 = vmatprep.subr.mxu0 0.0
    %3058 = vmatpush1.msra.mxu0 0.0
    %3059 = vmatprep.subr.mxu0 0.0
    %3060 = vmatpush1.msra.mxu0 0.0
    %3061 = vmatprep.subr.mxu0 0.0
    %3062 = vmatpush1.msra.mxu0 0.0
    %3063 = vmatprep.subr.mxu0 0.0
    %3064 = vmatpush1.msra.mxu0 0.0
    %3065 = vmatprep.subr.mxu0 0.0
    %3066 = vmatpush1.msra.mxu0 0.0
    %3067 = vmatprep.subr.mxu0 0.0
    %3068 = vmatpush1.msra.mxu0 0.0
    %3069 = vmatprep.subr.mxu0 0.0
    %3070 = vmatpush1.msra.mxu0 0.0
    %3071 = vmatprep.subr.mxu0 0.0
    %3072 = vmatpush1.msra.mxu0 0.0
    %3073 = vmatprep.subr.mxu0 0.0
    %3074 = vmatpush1.msra.mxu0 0.0
    %3075 = vmatprep.subr.mxu0 0.0
    %3076 = vmatpush1.msra.mxu0 0.0
    %3077 = vmatprep.subr.mxu0 0.0
    %3078 = vmatpush1.msra.mxu0 0.0
    %3079 = vmatprep.subr.mxu0 0.0
    %3080 = vmatpush1.msra.mxu0 0.0
    %3081 = vmatprep.subr.mxu0 0.0
    %3082 = vmatpush1.msra.mxu0 0.0
    %3083 = vmatprep.subr.mxu0 0.0
    %3084 = vmatpush1.msra.mxu0 0.0
    %3085 = vmatprep.subr.mxu0 0.0
    %3086 = vmatpush1.msra.mxu0 0.0
    %3087 = vmatprep.subr.mxu0 0.0
    %3088 = vmatpush1.msra.mxu0 0.0
    %3089 = vmatprep.subr.mxu0 0.0
    %3090 = vmatpush1.msra.mxu0 0.0
    %3091 = vmatprep.subr.mxu0 0.0
    %3092 = vmatpush1.msra.mxu0 0.0
    %3093 = vmatprep.subr.mxu0 0.0
    %3094 = vmatpush1.msra.mxu0 0.0
    %3095 = vmatprep.subr.mxu0 0.0
    %3096 = vmatpush1.msra.mxu0 0.0
    %3097 = vmatprep.mubr.f32.mxu0 0.0
    %3098 = vmatmul.mubr.f32.gmra.mrb[0].mxu0 %v3031
    %v3099 = vpop.f32.mrb[0].mxu0
    %v3100 = vadd.f32 0.0, %v3099
    %v3101 = vpop.f32.mrb[0].mxu0
    %3102 = vdwg.mxu0
    %v3103 = vsel %vm188, %v3100, 0.0
    %3104 = vst [vmem:[#allocation2] sm:$0x3] %v3103
    // Predicated region
    $region94: #{embedding_model_forward.1} parent=1 // pred_check
      _
    $region95: #{embedding_model_forward.1} parent=1 // pred_check_branch
      %3106 = sbr.rel (0) target = $region97
    $region96: #{embedding_model_forward.1} parent=1 // pred_region
      %s3108 = ssub.s32 32, 32
      %3109 = vsyncadd [#allocation3], %s3108
      %s3111 = sshll.u32 [#allocation2], 4
      %s3112 = int_to_ptr.vmem [resolvable:$true] %s3111
      %3114 = dma.vmem_to_hbm [thread:$0]  %s3112, 32, %s23, [#allocation3]
    $region97: #{embedding_model_forward.1} parent=1 // pred_fallthru
      _
    // Predicated region
    $region98: #{embedding_model_forward.1} parent=1 // pred_check
      _
    $region99: #{embedding_model_forward.1} parent=1 // pred_check_branch
      %3116 = sbr.rel (0) target = $region101
    $region100: #{embedding_model_forward.1} parent=1 // pred_region
      %3117 = dma.done [#allocation3], 32
    $region101: #{embedding_model_forward.1} parent=1 // pred_fallthru
      _
    %3118 = vsyncpa [#allocation3], 1

</llo_original>
